<compile_context>
chip_gen: v7x
topology: tpu7x:2x2x1
jax: 0.10.0
libtpu: 0.0.40
codegen_flags: <defaults>
</compile_context>

<pallas_src>
import functools

import numpy as np

import jax
import jax.numpy as jnp
from jax import lax
from jax.experimental import pallas as pl
from jax.experimental.pallas import tpu as pltpu


# -----------------------------------------------------------------------------
# Parameters (deterministic, synthetic), kept in PyTorch layouts.
# -----------------------------------------------------------------------------
def init_params(key, in_chans=3, num_filters=8, num_classes=1, k=4):
    chans = [in_chans, num_filters, num_filters * 2, num_filters * 4,
             num_filters * 8, num_filters * 16]
    keys = jax.random.split(key, 4 * 5 + 2)
    ki = 0
    convs = []
    for i in range(5):
        cin, cout = chans[i], chans[i + 1]
        w = 0.05 * jax.random.normal(keys[ki], (cout, cin, k, k), jnp.float32); ki += 1
        b = 0.05 * jax.random.normal(keys[ki], (cout,), jnp.float32); ki += 1
        # non-trivial LN affine params so the LN path is actually exercised
        g = 1.0 + 0.1 * jax.random.normal(keys[ki], (cout,), jnp.float32); ki += 1
        bt = 0.1 * jax.random.normal(keys[ki], (cout,), jnp.float32); ki += 1
        convs.append(dict(w=w, b=b, gamma=g, beta=bt))
    in_f = num_filters * 16
    ow = 0.05 * jax.random.normal(keys[ki], (num_classes, in_f), jnp.float32); ki += 1
    ob = 0.05 * jax.random.normal(keys[ki], (num_classes,), jnp.float32)
    return dict(convs=convs, out_w=jnp.transpose(ow), out_b=ob)   # out_w: [in_f, NC]


# -----------------------------------------------------------------------------
# Host-side weight folding: turn every stride-2 conv into 2D-matmul operands,
# with the batch dimension folded into the row (sublane) axis.
#
# Activation representation fed to stage t (all batch elements stacked on rows):
#   t == 0 : zero-padded input image, [B*(H+2), (W+2)*Cin]  (lane dim padded to 128*m)
#   t >= 1 : previous stage's (unpadded) output, [B*Ho_prev, Wo_prev*Cout_prev]
#
#   conv_t(x) = sum_{kh}  A_t[kh] @ X @ M_t[kh]
#     A_t[kh]  [B*Ho, B*rows_in] : block-diagonal per batch; selects padded row
#                                  2i+kh (zero rows == spatial padding)
#     M_t[kh]  [lanes_in, Wo*Cout] : column gather (+ padding) folded with W[:,:,kh,:]
#   LayerNorm over channels uses a block-averaging matrix so no lane reshapes
#   are ever needed inside the kernel.
# -----------------------------------------------------------------------------
def build_folded_operands(params, img_hw, batch):
    convs = params["convs"]
    H = img_hw
    B = batch
    rows_in, cols_in = H + 2, H + 2
    chan_in = int(np.asarray(convs[0]["w"]).shape[1])
    L_in = cols_in * chan_in
    L_in_pad = -(-L_in // 128) * 128
    stages = []
    first = True
    cur = H
    for st in convs:
        w = np.asarray(st["w"], np.float32)            # [Cout, Cin, K, K]
        b = np.asarray(st["b"], np.float32)
        cout, cin, K, _ = w.shape
        assert cin == chan_in
        assert cur % 2 == 0, "spatial size must stay even through the conv stack"
        Ho = (cur + 2 - K) // 2 + 1                    # stride 2, padding 1
        Wo = Ho
        Lout = Wo * cout
        off = 0 if first else 1                        # padded coord -> stored coord

        # per-batch row-gather, then block-diagonal over batch
        A1 = np.zeros((K, Ho, rows_in), np.float32)
        for kh in range(K):
            for i in range(Ho):
                r = 2 * i + kh - off
                if 0 <= r < rows_in:
                    A1[kh, i, r] = 1.0
        A = np.zeros((K, B * Ho, B * rows_in), np.float32)
        for bb in range(B):
            A[:, bb * Ho:(bb + 1) * Ho, bb * rows_in:(bb + 1) * rows_in] = A1

        M = np.zeros((K, L_in_pad, Lout), np.float32)
        for kh in range(K):
            for j in range(Wo):
                for kw in range(K):
                    u = 2 * j + kw - off
                    if 0 <= u < cols_in:
                        M[kh, u * cin:(u + 1) * cin, j * cout:(j + 1) * cout] = \
                            w[:, :, kh, kw].T          # [Cin, Cout]

        entry = dict(A=A, M=M, bias=np.tile(b, Wo)[None, :].astype(np.float32))
        if not first:                                  # conv1 has no norm
            entry["gamma"] = np.tile(np.asarray(st["gamma"], np.float32), Wo)[None, :]
            entry["beta"] = np.tile(np.asarray(st["beta"], np.float32), Wo)[None, :]
            entry["mavg"] = np.kron(np.eye(Wo, dtype=np.float32),
                                    np.ones((cout, cout), np.float32) / cout)
        stages.append(entry)

        rows_in, cols_in, chan_in = Ho, Wo, cout
        L_in_pad = Lout
        cur = Ho
        first = False

    if cur != 1:
        raise ValueError("flatten -> Linear(num_filters*16) requires the final feature "
                         f"map to be 1x1; got {cur}x{cur} (use 32x32 inputs).")

    out_w = np.asarray(params["out_w"], np.float32)                 # [in_f, NC]
    assert out_w.shape[0] == stages[-1]["M"].shape[2]
    out_b = np.asarray(params["out_b"], np.float32)[None, :]        # [1, NC]

    total_bytes = sum(a.nbytes for s in stages for a in s.values()) + out_w.nbytes
    assert total_bytes < 24 * 1024 * 1024, "folded operands would not fit VMEM"

    return dict(stages=stages, out_w=out_w, out_b=out_b,
                img_hw=H, batch=B, l0_pad=int(stages[0]["M"].shape[1]))


# -----------------------------------------------------------------------------
# The single fused Pallas kernel: whole network, whole batch, one grid step.
# -----------------------------------------------------------------------------
def _make_kernel(n_stages, has_norm, eps=1e-5):
    def kernel(x_ref, *refs):
        o_ref = refs[-1]
        x = x_ref[...]                                 # [B*rows0, L0_pad] f32, VMEM
        idx = 0
        for t in range(n_stages):
            a_ref, m_ref, b_ref = refs[idx], refs[idx + 1], refs[idx + 2]
            idx += 3
            K = a_ref.shape[0]
            Lout = m_ref.shape[2]
            y = None
            for kh in range(K):                        # K row-gathers + K weight matmuls
                p = jnp.dot(a_ref[kh], x, preferred_element_type=jnp.float32)
                q = jnp.dot(p, m_ref[kh], preferred_element_type=jnp.float32)
                y = q if y is None else y + q
            y = y + b_ref[...]
            if has_norm[t]:                            # LayerNorm over channels
                g_ref, bt_ref, avg_ref = refs[idx], refs[idx + 1], refs[idx + 2]
                idx += 3
                avg = avg_ref[...]
                mu = jnp.dot(y, avg, preferred_element_type=jnp.float32)
                d = y - mu
                var = jnp.dot(d * d, avg, preferred_element_type=jnp.float32)
                y = d * lax.rsqrt(var + eps)
                y = y * g_ref[...] + bt_ref[...]
            x = jnp.maximum(y, 0.0)                    # ReLU; becomes next stage's input
        # final feature map is [B, num_filters*16] == the flattened features
        w_ref, ob_ref = refs[idx], refs[idx + 1]
        o_ref[...] = (jnp.dot(x, w_ref[...], preferred_element_type=jnp.float32)
                      + ob_ref[...])
    return kernel


def discriminator_forward(x_nchw, folded):
    B, C, H, W = x_nchw.shape
    if H != folded["img_hw"] or W != folded["img_hw"]:
        raise ValueError(f"expected {folded['img_hw']}x{folded['img_hw']} inputs, got {H}x{W}")
    if B != folded["batch"]:
        raise ValueError(f"folded operands built for batch={folded['batch']}, got {B}")

    stages = folded["stages"]
    has_norm = tuple("mavg" in st for st in stages)

    operands = []
    for st in stages:
        operands += [st["A"], st["M"], st["bias"]]
        if "mavg" in st:
            operands += [st["gamma"], st["beta"], st["mavg"]]
    operands += [folded["out_w"], folded["out_b"]]
    operands = [jnp.asarray(op, jnp.float32) for op in operands]
    nc = int(folded["out_b"].shape[-1])

    # Input prep: one cheap pad + reshape, batch stacked on the row axis.
    rows0 = H + 2
    l0 = (W + 2) * C
    l0_pad = folded["l0_pad"]
    x = jnp.transpose(x_nchw.astype(jnp.float32), (0, 2, 3, 1))    # NCHW -> NHWC
    x = jnp.pad(x, ((0, 0), (1, 1), (1, 1), (0, 0)))
    x = x.reshape(B, rows0, l0)
    if l0_pad > l0:
        x = jnp.pad(x, ((0, 0), (0, 0), (0, l0_pad - l0)))          # lane-pad to 128*m
    x = x.reshape(B * rows0, l0_pad)

    def full_block(arr):
        zeros = (0,) * arr.ndim
        return pl.BlockSpec(arr.shape, lambda i, _z=zeros: _z)      # fully VMEM-resident

    in_specs = [pl.BlockSpec((B * rows0, l0_pad), lambda i: (0, 0))]
    in_specs += [full_block(op) for op in operands]
    out_spec = pl.BlockSpec((B, nc), lambda i: (0, 0))

    # NOTE: whole batch in one grid step (B folded into rows).  For much larger
    # batches one would reintroduce a "parallel" batch-group grid axis (v7x 2-TC
    # split); at B=2 the single step minimizes per-dot / per-step overhead.
    out = pl.pallas_call(
        _make_kernel(len(stages), has_norm),
        out_shape=jax.ShapeDtypeStruct((B, nc), jnp.float32),
        grid_spec=pltpu.PrefetchScalarGridSpec(
            num_scalar_prefetch=0,
            grid=(1,),
            in_specs=in_specs,
            out_specs=out_spec,
        ),
        compiler_params=pltpu.CompilerParams(
            dimension_semantics=("arbitrary",)),
    )(x, *operands)
    return out


# -----------------------------------------------------------------------------
# Pure-JAX reference (same "intended" semantics: channel-wise LayerNorm).
# -----------------------------------------------------------------------------
def reference_forward(x_nchw, params):
    x = jnp.transpose(x_nchw.astype(jnp.float32), (0, 2, 3, 1))
    for i, st in enumerate(params["convs"]):
        w = jnp.transpose(st["w"], (2, 3, 1, 0))        # [Cout,Cin,kh,kw] -> HWIO
        x = lax.conv_general_dilated(
            x, w, window_strides=(2, 2), padding=((1, 1), (1, 1)),
            dimension_numbers=("NHWC", "HWIO", "NHWC"),
            precision=lax.Precision.HIGHEST)
        x = x + st["b"]
        if i > 0:
            mu = jnp.mean(x, axis=-1, keepdims=True)
            var = jnp.mean((x - mu) ** 2, axis=-1, keepdims=True)
            x = (x - mu) * lax.rsqrt(var + 1e-5) * st["gamma"] + st["beta"]
        x = jnp.maximum(x, 0.0)
    feat = x.reshape(x.shape[0], -1)
    return jnp.dot(feat, params["out_w"], precision=lax.Precision.HIGHEST) + params["out_b"]


if __name__ == "__main__":
    key = jax.random.PRNGKey(0)
    B, C, H = 2, 3, 32            # 32x32 is the smallest size compatible with flatten->Linear
    x = jax.random.normal(key, (B, C, H, H), jnp.float32)

    params = init_params(jax.random.PRNGKey(42), in_chans=C, num_filters=8, num_classes=1)
    folded = build_folded_operands(params, img_hw=H, batch=B)   # host-side, done once

    fwd = jax.jit(functools.partial(discriminator_forward, folded=folded))
    out = jax.block_until_ready(fwd(x))
    assert out.shape == (B, 1), out.shape

    ref = jax.block_until_ready(reference_forward(x, params))
    assert jnp.allclose(out, ref, rtol=5e-2, atol=5e-2), (out, ref)

    print("KERNEL_OK")
</pallas_src>

<mosaic_0001>
module attributes {stable_mosaic.version = 11 : i64} {
  func.func @kernel(%arg0: i32, %arg1: memref<68x128xf32, #tpu.memory_space<vmem>>, %arg2: memref<4x32x68xf32, #tpu.memory_space<vmem>>, %arg3: memref<4x128x128xf32, #tpu.memory_space<vmem>>, %arg4: memref<1x128xf32, #tpu.memory_space<vmem>>, %arg5: memref<4x16x32xf32, #tpu.memory_space<vmem>>, %arg6: memref<4x128x128xf32, #tpu.memory_space<vmem>>, %arg7: memref<1x128xf32, #tpu.memory_space<vmem>>, %arg8: memref<1x128xf32, #tpu.memory_space<vmem>>, %arg9: memref<1x128xf32, #tpu.memory_space<vmem>>, %arg10: memref<128x128xf32, #tpu.memory_space<vmem>>, %arg11: memref<4x8x16xf32, #tpu.memory_space<vmem>>, %arg12: memref<4x128x128xf32, #tpu.memory_space<vmem>>, %arg13: memref<1x128xf32, #tpu.memory_space<vmem>>, %arg14: memref<1x128xf32, #tpu.memory_space<vmem>>, %arg15: memref<1x128xf32, #tpu.memory_space<vmem>>, %arg16: memref<128x128xf32, #tpu.memory_space<vmem>>, %arg17: memref<4x4x8xf32, #tpu.memory_space<vmem>>, %arg18: memref<4x128x128xf32, #tpu.memory_space<vmem>>, %arg19: memref<1x128xf32, #tpu.memory_space<vmem>>, %arg20: memref<1x128xf32, #tpu.memory_space<vmem>>, %arg21: memref<1x128xf32, #tpu.memory_space<vmem>>, %arg22: memref<128x128xf32, #tpu.memory_space<vmem>>, %arg23: memref<4x2x4xf32, #tpu.memory_space<vmem>>, %arg24: memref<4x128x128xf32, #tpu.memory_space<vmem>>, %arg25: memref<1x128xf32, #tpu.memory_space<vmem>>, %arg26: memref<1x128xf32, #tpu.memory_space<vmem>>, %arg27: memref<1x128xf32, #tpu.memory_space<vmem>>, %arg28: memref<128x128xf32, #tpu.memory_space<vmem>>, %arg29: memref<128x1xf32, #tpu.memory_space<vmem>>, %arg30: memref<1x1xf32, #tpu.memory_space<vmem>>, %arg31: memref<2x1xf32, #tpu.memory_space<vmem>>) attributes {dimension_semantics = [#tpu.dimension_semantics<arbitrary>], iteration_bounds = array<i64: 1>, scalar_prefetch = 0 : i64, scratch_operands = 0 : i64, tpu.core_type = #tpu.core_type<tc>, window_params = [{pipeline_mode = #tpu.pipeline_mode<synchronous>, transform_indices = @transform_0, window_bounds = array<i64: 68, 128>}, {pipeline_mode = #tpu.pipeline_mode<synchronous>, transform_indices = @transform_1, window_bounds = array<i64: 4, 32, 68>}, {pipeline_mode = #tpu.pipeline_mode<synchronous>, transform_indices = @transform_2, window_bounds = array<i64: 4, 128, 128>}, {pipeline_mode = #tpu.pipeline_mode<synchronous>, transform_indices = @transform_3, window_bounds = array<i64: 1, 128>}, {pipeline_mode = #tpu.pipeline_mode<synchronous>, transform_indices = @transform_4, window_bounds = array<i64: 4, 16, 32>}, {pipeline_mode = #tpu.pipeline_mode<synchronous>, transform_indices = @transform_5, window_bounds = array<i64: 4, 128, 128>}, {pipeline_mode = #tpu.pipeline_mode<synchronous>, transform_indices = @transform_6, window_bounds = array<i64: 1, 128>}, {pipeline_mode = #tpu.pipeline_mode<synchronous>, transform_indices = @transform_7, window_bounds = array<i64: 1, 128>}, {pipeline_mode = #tpu.pipeline_mode<synchronous>, transform_indices = @transform_8, window_bounds = array<i64: 1, 128>}, {pipeline_mode = #tpu.pipeline_mode<synchronous>, transform_indices = @transform_9, window_bounds = array<i64: 128, 128>}, {pipeline_mode = #tpu.pipeline_mode<synchronous>, transform_indices = @transform_10, window_bounds = array<i64: 4, 8, 16>}, {pipeline_mode = #tpu.pipeline_mode<synchronous>, transform_indices = @transform_11, window_bounds = array<i64: 4, 128, 128>}, {pipeline_mode = #tpu.pipeline_mode<synchronous>, transform_indices = @transform_12, window_bounds = array<i64: 1, 128>}, {pipeline_mode = #tpu.pipeline_mode<synchronous>, transform_indices = @transform_13, window_bounds = array<i64: 1, 128>}, {pipeline_mode = #tpu.pipeline_mode<synchronous>, transform_indices = @transform_14, window_bounds = array<i64: 1, 128>}, {pipeline_mode = #tpu.pipeline_mode<synchronous>, transform_indices = @transform_15, window_bounds = array<i64: 128, 128>}, {pipeline_mode = #tpu.pipeline_mode<synchronous>, transform_indices = @transform_16, window_bounds = array<i64: 4, 4, 8>}, {pipeline_mode = #tpu.pipeline_mode<synchronous>, transform_indices = @transform_17, window_bounds = array<i64: 4, 128, 128>}, {pipeline_mode = #tpu.pipeline_mode<synchronous>, transform_indices = @transform_18, window_bounds = array<i64: 1, 128>}, {pipeline_mode = #tpu.pipeline_mode<synchronous>, transform_indices = @transform_19, window_bounds = array<i64: 1, 128>}, {pipeline_mode = #tpu.pipeline_mode<synchronous>, transform_indices = @transform_20, window_bounds = array<i64: 1, 128>}, {pipeline_mode = #tpu.pipeline_mode<synchronous>, transform_indices = @transform_21, window_bounds = array<i64: 128, 128>}, {pipeline_mode = #tpu.pipeline_mode<synchronous>, transform_indices = @transform_22, window_bounds = array<i64: 4, 2, 4>}, {pipeline_mode = #tpu.pipeline_mode<synchronous>, transform_indices = @transform_23, window_bounds = array<i64: 4, 128, 128>}, {pipeline_mode = #tpu.pipeline_mode<synchronous>, transform_indices = @transform_24, window_bounds = array<i64: 1, 128>}, {pipeline_mode = #tpu.pipeline_mode<synchronous>, transform_indices = @transform_25, window_bounds = array<i64: 1, 128>}, {pipeline_mode = #tpu.pipeline_mode<synchronous>, transform_indices = @transform_26, window_bounds = array<i64: 1, 128>}, {pipeline_mode = #tpu.pipeline_mode<synchronous>, transform_indices = @transform_27, window_bounds = array<i64: 128, 128>}, {pipeline_mode = #tpu.pipeline_mode<synchronous>, transform_indices = @transform_28, window_bounds = array<i64: 128, 1>}, {pipeline_mode = #tpu.pipeline_mode<synchronous>, transform_indices = @transform_29, window_bounds = array<i64: 1, 1>}, {pipeline_mode = #tpu.pipeline_mode<synchronous>, transform_indices = @transform_30, window_bounds = array<i64: 2, 1>}]} {
    %c0 = arith.constant 0 : index
    %c0_0 = arith.constant 0 : index
    %0 = vector.load %arg1[%c0, %c0_0] : memref<68x128xf32, #tpu.memory_space<vmem>>, vector<68x128xf32>
    %c0_1 = arith.constant 0 : index
    %c0_2 = arith.constant 0 : index
    %c0_3 = arith.constant 0 : index
    %1 = vector.load %arg2[%c0_1, %c0_2, %c0_3] : memref<4x32x68xf32, #tpu.memory_space<vmem>>, vector<1x32x68xf32>
    %2 = vector.shape_cast %1 : vector<1x32x68xf32> to vector<32x68xf32>
    %cst = arith.constant dense<0.000000e+00> : vector<32x128xf32>
    %3 = tpu.matmul %2, %0, %cst {dimension_numbers = #tpu.dot_dimension_numbers<[1], [0], [0], [1], [0, 0, 1, 1], [], []>} : vector<32x68xf32>, vector<68x128xf32>, vector<32x128xf32> -> vector<32x128xf32>
    %c0_4 = arith.constant 0 : index
    %c0_5 = arith.constant 0 : index
    %c0_6 = arith.constant 0 : index
    %4 = vector.load %arg3[%c0_4, %c0_5, %c0_6] : memref<4x128x128xf32, #tpu.memory_space<vmem>>, vector<1x128x128xf32>
    %5 = vector.shape_cast %4 : vector<1x128x128xf32> to vector<128x128xf32>
    %cst_7 = arith.constant dense<0.000000e+00> : vector<32x128xf32>
    %6 = tpu.matmul %3, %5, %cst_7 {dimension_numbers = #tpu.dot_dimension_numbers<[1], [0], [0], [1], [0, 0, 1, 1], [], []>} : vector<32x128xf32>, vector<128x128xf32>, vector<32x128xf32> -> vector<32x128xf32>
    %c1 = arith.constant 1 : index
    %c0_8 = arith.constant 0 : index
    %c0_9 = arith.constant 0 : index
    %7 = vector.load %arg2[%c1, %c0_8, %c0_9] : memref<4x32x68xf32, #tpu.memory_space<vmem>>, vector<1x32x68xf32>
    %8 = vector.shape_cast %7 : vector<1x32x68xf32> to vector<32x68xf32>
    %cst_10 = arith.constant dense<0.000000e+00> : vector<32x128xf32>
    %9 = tpu.matmul %8, %0, %cst_10 {dimension_numbers = #tpu.dot_dimension_numbers<[1], [0], [0], [1], [0, 0, 1, 1], [], []>} : vector<32x68xf32>, vector<68x128xf32>, vector<32x128xf32> -> vector<32x128xf32>
    %c1_11 = arith.constant 1 : index
    %c0_12 = arith.constant 0 : index
    %c0_13 = arith.constant 0 : index
    %10 = vector.load %arg3[%c1_11, %c0_12, %c0_13] : memref<4x128x128xf32, #tpu.memory_space<vmem>>, vector<1x128x128xf32>
    %11 = vector.shape_cast %10 : vector<1x128x128xf32> to vector<128x128xf32>
    %cst_14 = arith.constant dense<0.000000e+00> : vector<32x128xf32>
    %12 = tpu.matmul %9, %11, %cst_14 {dimension_numbers = #tpu.dot_dimension_numbers<[1], [0], [0], [1], [0, 0, 1, 1], [], []>} : vector<32x128xf32>, vector<128x128xf32>, vector<32x128xf32> -> vector<32x128xf32>
    %13 = arith.addf %6, %12 : vector<32x128xf32>
    %c2 = arith.constant 2 : index
    %c0_15 = arith.constant 0 : index
    %c0_16 = arith.constant 0 : index
    %14 = vector.load %arg2[%c2, %c0_15, %c0_16] : memref<4x32x68xf32, #tpu.memory_space<vmem>>, vector<1x32x68xf32>
    %15 = vector.shape_cast %14 : vector<1x32x68xf32> to vector<32x68xf32>
    %cst_17 = arith.constant dense<0.000000e+00> : vector<32x128xf32>
    %16 = tpu.matmul %15, %0, %cst_17 {dimension_numbers = #tpu.dot_dimension_numbers<[1], [0], [0], [1], [0, 0, 1, 1], [], []>} : vector<32x68xf32>, vector<68x128xf32>, vector<32x128xf32> -> vector<32x128xf32>
    %c2_18 = arith.constant 2 : index
    %c0_19 = arith.constant 0 : index
    %c0_20 = arith.constant 0 : index
    %17 = vector.load %arg3[%c2_18, %c0_19, %c0_20] : memref<4x128x128xf32, #tpu.memory_space<vmem>>, vector<1x128x128xf32>
    %18 = vector.shape_cast %17 : vector<1x128x128xf32> to vector<128x128xf32>
    %cst_21 = arith.constant dense<0.000000e+00> : vector<32x128xf32>
    %19 = tpu.matmul %16, %18, %cst_21 {dimension_numbers = #tpu.dot_dimension_numbers<[1], [0], [0], [1], [0, 0, 1, 1], [], []>} : vector<32x128xf32>, vector<128x128xf32>, vector<32x128xf32> -> vector<32x128xf32>
    %20 = arith.addf %13, %19 : vector<32x128xf32>
    %c3 = arith.constant 3 : index
    %c0_22 = arith.constant 0 : index
    %c0_23 = arith.constant 0 : index
    %21 = vector.load %arg2[%c3, %c0_22, %c0_23] : memref<4x32x68xf32, #tpu.memory_space<vmem>>, vector<1x32x68xf32>
    %22 = vector.shape_cast %21 : vector<1x32x68xf32> to vector<32x68xf32>
    %cst_24 = arith.constant dense<0.000000e+00> : vector<32x128xf32>
    %23 = tpu.matmul %22, %0, %cst_24 {dimension_numbers = #tpu.dot_dimension_numbers<[1], [0], [0], [1], [0, 0, 1, 1], [], []>} : vector<32x68xf32>, vector<68x128xf32>, vector<32x128xf32> -> vector<32x128xf32>
    %c3_25 = arith.constant 3 : index
    %c0_26 = arith.constant 0 : index
    %c0_27 = arith.constant 0 : index
    %24 = vector.load %arg3[%c3_25, %c0_26, %c0_27] : memref<4x128x128xf32, #tpu.memory_space<vmem>>, vector<1x128x128xf32>
    %25 = vector.shape_cast %24 : vector<1x128x128xf32> to vector<128x128xf32>
    %cst_28 = arith.constant dense<0.000000e+00> : vector<32x128xf32>
    %26 = tpu.matmul %23, %25, %cst_28 {dimension_numbers = #tpu.dot_dimension_numbers<[1], [0], [0], [1], [0, 0, 1, 1], [], []>} : vector<32x128xf32>, vector<128x128xf32>, vector<32x128xf32> -> vector<32x128xf32>
    %27 = arith.addf %20, %26 : vector<32x128xf32>
    %c0_29 = arith.constant 0 : index
    %c0_30 = arith.constant 0 : index
    %28 = vector.load %arg4[%c0_29, %c0_30] : memref<1x128xf32, #tpu.memory_space<vmem>>, vector<1x128xf32>
    %29 = vector.broadcast %28 : vector<1x128xf32> to vector<32x128xf32>
    %30 = arith.addf %27, %29 : vector<32x128xf32>
    %cst_31 = arith.constant 0.000000e+00 : f32
    %31 = vector.broadcast %cst_31 : f32 to vector<32x128xf32>
    %32 = arith.maximumf %30, %31 : vector<32x128xf32>
    %c0_32 = arith.constant 0 : index
    %c0_33 = arith.constant 0 : index
    %c0_34 = arith.constant 0 : index
    %33 = vector.load %arg5[%c0_32, %c0_33, %c0_34] : memref<4x16x32xf32, #tpu.memory_space<vmem>>, vector<1x16x32xf32>
    %34 = vector.shape_cast %33 : vector<1x16x32xf32> to vector<16x32xf32>
    %cst_35 = arith.constant dense<0.000000e+00> : vector<16x128xf32>
    %35 = tpu.matmul %34, %32, %cst_35 {dimension_numbers = #tpu.dot_dimension_numbers<[1], [0], [0], [1], [0, 0, 1, 1], [], []>} : vector<16x32xf32>, vector<32x128xf32>, vector<16x128xf32> -> vector<16x128xf32>
    %c0_36 = arith.constant 0 : index
    %c0_37 = arith.constant 0 : index
    %c0_38 = arith.constant 0 : index
    %36 = vector.load %arg6[%c0_36, %c0_37, %c0_38] : memref<4x128x128xf32, #tpu.memory_space<vmem>>, vector<1x128x128xf32>
    %37 = vector.shape_cast %36 : vector<1x128x128xf32> to vector<128x128xf32>
    %cst_39 = arith.constant dense<0.000000e+00> : vector<16x128xf32>
    %38 = tpu.matmul %35, %37, %cst_39 {dimension_numbers = #tpu.dot_dimension_numbers<[1], [0], [0], [1], [0, 0, 1, 1], [], []>} : vector<16x128xf32>, vector<128x128xf32>, vector<16x128xf32> -> vector<16x128xf32>
    %c1_40 = arith.constant 1 : index
    %c0_41 = arith.constant 0 : index
    %c0_42 = arith.constant 0 : index
    %39 = vector.load %arg5[%c1_40, %c0_41, %c0_42] : memref<4x16x32xf32, #tpu.memory_space<vmem>>, vector<1x16x32xf32>
    %40 = vector.shape_cast %39 : vector<1x16x32xf32> to vector<16x32xf32>
    %cst_43 = arith.constant dense<0.000000e+00> : vector<16x128xf32>
    %41 = tpu.matmul %40, %32, %cst_43 {dimension_numbers = #tpu.dot_dimension_numbers<[1], [0], [0], [1], [0, 0, 1, 1], [], []>} : vector<16x32xf32>, vector<32x128xf32>, vector<16x128xf32> -> vector<16x128xf32>
    %c1_44 = arith.constant 1 : index
    %c0_45 = arith.constant 0 : index
    %c0_46 = arith.constant 0 : index
    %42 = vector.load %arg6[%c1_44, %c0_45, %c0_46] : memref<4x128x128xf32, #tpu.memory_space<vmem>>, vector<1x128x128xf32>
    %43 = vector.shape_cast %42 : vector<1x128x128xf32> to vector<128x128xf32>
    %cst_47 = arith.constant dense<0.000000e+00> : vector<16x128xf32>
    %44 = tpu.matmul %41, %43, %cst_47 {dimension_numbers = #tpu.dot_dimension_numbers<[1], [0], [0], [1], [0, 0, 1, 1], [], []>} : vector<16x128xf32>, vector<128x128xf32>, vector<16x128xf32> -> vector<16x128xf32>
    %45 = arith.addf %38, %44 : vector<16x128xf32>
    %c2_48 = arith.constant 2 : index
    %c0_49 = arith.constant 0 : index
    %c0_50 = arith.constant 0 : index
    %46 = vector.load %arg5[%c2_48, %c0_49, %c0_50] : memref<4x16x32xf32, #tpu.memory_space<vmem>>, vector<1x16x32xf32>
    %47 = vector.shape_cast %46 : vector<1x16x32xf32> to vector<16x32xf32>
    %cst_51 = arith.constant dense<0.000000e+00> : vector<16x128xf32>
    %48 = tpu.matmul %47, %32, %cst_51 {dimension_numbers = #tpu.dot_dimension_numbers<[1], [0], [0], [1], [0, 0, 1, 1], [], []>} : vector<16x32xf32>, vector<32x128xf32>, vector<16x128xf32> -> vector<16x128xf32>
    %c2_52 = arith.constant 2 : index
    %c0_53 = arith.constant 0 : index
    %c0_54 = arith.constant 0 : index
    %49 = vector.load %arg6[%c2_52, %c0_53, %c0_54] : memref<4x128x128xf32, #tpu.memory_space<vmem>>, vector<1x128x128xf32>
    %50 = vector.shape_cast %49 : vector<1x128x128xf32> to vector<128x128xf32>
    %cst_55 = arith.constant dense<0.000000e+00> : vector<16x128xf32>
    %51 = tpu.matmul %48, %50, %cst_55 {dimension_numbers = #tpu.dot_dimension_numbers<[1], [0], [0], [1], [0, 0, 1, 1], [], []>} : vector<16x128xf32>, vector<128x128xf32>, vector<16x128xf32> -> vector<16x128xf32>
    %52 = arith.addf %45, %51 : vector<16x128xf32>
    %c3_56 = arith.constant 3 : index
    %c0_57 = arith.constant 0 : index
    %c0_58 = arith.constant 0 : index
    %53 = vector.load %arg5[%c3_56, %c0_57, %c0_58] : memref<4x16x32xf32, #tpu.memory_space<vmem>>, vector<1x16x32xf32>
    %54 = vector.shape_cast %53 : vector<1x16x32xf32> to vector<16x32xf32>
    %cst_59 = arith.constant dense<0.000000e+00> : vector<16x128xf32>
    %55 = tpu.matmul %54, %32, %cst_59 {dimension_numbers = #tpu.dot_dimension_numbers<[1], [0], [0], [1], [0, 0, 1, 1], [], []>} : vector<16x32xf32>, vector<32x128xf32>, vector<16x128xf32> -> vector<16x128xf32>
    %c3_60 = arith.constant 3 : index
    %c0_61 = arith.constant 0 : index
    %c0_62 = arith.constant 0 : index
    %56 = vector.load %arg6[%c3_60, %c0_61, %c0_62] : memref<4x128x128xf32, #tpu.memory_space<vmem>>, vector<1x128x128xf32>
    %57 = vector.shape_cast %56 : vector<1x128x128xf32> to vector<128x128xf32>
    %cst_63 = arith.constant dense<0.000000e+00> : vector<16x128xf32>
    %58 = tpu.matmul %55, %57, %cst_63 {dimension_numbers = #tpu.dot_dimension_numbers<[1], [0], [0], [1], [0, 0, 1, 1], [], []>} : vector<16x128xf32>, vector<128x128xf32>, vector<16x128xf32> -> vector<16x128xf32>
    %59 = arith.addf %52, %58 : vector<16x128xf32>
    %c0_64 = arith.constant 0 : index
    %c0_65 = arith.constant 0 : index
    %60 = vector.load %arg7[%c0_64, %c0_65] : memref<1x128xf32, #tpu.memory_space<vmem>>, vector<1x128xf32>
    %61 = vector.broadcast %60 : vector<1x128xf32> to vector<16x128xf32>
    %62 = arith.addf %59, %61 : vector<16x128xf32>
    %c0_66 = arith.constant 0 : index
    %c0_67 = arith.constant 0 : index
    %63 = vector.load %arg10[%c0_66, %c0_67] : memref<128x128xf32, #tpu.memory_space<vmem>>, vector<128x128xf32>
    %cst_68 = arith.constant dense<0.000000e+00> : vector<16x128xf32>
    %64 = tpu.matmul %62, %63, %cst_68 {dimension_numbers = #tpu.dot_dimension_numbers<[1], [0], [0], [1], [0, 0, 1, 1], [], []>} : vector<16x128xf32>, vector<128x128xf32>, vector<16x128xf32> -> vector<16x128xf32>
    %65 = arith.subf %62, %64 : vector<16x128xf32>
    %66 = arith.mulf %65, %65 : vector<16x128xf32>
    %cst_69 = arith.constant dense<0.000000e+00> : vector<16x128xf32>
    %67 = tpu.matmul %66, %63, %cst_69 {dimension_numbers = #tpu.dot_dimension_numbers<[1], [0], [0], [1], [0, 0, 1, 1], [], []>} : vector<16x128xf32>, vector<128x128xf32>, vector<16x128xf32> -> vector<16x128xf32>
    %cst_70 = arith.constant 9.99999974E-6 : f32
    %68 = vector.broadcast %cst_70 : f32 to vector<16x128xf32>
    %69 = arith.addf %67, %68 : vector<16x128xf32>
    %70 = math.rsqrt %69 : vector<16x128xf32>
    %71 = arith.mulf %65, %70 : vector<16x128xf32>
    %c0_71 = arith.constant 0 : index
    %c0_72 = arith.constant 0 : index
    %72 = vector.load %arg8[%c0_71, %c0_72] : memref<1x128xf32, #tpu.memory_space<vmem>>, vector<1x128xf32>
    %73 = vector.broadcast %72 : vector<1x128xf32> to vector<16x128xf32>
    %74 = arith.mulf %71, %73 : vector<16x128xf32>
    %c0_73 = arith.constant 0 : index
    %c0_74 = arith.constant 0 : index
    %75 = vector.load %arg9[%c0_73, %c0_74] : memref<1x128xf32, #tpu.memory_space<vmem>>, vector<1x128xf32>
    %76 = vector.broadcast %75 : vector<1x128xf32> to vector<16x128xf32>
    %77 = arith.addf %74, %76 : vector<16x128xf32>
    %cst_75 = arith.constant 0.000000e+00 : f32
    %78 = vector.broadcast %cst_75 : f32 to vector<16x128xf32>
    %79 = arith.maximumf %77, %78 : vector<16x128xf32>
    %c0_76 = arith.constant 0 : index
    %c0_77 = arith.constant 0 : index
    %c0_78 = arith.constant 0 : index
    %80 = vector.load %arg11[%c0_76, %c0_77, %c0_78] : memref<4x8x16xf32, #tpu.memory_space<vmem>>, vector<1x8x16xf32>
    %81 = vector.shape_cast %80 : vector<1x8x16xf32> to vector<8x16xf32>
    %cst_79 = arith.constant dense<0.000000e+00> : vector<8x128xf32>
    %82 = tpu.matmul %81, %79, %cst_79 {dimension_numbers = #tpu.dot_dimension_numbers<[1], [0], [0], [1], [0, 0, 1, 1], [], []>} : vector<8x16xf32>, vector<16x128xf32>, vector<8x128xf32> -> vector<8x128xf32>
    %c0_80 = arith.constant 0 : index
    %c0_81 = arith.constant 0 : index
    %c0_82 = arith.constant 0 : index
    %83 = vector.load %arg12[%c0_80, %c0_81, %c0_82] : memref<4x128x128xf32, #tpu.memory_space<vmem>>, vector<1x128x128xf32>
    %84 = vector.shape_cast %83 : vector<1x128x128xf32> to vector<128x128xf32>
    %cst_83 = arith.constant dense<0.000000e+00> : vector<8x128xf32>
    %85 = tpu.matmul %82, %84, %cst_83 {dimension_numbers = #tpu.dot_dimension_numbers<[1], [0], [0], [1], [0, 0, 1, 1], [], []>} : vector<8x128xf32>, vector<128x128xf32>, vector<8x128xf32> -> vector<8x128xf32>
    %c1_84 = arith.constant 1 : index
    %c0_85 = arith.constant 0 : index
    %c0_86 = arith.constant 0 : index
    %86 = vector.load %arg11[%c1_84, %c0_85, %c0_86] : memref<4x8x16xf32, #tpu.memory_space<vmem>>, vector<1x8x16xf32>
    %87 = vector.shape_cast %86 : vector<1x8x16xf32> to vector<8x16xf32>
    %cst_87 = arith.constant dense<0.000000e+00> : vector<8x128xf32>
    %88 = tpu.matmul %87, %79, %cst_87 {dimension_numbers = #tpu.dot_dimension_numbers<[1], [0], [0], [1], [0, 0, 1, 1], [], []>} : vector<8x16xf32>, vector<16x128xf32>, vector<8x128xf32> -> vector<8x128xf32>
    %c1_88 = arith.constant 1 : index
    %c0_89 = arith.constant 0 : index
    %c0_90 = arith.constant 0 : index
    %89 = vector.load %arg12[%c1_88, %c0_89, %c0_90] : memref<4x128x128xf32, #tpu.memory_space<vmem>>, vector<1x128x128xf32>
    %90 = vector.shape_cast %89 : vector<1x128x128xf32> to vector<128x128xf32>
    %cst_91 = arith.constant dense<0.000000e+00> : vector<8x128xf32>
    %91 = tpu.matmul %88, %90, %cst_91 {dimension_numbers = #tpu.dot_dimension_numbers<[1], [0], [0], [1], [0, 0, 1, 1], [], []>} : vector<8x128xf32>, vector<128x128xf32>, vector<8x128xf32> -> vector<8x128xf32>
    %92 = arith.addf %85, %91 : vector<8x128xf32>
    %c2_92 = arith.constant 2 : index
    %c0_93 = arith.constant 0 : index
    %c0_94 = arith.constant 0 : index
    %93 = vector.load %arg11[%c2_92, %c0_93, %c0_94] : memref<4x8x16xf32, #tpu.memory_space<vmem>>, vector<1x8x16xf32>
    %94 = vector.shape_cast %93 : vector<1x8x16xf32> to vector<8x16xf32>
    %cst_95 = arith.constant dense<0.000000e+00> : vector<8x128xf32>
    %95 = tpu.matmul %94, %79, %cst_95 {dimension_numbers = #tpu.dot_dimension_numbers<[1], [0], [0], [1], [0, 0, 1, 1], [], []>} : vector<8x16xf32>, vector<16x128xf32>, vector<8x128xf32> -> vector<8x128xf32>
    %c2_96 = arith.constant 2 : index
    %c0_97 = arith.constant 0 : index
    %c0_98 = arith.constant 0 : index
    %96 = vector.load %arg12[%c2_96, %c0_97, %c0_98] : memref<4x128x128xf32, #tpu.memory_space<vmem>>, vector<1x128x128xf32>
    %97 = vector.shape_cast %96 : vector<1x128x128xf32> to vector<128x128xf32>
    %cst_99 = arith.constant dense<0.000000e+00> : vector<8x128xf32>
    %98 = tpu.matmul %95, %97, %cst_99 {dimension_numbers = #tpu.dot_dimension_numbers<[1], [0], [0], [1], [0, 0, 1, 1], [], []>} : vector<8x128xf32>, vector<128x128xf32>, vector<8x128xf32> -> vector<8x128xf32>
    %99 = arith.addf %92, %98 : vector<8x128xf32>
    %c3_100 = arith.constant 3 : index
    %c0_101 = arith.constant 0 : index
    %c0_102 = arith.constant 0 : index
    %100 = vector.load %arg11[%c3_100, %c0_101, %c0_102] : memref<4x8x16xf32, #tpu.memory_space<vmem>>, vector<1x8x16xf32>
    %101 = vector.shape_cast %100 : vector<1x8x16xf32> to vector<8x16xf32>
    %cst_103 = arith.constant dense<0.000000e+00> : vector<8x128xf32>
    %102 = tpu.matmul %101, %79, %cst_103 {dimension_numbers = #tpu.dot_dimension_numbers<[1], [0], [0], [1], [0, 0, 1, 1], [], []>} : vector<8x16xf32>, vector<16x128xf32>, vector<8x128xf32> -> vector<8x128xf32>
    %c3_104 = arith.constant 3 : index
    %c0_105 = arith.constant 0 : index
    %c0_106 = arith.constant 0 : index
    %103 = vector.load %arg12[%c3_104, %c0_105, %c0_106] : memref<4x128x128xf32, #tpu.memory_space<vmem>>, vector<1x128x128xf32>
    %104 = vector.shape_cast %103 : vector<1x128x128xf32> to vector<128x128xf32>
    %cst_107 = arith.constant dense<0.000000e+00> : vector<8x128xf32>
    %105 = tpu.matmul %102, %104, %cst_107 {dimension_numbers = #tpu.dot_dimension_numbers<[1], [0], [0], [1], [0, 0, 1, 1], [], []>} : vector<8x128xf32>, vector<128x128xf32>, vector<8x128xf32> -> vector<8x128xf32>
    %106 = arith.addf %99, %105 : vector<8x128xf32>
    %c0_108 = arith.constant 0 : index
    %c0_109 = arith.constant 0 : index
    %107 = vector.load %arg13[%c0_108, %c0_109] : memref<1x128xf32, #tpu.memory_space<vmem>>, vector<1x128xf32>
    %108 = vector.broadcast %107 : vector<1x128xf32> to vector<8x128xf32>
    %109 = arith.addf %106, %108 : vector<8x128xf32>
    %c0_110 = arith.constant 0 : index
    %c0_111 = arith.constant 0 : index
    %110 = vector.load %arg16[%c0_110, %c0_111] : memref<128x128xf32, #tpu.memory_space<vmem>>, vector<128x128xf32>
    %cst_112 = arith.constant dense<0.000000e+00> : vector<8x128xf32>
    %111 = tpu.matmul %109, %110, %cst_112 {dimension_numbers = #tpu.dot_dimension_numbers<[1], [0], [0], [1], [0, 0, 1, 1], [], []>} : vector<8x128xf32>, vector<128x128xf32>, vector<8x128xf32> -> vector<8x128xf32>
    %112 = arith.subf %109, %111 : vector<8x128xf32>
    %113 = arith.mulf %112, %112 : vector<8x128xf32>
    %cst_113 = arith.constant dense<0.000000e+00> : vector<8x128xf32>
    %114 = tpu.matmul %113, %110, %cst_113 {dimension_numbers = #tpu.dot_dimension_numbers<[1], [0], [0], [1], [0, 0, 1, 1], [], []>} : vector<8x128xf32>, vector<128x128xf32>, vector<8x128xf32> -> vector<8x128xf32>
    %cst_114 = arith.constant 9.99999974E-6 : f32
    %115 = vector.broadcast %cst_114 : f32 to vector<8x128xf32>
    %116 = arith.addf %114, %115 : vector<8x128xf32>
    %117 = math.rsqrt %116 : vector<8x128xf32>
    %118 = arith.mulf %112, %117 : vector<8x128xf32>
    %c0_115 = arith.constant 0 : index
    %c0_116 = arith.constant 0 : index
    %119 = vector.load %arg14[%c0_115, %c0_116] : memref<1x128xf32, #tpu.memory_space<vmem>>, vector<1x128xf32>
    %120 = vector.broadcast %119 : vector<1x128xf32> to vector<8x128xf32>
    %121 = arith.mulf %118, %120 : vector<8x128xf32>
    %c0_117 = arith.constant 0 : index
    %c0_118 = arith.constant 0 : index
    %122 = vector.load %arg15[%c0_117, %c0_118] : memref<1x128xf32, #tpu.memory_space<vmem>>, vector<1x128xf32>
    %123 = vector.broadcast %122 : vector<1x128xf32> to vector<8x128xf32>
    %124 = arith.addf %121, %123 : vector<8x128xf32>
    %cst_119 = arith.constant 0.000000e+00 : f32
    %125 = vector.broadcast %cst_119 : f32 to vector<8x128xf32>
    %126 = arith.maximumf %124, %125 : vector<8x128xf32>
    %c0_120 = arith.constant 0 : index
    %c0_121 = arith.constant 0 : index
    %c0_122 = arith.constant 0 : index
    %127 = vector.load %arg17[%c0_120, %c0_121, %c0_122] : memref<4x4x8xf32, #tpu.memory_space<vmem>>, vector<1x4x8xf32>
    %128 = vector.shape_cast %127 : vector<1x4x8xf32> to vector<4x8xf32>
    %cst_123 = arith.constant dense<0.000000e+00> : vector<4x128xf32>
    %129 = tpu.matmul %128, %126, %cst_123 {dimension_numbers = #tpu.dot_dimension_numbers<[1], [0], [0], [1], [0, 0, 1, 1], [], []>} : vector<4x8xf32>, vector<8x128xf32>, vector<4x128xf32> -> vector<4x128xf32>
    %c0_124 = arith.constant 0 : index
    %c0_125 = arith.constant 0 : index
    %c0_126 = arith.constant 0 : index
    %130 = vector.load %arg18[%c0_124, %c0_125, %c0_126] : memref<4x128x128xf32, #tpu.memory_space<vmem>>, vector<1x128x128xf32>
    %131 = vector.shape_cast %130 : vector<1x128x128xf32> to vector<128x128xf32>
    %cst_127 = arith.constant dense<0.000000e+00> : vector<4x128xf32>
    %132 = tpu.matmul %129, %131, %cst_127 {dimension_numbers = #tpu.dot_dimension_numbers<[1], [0], [0], [1], [0, 0, 1, 1], [], []>} : vector<4x128xf32>, vector<128x128xf32>, vector<4x128xf32> -> vector<4x128xf32>
    %c1_128 = arith.constant 1 : index
    %c0_129 = arith.constant 0 : index
    %c0_130 = arith.constant 0 : index
    %133 = vector.load %arg17[%c1_128, %c0_129, %c0_130] : memref<4x4x8xf32, #tpu.memory_space<vmem>>, vector<1x4x8xf32>
    %134 = vector.shape_cast %133 : vector<1x4x8xf32> to vector<4x8xf32>
    %cst_131 = arith.constant dense<0.000000e+00> : vector<4x128xf32>
    %135 = tpu.matmul %134, %126, %cst_131 {dimension_numbers = #tpu.dot_dimension_numbers<[1], [0], [0], [1], [0, 0, 1, 1], [], []>} : vector<4x8xf32>, vector<8x128xf32>, vector<4x128xf32> -> vector<4x128xf32>
    %c1_132 = arith.constant 1 : index
    %c0_133 = arith.constant 0 : index
    %c0_134 = arith.constant 0 : index
    %136 = vector.load %arg18[%c1_132, %c0_133, %c0_134] : memref<4x128x128xf32, #tpu.memory_space<vmem>>, vector<1x128x128xf32>
    %137 = vector.shape_cast %136 : vector<1x128x128xf32> to vector<128x128xf32>
    %cst_135 = arith.constant dense<0.000000e+00> : vector<4x128xf32>
    %138 = tpu.matmul %135, %137, %cst_135 {dimension_numbers = #tpu.dot_dimension_numbers<[1], [0], [0], [1], [0, 0, 1, 1], [], []>} : vector<4x128xf32>, vector<128x128xf32>, vector<4x128xf32> -> vector<4x128xf32>
    %139 = arith.addf %132, %138 : vector<4x128xf32>
    %c2_136 = arith.constant 2 : index
    %c0_137 = arith.constant 0 : index
    %c0_138 = arith.constant 0 : index
    %140 = vector.load %arg17[%c2_136, %c0_137, %c0_138] : memref<4x4x8xf32, #tpu.memory_space<vmem>>, vector<1x4x8xf32>
    %141 = vector.shape_cast %140 : vector<1x4x8xf32> to vector<4x8xf32>
    %cst_139 = arith.constant dense<0.000000e+00> : vector<4x128xf32>
    %142 = tpu.matmul %141, %126, %cst_139 {dimension_numbers = #tpu.dot_dimension_numbers<[1], [0], [0], [1], [0, 0, 1, 1], [], []>} : vector<4x8xf32>, vector<8x128xf32>, vector<4x128xf32> -> vector<4x128xf32>
    %c2_140 = arith.constant 2 : index
    %c0_141 = arith.constant 0 : index
    %c0_142 = arith.constant 0 : index
    %143 = vector.load %arg18[%c2_140, %c0_141, %c0_142] : memref<4x128x128xf32, #tpu.memory_space<vmem>>, vector<1x128x128xf32>
    %144 = vector.shape_cast %143 : vector<1x128x128xf32> to vector<128x128xf32>
    %cst_143 = arith.constant dense<0.000000e+00> : vector<4x128xf32>
    %145 = tpu.matmul %142, %144, %cst_143 {dimension_numbers = #tpu.dot_dimension_numbers<[1], [0], [0], [1], [0, 0, 1, 1], [], []>} : vector<4x128xf32>, vector<128x128xf32>, vector<4x128xf32> -> vector<4x128xf32>
    %146 = arith.addf %139, %145 : vector<4x128xf32>
    %c3_144 = arith.constant 3 : index
    %c0_145 = arith.constant 0 : index
    %c0_146 = arith.constant 0 : index
    %147 = vector.load %arg17[%c3_144, %c0_145, %c0_146] : memref<4x4x8xf32, #tpu.memory_space<vmem>>, vector<1x4x8xf32>
    %148 = vector.shape_cast %147 : vector<1x4x8xf32> to vector<4x8xf32>
    %cst_147 = arith.constant dense<0.000000e+00> : vector<4x128xf32>
    %149 = tpu.matmul %148, %126, %cst_147 {dimension_numbers = #tpu.dot_dimension_numbers<[1], [0], [0], [1], [0, 0, 1, 1], [], []>} : vector<4x8xf32>, vector<8x128xf32>, vector<4x128xf32> -> vector<4x128xf32>
    %c3_148 = arith.constant 3 : index
    %c0_149 = arith.constant 0 : index
    %c0_150 = arith.constant 0 : index
    %150 = vector.load %arg18[%c3_148, %c0_149, %c0_150] : memref<4x128x128xf32, #tpu.memory_space<vmem>>, vector<1x128x128xf32>
    %151 = vector.shape_cast %150 : vector<1x128x128xf32> to vector<128x128xf32>
    %cst_151 = arith.constant dense<0.000000e+00> : vector<4x128xf32>
    %152 = tpu.matmul %149, %151, %cst_151 {dimension_numbers = #tpu.dot_dimension_numbers<[1], [0], [0], [1], [0, 0, 1, 1], [], []>} : vector<4x128xf32>, vector<128x128xf32>, vector<4x128xf32> -> vector<4x128xf32>
    %153 = arith.addf %146, %152 : vector<4x128xf32>
    %c0_152 = arith.constant 0 : index
    %c0_153 = arith.constant 0 : index
    %154 = vector.load %arg19[%c0_152, %c0_153] : memref<1x128xf32, #tpu.memory_space<vmem>>, vector<1x128xf32>
    %155 = vector.broadcast %154 : vector<1x128xf32> to vector<4x128xf32>
    %156 = arith.addf %153, %155 : vector<4x128xf32>
    %c0_154 = arith.constant 0 : index
    %c0_155 = arith.constant 0 : index
    %157 = vector.load %arg22[%c0_154, %c0_155] : memref<128x128xf32, #tpu.memory_space<vmem>>, vector<128x128xf32>
    %cst_156 = arith.constant dense<0.000000e+00> : vector<4x128xf32>
    %158 = tpu.matmul %156, %157, %cst_156 {dimension_numbers = #tpu.dot_dimension_numbers<[1], [0], [0], [1], [0, 0, 1, 1], [], []>} : vector<4x128xf32>, vector<128x128xf32>, vector<4x128xf32> -> vector<4x128xf32>
    %159 = arith.subf %156, %158 : vector<4x128xf32>
    %160 = arith.mulf %159, %159 : vector<4x128xf32>
    %cst_157 = arith.constant dense<0.000000e+00> : vector<4x128xf32>
    %161 = tpu.matmul %160, %157, %cst_157 {dimension_numbers = #tpu.dot_dimension_numbers<[1], [0], [0], [1], [0, 0, 1, 1], [], []>} : vector<4x128xf32>, vector<128x128xf32>, vector<4x128xf32> -> vector<4x128xf32>
    %cst_158 = arith.constant 9.99999974E-6 : f32
    %162 = vector.broadcast %cst_158 : f32 to vector<4x128xf32>
    %163 = arith.addf %161, %162 : vector<4x128xf32>
    %164 = math.rsqrt %163 : vector<4x128xf32>
    %165 = arith.mulf %159, %164 : vector<4x128xf32>
    %c0_159 = arith.constant 0 : index
    %c0_160 = arith.constant 0 : index
    %166 = vector.load %arg20[%c0_159, %c0_160] : memref<1x128xf32, #tpu.memory_space<vmem>>, vector<1x128xf32>
    %167 = vector.broadcast %166 : vector<1x128xf32> to vector<4x128xf32>
    %168 = arith.mulf %165, %167 : vector<4x128xf32>
    %c0_161 = arith.constant 0 : index
    %c0_162 = arith.constant 0 : index
    %169 = vector.load %arg21[%c0_161, %c0_162] : memref<1x128xf32, #tpu.memory_space<vmem>>, vector<1x128xf32>
    %170 = vector.broadcast %169 : vector<1x128xf32> to vector<4x128xf32>
    %171 = arith.addf %168, %170 : vector<4x128xf32>
    %cst_163 = arith.constant 0.000000e+00 : f32
    %172 = vector.broadcast %cst_163 : f32 to vector<4x128xf32>
    %173 = arith.maximumf %171, %172 : vector<4x128xf32>
    %c0_164 = arith.constant 0 : index
    %c0_165 = arith.constant 0 : index
    %c0_166 = arith.constant 0 : index
    %174 = vector.load %arg23[%c0_164, %c0_165, %c0_166] : memref<4x2x4xf32, #tpu.memory_space<vmem>>, vector<1x2x4xf32>
    %175 = vector.shape_cast %174 : vector<1x2x4xf32> to vector<2x4xf32>
    %cst_167 = arith.constant dense<0.000000e+00> : vector<2x128xf32>
    %176 = tpu.matmul %175, %173, %cst_167 {dimension_numbers = #tpu.dot_dimension_numbers<[1], [0], [0], [1], [0, 0, 1, 1], [], []>} : vector<2x4xf32>, vector<4x128xf32>, vector<2x128xf32> -> vector<2x128xf32>
    %c0_168 = arith.constant 0 : index
    %c0_169 = arith.constant 0 : index
    %c0_170 = arith.constant 0 : index
    %177 = vector.load %arg24[%c0_168, %c0_169, %c0_170] : memref<4x128x128xf32, #tpu.memory_space<vmem>>, vector<1x128x128xf32>
    %178 = vector.shape_cast %177 : vector<1x128x128xf32> to vector<128x128xf32>
    %cst_171 = arith.constant dense<0.000000e+00> : vector<2x128xf32>
    %179 = tpu.matmul %176, %178, %cst_171 {dimension_numbers = #tpu.dot_dimension_numbers<[1], [0], [0], [1], [0, 0, 1, 1], [], []>} : vector<2x128xf32>, vector<128x128xf32>, vector<2x128xf32> -> vector<2x128xf32>
    %c1_172 = arith.constant 1 : index
    %c0_173 = arith.constant 0 : index
    %c0_174 = arith.constant 0 : index
    %180 = vector.load %arg23[%c1_172, %c0_173, %c0_174] : memref<4x2x4xf32, #tpu.memory_space<vmem>>, vector<1x2x4xf32>
    %181 = vector.shape_cast %180 : vector<1x2x4xf32> to vector<2x4xf32>
    %cst_175 = arith.constant dense<0.000000e+00> : vector<2x128xf32>
    %182 = tpu.matmul %181, %173, %cst_175 {dimension_numbers = #tpu.dot_dimension_numbers<[1], [0], [0], [1], [0, 0, 1, 1], [], []>} : vector<2x4xf32>, vector<4x128xf32>, vector<2x128xf32> -> vector<2x128xf32>
    %c1_176 = arith.constant 1 : index
    %c0_177 = arith.constant 0 : index
    %c0_178 = arith.constant 0 : index
    %183 = vector.load %arg24[%c1_176, %c0_177, %c0_178] : memref<4x128x128xf32, #tpu.memory_space<vmem>>, vector<1x128x128xf32>
    %184 = vector.shape_cast %183 : vector<1x128x128xf32> to vector<128x128xf32>
    %cst_179 = arith.constant dense<0.000000e+00> : vector<2x128xf32>
    %185 = tpu.matmul %182, %184, %cst_179 {dimension_numbers = #tpu.dot_dimension_numbers<[1], [0], [0], [1], [0, 0, 1, 1], [], []>} : vector<2x128xf32>, vector<128x128xf32>, vector<2x128xf32> -> vector<2x128xf32>
    %186 = arith.addf %179, %185 : vector<2x128xf32>
    %c2_180 = arith.constant 2 : index
    %c0_181 = arith.constant 0 : index
    %c0_182 = arith.constant 0 : index
    %187 = vector.load %arg23[%c2_180, %c0_181, %c0_182] : memref<4x2x4xf32, #tpu.memory_space<vmem>>, vector<1x2x4xf32>
    %188 = vector.shape_cast %187 : vector<1x2x4xf32> to vector<2x4xf32>
    %cst_183 = arith.constant dense<0.000000e+00> : vector<2x128xf32>
    %189 = tpu.matmul %188, %173, %cst_183 {dimension_numbers = #tpu.dot_dimension_numbers<[1], [0], [0], [1], [0, 0, 1, 1], [], []>} : vector<2x4xf32>, vector<4x128xf32>, vector<2x128xf32> -> vector<2x128xf32>
    %c2_184 = arith.constant 2 : index
    %c0_185 = arith.constant 0 : index
    %c0_186 = arith.constant 0 : index
    %190 = vector.load %arg24[%c2_184, %c0_185, %c0_186] : memref<4x128x128xf32, #tpu.memory_space<vmem>>, vector<1x128x128xf32>
    %191 = vector.shape_cast %190 : vector<1x128x128xf32> to vector<128x128xf32>
    %cst_187 = arith.constant dense<0.000000e+00> : vector<2x128xf32>
    %192 = tpu.matmul %189, %191, %cst_187 {dimension_numbers = #tpu.dot_dimension_numbers<[1], [0], [0], [1], [0, 0, 1, 1], [], []>} : vector<2x128xf32>, vector<128x128xf32>, vector<2x128xf32> -> vector<2x128xf32>
    %193 = arith.addf %186, %192 : vector<2x128xf32>
    %c3_188 = arith.constant 3 : index
    %c0_189 = arith.constant 0 : index
    %c0_190 = arith.constant 0 : index
    %194 = vector.load %arg23[%c3_188, %c0_189, %c0_190] : memref<4x2x4xf32, #tpu.memory_space<vmem>>, vector<1x2x4xf32>
    %195 = vector.shape_cast %194 : vector<1x2x4xf32> to vector<2x4xf32>
    %cst_191 = arith.constant dense<0.000000e+00> : vector<2x128xf32>
    %196 = tpu.matmul %195, %173, %cst_191 {dimension_numbers = #tpu.dot_dimension_numbers<[1], [0], [0], [1], [0, 0, 1, 1], [], []>} : vector<2x4xf32>, vector<4x128xf32>, vector<2x128xf32> -> vector<2x128xf32>
    %c3_192 = arith.constant 3 : index
    %c0_193 = arith.constant 0 : index
    %c0_194 = arith.constant 0 : index
    %197 = vector.load %arg24[%c3_192, %c0_193, %c0_194] : memref<4x128x128xf32, #tpu.memory_space<vmem>>, vector<1x128x128xf32>
    %198 = vector.shape_cast %197 : vector<1x128x128xf32> to vector<128x128xf32>
    %cst_195 = arith.constant dense<0.000000e+00> : vector<2x128xf32>
    %199 = tpu.matmul %196, %198, %cst_195 {dimension_numbers = #tpu.dot_dimension_numbers<[1], [0], [0], [1], [0, 0, 1, 1], [], []>} : vector<2x128xf32>, vector<128x128xf32>, vector<2x128xf32> -> vector<2x128xf32>
    %200 = arith.addf %193, %199 : vector<2x128xf32>
    %c0_196 = arith.constant 0 : index
    %c0_197 = arith.constant 0 : index
    %201 = vector.load %arg25[%c0_196, %c0_197] : memref<1x128xf32, #tpu.memory_space<vmem>>, vector<1x128xf32>
    %202 = vector.broadcast %201 : vector<1x128xf32> to vector<2x128xf32>
    %203 = arith.addf %200, %202 : vector<2x128xf32>
    %c0_198 = arith.constant 0 : index
    %c0_199 = arith.constant 0 : index
    %204 = vector.load %arg28[%c0_198, %c0_199] : memref<128x128xf32, #tpu.memory_space<vmem>>, vector<128x128xf32>
    %cst_200 = arith.constant dense<0.000000e+00> : vector<2x128xf32>
    %205 = tpu.matmul %203, %204, %cst_200 {dimension_numbers = #tpu.dot_dimension_numbers<[1], [0], [0], [1], [0, 0, 1, 1], [], []>} : vector<2x128xf32>, vector<128x128xf32>, vector<2x128xf32> -> vector<2x128xf32>
    %206 = arith.subf %203, %205 : vector<2x128xf32>
    %207 = arith.mulf %206, %206 : vector<2x128xf32>
    %cst_201 = arith.constant dense<0.000000e+00> : vector<2x128xf32>
    %208 = tpu.matmul %207, %204, %cst_201 {dimension_numbers = #tpu.dot_dimension_numbers<[1], [0], [0], [1], [0, 0, 1, 1], [], []>} : vector<2x128xf32>, vector<128x128xf32>, vector<2x128xf32> -> vector<2x128xf32>
    %cst_202 = arith.constant 9.99999974E-6 : f32
    %209 = vector.broadcast %cst_202 : f32 to vector<2x128xf32>
    %210 = arith.addf %208, %209 : vector<2x128xf32>
    %211 = math.rsqrt %210 : vector<2x128xf32>
    %212 = arith.mulf %206, %211 : vector<2x128xf32>
    %c0_203 = arith.constant 0 : index
    %c0_204 = arith.constant 0 : index
    %213 = vector.load %arg26[%c0_203, %c0_204] : memref<1x128xf32, #tpu.memory_space<vmem>>, vector<1x128xf32>
    %214 = vector.broadcast %213 : vector<1x128xf32> to vector<2x128xf32>
    %215 = arith.mulf %212, %214 : vector<2x128xf32>
    %c0_205 = arith.constant 0 : index
    %c0_206 = arith.constant 0 : index
    %216 = vector.load %arg27[%c0_205, %c0_206] : memref<1x128xf32, #tpu.memory_space<vmem>>, vector<1x128xf32>
    %217 = vector.broadcast %216 : vector<1x128xf32> to vector<2x128xf32>
    %218 = arith.addf %215, %217 : vector<2x128xf32>
    %cst_207 = arith.constant 0.000000e+00 : f32
    %219 = vector.broadcast %cst_207 : f32 to vector<2x128xf32>
    %220 = arith.maximumf %218, %219 : vector<2x128xf32>
    %c0_208 = arith.constant 0 : index
    %c0_209 = arith.constant 0 : index
    %221 = vector.load %arg29[%c0_208, %c0_209] : memref<128x1xf32, #tpu.memory_space<vmem>>, vector<128x1xf32>
    %cst_210 = arith.constant dense<0.000000e+00> : vector<2x1xf32>
    %222 = tpu.matmul %220, %221, %cst_210 {dimension_numbers = #tpu.dot_dimension_numbers<[1], [0], [0], [1], [0, 0, 1, 1], [], []>} : vector<2x128xf32>, vector<128x1xf32>, vector<2x1xf32> -> vector<2x1xf32>
    %c0_211 = arith.constant 0 : index
    %c0_212 = arith.constant 0 : index
    %223 = vector.load %arg30[%c0_211, %c0_212] : memref<1x1xf32, #tpu.memory_space<vmem>>, vector<1x1xf32>
    %224 = vector.broadcast %223 : vector<1x1xf32> to vector<2x1xf32>
    %225 = arith.addf %222, %224 : vector<2x1xf32>
    %c0_213 = arith.constant 0 : index
    %c0_214 = arith.constant 0 : index
    %226 = vector.load %arg31[%c0_213, %c0_214] : memref<2x1xf32, #tpu.memory_space<vmem>>, vector<2x1xf32>
    tpu.vector_store %arg31[%c0_213, %c0_214], %225 {strides = array<i32>} : memref<2x1xf32, #tpu.memory_space<vmem>>, vector<2x1xf32>,
    return
  }
  func.func @transform_0(%arg0: i32) -> (i32, i32) {
    %c0_i32 = arith.constant 0 : i32
    %c0_i32_0 = arith.constant 0 : i32
    %c0_i32_1 = arith.constant 0 : i32
    return %c0_i32, %c0_i32_0 : i32, i32
  }
  func.func @transform_1(%arg0: i32) -> (i32, i32, i32) {
    %c0_i32 = arith.constant 0 : i32
    %c0_i32_0 = arith.constant 0 : i32
    %c0_i32_1 = arith.constant 0 : i32
    %c0_i32_2 = arith.constant 0 : i32
    return %c0_i32, %c0_i32_0, %c0_i32_1 : i32, i32, i32
  }
  func.func @transform_2(%arg0: i32) -> (i32, i32, i32) {
    %c0_i32 = arith.constant 0 : i32
    %c0_i32_0 = arith.constant 0 : i32
    %c0_i32_1 = arith.constant 0 : i32
    %c0_i32_2 = arith.constant 0 : i32
    return %c0_i32, %c0_i32_0, %c0_i32_1 : i32, i32, i32
  }
  func.func @transform_3(%arg0: i32) -> (i32, i32) {
    %c0_i32 = arith.constant 0 : i32
    %c0_i32_0 = arith.constant 0 : i32
    %c0_i32_1 = arith.constant 0 : i32
    return %c0_i32, %c0_i32_0 : i32, i32
  }
  func.func @transform_4(%arg0: i32) -> (i32, i32, i32) {
    %c0_i32 = arith.constant 0 : i32
    %c0_i32_0 = arith.constant 0 : i32
    %c0_i32_1 = arith.constant 0 : i32
    %c0_i32_2 = arith.constant 0 : i32
    return %c0_i32, %c0_i32_0, %c0_i32_1 : i32, i32, i32
  }
  func.func @transform_5(%arg0: i32) -> (i32, i32, i32) {
    %c0_i32 = arith.constant 0 : i32
    %c0_i32_0 = arith.constant 0 : i32
    %c0_i32_1 = arith.constant 0 : i32
    %c0_i32_2 = arith.constant 0 : i32
    return %c0_i32, %c0_i32_0, %c0_i32_1 : i32, i32, i32
  }
  func.func @transform_6(%arg0: i32) -> (i32, i32) {
    %c0_i32 = arith.constant 0 : i32
    %c0_i32_0 = arith.constant 0 : i32
    %c0_i32_1 = arith.constant 0 : i32
    return %c0_i32, %c0_i32_0 : i32, i32
  }
  func.func @transform_7(%arg0: i32) -> (i32, i32) {
    %c0_i32 = arith.constant 0 : i32
    %c0_i32_0 = arith.constant 0 : i32
    %c0_i32_1 = arith.constant 0 : i32
    return %c0_i32, %c0_i32_0 : i32, i32
  }
  func.func @transform_8(%arg0: i32) -> (i32, i32) {
    %c0_i32 = arith.constant 0 : i32
    %c0_i32_0 = arith.constant 0 : i32
    %c0_i32_1 = arith.constant 0 : i32
    return %c0_i32, %c0_i32_0 : i32, i32
  }
  func.func @transform_9(%arg0: i32) -> (i32, i32) {
    %c0_i32 = arith.constant 0 : i32
    %c0_i32_0 = arith.constant 0 : i32
    %c0_i32_1 = arith.constant 0 : i32
    return %c0_i32, %c0_i32_0 : i32, i32
  }
  func.func @transform_10(%arg0: i32) -> (i32, i32, i32) {
    %c0_i32 = arith.constant 0 : i32
    %c0_i32_0 = arith.constant 0 : i32
    %c0_i32_1 = arith.constant 0 : i32
    %c0_i32_2 = arith.constant 0 : i32
    return %c0_i32, %c0_i32_0, %c0_i32_1 : i32, i32, i32
  }
  func.func @transform_11(%arg0: i32) -> (i32, i32, i32) {
    %c0_i32 = arith.constant 0 : i32
    %c0_i32_0 = arith.constant 0 : i32
    %c0_i32_1 = arith.constant 0 : i32
    %c0_i32_2 = arith.constant 0 : i32
    return %c0_i32, %c0_i32_0, %c0_i32_1 : i32, i32, i32
  }
  func.func @transform_12(%arg0: i32) -> (i32, i32) {
    %c0_i32 = arith.constant 0 : i32
    %c0_i32_0 = arith.constant 0 : i32
    %c0_i32_1 = arith.constant 0 : i32
    return %c0_i32, %c0_i32_0 : i32, i32
  }
  func.func @transform_13(%arg0: i32) -> (i32, i32) {
    %c0_i32 = arith.constant 0 : i32
    %c0_i32_0 = arith.constant 0 : i32
    %c0_i32_1 = arith.constant 0 : i32
    return %c0_i32, %c0_i32_0 : i32, i32
  }
  func.func @transform_14(%arg0: i32) -> (i32, i32) {
    %c0_i32 = arith.constant 0 : i32
    %c0_i32_0 = arith.constant 0 : i32
    %c0_i32_1 = arith.constant 0 : i32
    return %c0_i32, %c0_i32_0 : i32, i32
  }
  func.func @transform_15(%arg0: i32) -> (i32, i32) {
    %c0_i32 = arith.constant 0 : i32
    %c0_i32_0 = arith.constant 0 : i32
    %c0_i32_1 = arith.constant 0 : i32
    return %c0_i32, %c0_i32_0 : i32, i32
  }
  func.func @transform_16(%arg0: i32) -> (i32, i32, i32) {
    %c0_i32 = arith.constant 0 : i32
    %c0_i32_0 = arith.constant 0 : i32
    %c0_i32_1 = arith.constant 0 : i32
    %c0_i32_2 = arith.constant 0 : i32
    return %c0_i32, %c0_i32_0, %c0_i32_1 : i32, i32, i32
  }
  func.func @transform_17(%arg0: i32) -> (i32, i32, i32) {
    %c0_i32 = arith.constant 0 : i32
    %c0_i32_0 = arith.constant 0 : i32
    %c0_i32_1 = arith.constant 0 : i32
    %c0_i32_2 = arith.constant 0 : i32
    return %c0_i32, %c0_i32_0, %c0_i32_1 : i32, i32, i32
  }
  func.func @transform_18(%arg0: i32) -> (i32, i32) {
    %c0_i32 = arith.constant 0 : i32
    %c0_i32_0 = arith.constant 0 : i32
    %c0_i32_1 = arith.constant 0 : i32
    return %c0_i32, %c0_i32_0 : i32, i32
  }
  func.func @transform_19(%arg0: i32) -> (i32, i32) {
    %c0_i32 = arith.constant 0 : i32
    %c0_i32_0 = arith.constant 0 : i32
    %c0_i32_1 = arith.constant 0 : i32
    return %c0_i32, %c0_i32_0 : i32, i32
  }
  func.func @transform_20(%arg0: i32) -> (i32, i32) {
    %c0_i32 = arith.constant 0 : i32
    %c0_i32_0 = arith.constant 0 : i32
    %c0_i32_1 = arith.constant 0 : i32
    return %c0_i32, %c0_i32_0 : i32, i32
  }
  func.func @transform_21(%arg0: i32) -> (i32, i32) {
    %c0_i32 = arith.constant 0 : i32
    %c0_i32_0 = arith.constant 0 : i32
    %c0_i32_1 = arith.constant 0 : i32
    return %c0_i32, %c0_i32_0 : i32, i32
  }
  func.func @transform_22(%arg0: i32) -> (i32, i32, i32) {
    %c0_i32 = arith.constant 0 : i32
    %c0_i32_0 = arith.constant 0 : i32
    %c0_i32_1 = arith.constant 0 : i32
    %c0_i32_2 = arith.constant 0 : i32
    return %c0_i32, %c0_i32_0, %c0_i32_1 : i32, i32, i32
  }
  func.func @transform_23(%arg0: i32) -> (i32, i32, i32) {
    %c0_i32 = arith.constant 0 : i32
    %c0_i32_0 = arith.constant 0 : i32
    %c0_i32_1 = arith.constant 0 : i32
    %c0_i32_2 = arith.constant 0 : i32
    return %c0_i32, %c0_i32_0, %c0_i32_1 : i32, i32, i32
  }
  func.func @transform_24(%arg0: i32) -> (i32, i32) {
    %c0_i32 = arith.constant 0 : i32
    %c0_i32_0 = arith.constant 0 : i32
    %c0_i32_1 = arith.constant 0 : i32
    return %c0_i32, %c0_i32_0 : i32, i32
  }
  func.func @transform_25(%arg0: i32) -> (i32, i32) {
    %c0_i32 = arith.constant 0 : i32
    %c0_i32_0 = arith.constant 0 : i32
    %c0_i32_1 = arith.constant 0 : i32
    return %c0_i32, %c0_i32_0 : i32, i32
  }
  func.func @transform_26(%arg0: i32) -> (i32, i32) {
    %c0_i32 = arith.constant 0 : i32
    %c0_i32_0 = arith.constant 0 : i32
    %c0_i32_1 = arith.constant 0 : i32
    return %c0_i32, %c0_i32_0 : i32, i32
  }
  func.func @transform_27(%arg0: i32) -> (i32, i32) {
    %c0_i32 = arith.constant 0 : i32
    %c0_i32_0 = arith.constant 0 : i32
    %c0_i32_1 = arith.constant 0 : i32
    return %c0_i32, %c0_i32_0 : i32, i32
  }
  func.func @transform_28(%arg0: i32) -> (i32, i32) {
    %c0_i32 = arith.constant 0 : i32
    %c0_i32_0 = arith.constant 0 : i32
    %c0_i32_1 = arith.constant 0 : i32
    return %c0_i32, %c0_i32_0 : i32, i32
  }
  func.func @transform_29(%arg0: i32) -> (i32, i32) {
    %c0_i32 = arith.constant 0 : i32
    %c0_i32_0 = arith.constant 0 : i32
    %c0_i32_1 = arith.constant 0 : i32
    return %c0_i32, %c0_i32_0 : i32, i32
  }
  func.func @transform_30(%arg0: i32) -> (i32, i32) {
    %c0_i32 = arith.constant 0 : i32
    %c0_i32_0 = arith.constant 0 : i32
    %c0_i32_1 = arith.constant 0 : i32
    return %c0_i32, %c0_i32_0 : i32, i32
  }
}

</mosaic_0001>

<llo_original>
// kernel: discriminator_forward.1
$region0: #{discriminator_forward.1}
  #allocation0 [shape = 'u32[]', space=smem, size = 0x4, offset = 0x4, fixed_abs, tag = 'smem constant byte address 0x4 - core index']
  #allocation1 [shape = 'u32[144,128]{1,0:T(1,128)}', space=vmem, size = 0x12000, scoped, tag = 'internal scratch']
  #allocation2 [shape = 'f32[1,1]{1,0:T(1,128)S(1)}', space=vmem, size = 0x200, scoped, tag = 'scoped memory for discriminator_forward.1']
  %s0 = inlined_call_operand.smem [shape: u32[31], index: -1, kind: input, shape index: {}]
  %s1 = sld [smem:[%s0]]
  %s2 = scalar_lea.smem %s0, 1
  %s3 = sld [smem:[%s2]]
  %s4 = scalar_lea.smem %s0, 2
  %s5 = sld [smem:[%s4]]
  %s6 = scalar_lea.smem %s0, 3
  %s7 = sld [smem:[%s6]]
  %s8 = scalar_lea.smem %s0, 4
  %s9 = sld [smem:[%s8]]
  %s10 = scalar_lea.smem %s0, 5
  %s11 = sld [smem:[%s10]]
  %s12 = scalar_lea.smem %s0, 6
  %s13 = sld [smem:[%s12]]
  %s14 = scalar_lea.smem %s0, 7
  %s15 = sld [smem:[%s14]]
  %s16 = scalar_lea.smem %s0, 8
  %s17 = sld [smem:[%s16]]
  %s18 = scalar_lea.smem %s0, 9
  %s19 = sld [smem:[%s18]]
  %s20 = scalar_lea.smem %s0, 10
  %s21 = sld [smem:[%s20]]
  %s22 = scalar_lea.smem %s0, 11
  %s23 = sld [smem:[%s22]]
  %s24 = scalar_lea.smem %s0, 12
  %s25 = sld [smem:[%s24]]
  %s26 = scalar_lea.smem %s0, 13
  %s27 = sld [smem:[%s26]]
  %s28 = scalar_lea.smem %s0, 14
  %s29 = sld [smem:[%s28]]
  %s30 = scalar_lea.smem %s0, 15
  %s31 = sld [smem:[%s30]]
  %s32 = scalar_lea.smem %s0, 16
  %s33 = sld [smem:[%s32]]
  %s34 = scalar_lea.smem %s0, 17
  %s35 = sld [smem:[%s34]]
  %s36 = scalar_lea.smem %s0, 18
  %s37 = sld [smem:[%s36]]
  %s38 = scalar_lea.smem %s0, 19
  %s39 = sld [smem:[%s38]]
  %s40 = scalar_lea.smem %s0, 20
  %s41 = sld [smem:[%s40]]
  %s42 = scalar_lea.smem %s0, 21
  %s43 = sld [smem:[%s42]]
  %s44 = scalar_lea.smem %s0, 22
  %s45 = sld [smem:[%s44]]
  %s46 = scalar_lea.smem %s0, 23
  %s47 = sld [smem:[%s46]]
  %s48 = scalar_lea.smem %s0, 24
  %s49 = sld [smem:[%s48]]
  %s50 = scalar_lea.smem %s0, 25
  %s51 = sld [smem:[%s50]]
  %s52 = scalar_lea.smem %s0, 26
  %s53 = sld [smem:[%s52]]
  %s54 = scalar_lea.smem %s0, 27
  %s55 = sld [smem:[%s54]]
  %s56 = scalar_lea.smem %s0, 28
  %s57 = sld [smem:[%s56]]
  %s58 = scalar_lea.smem %s0, 29
  %s59 = sld [smem:[%s58]]
  %s60 = scalar_lea.smem %s0, 30
  %s61 = sld [smem:[%s60]]
  %s62 = sld [smem:[#allocation0]]
  $region202: #{discriminator_forward.1} parent=0
    _
  %s64 = ssub.s32 1, %s62
  %s65 = scalar_select 0, %s64, %s62
  %v66 = vstv %s59
  %67 = vst [vmem:[#allocation2] sm:$0x1] %v66
  $region1: #{discriminator_forward.1} parent=0
    #allocation3 [shape = 'u8[65536]{0}', space=vmem, size = 0x10000, scoped, tag = 'input window, operand 1, single buffered']
    #allocation4 [shape = 's32[1]{0}', space=sflag, size = 0x4, scoped, tag = 'scoped memory for discriminator_forward.1']
    #allocation5 [shape = 'u8[262144]{0}', space=vmem, size = 0x40000, scoped, tag = 'input window, operand 2, single buffered']
    #allocation6 [shape = 's32[1]{0}', space=sflag, size = 0x4, scoped, tag = 'scoped memory for discriminator_forward.1']
    #allocation7 [shape = 'u8[32768]{0}', space=vmem, size = 0x8000, scoped, tag = 'input window, operand 4, single buffered']
    #allocation8 [shape = 'u8[262144]{0}', space=vmem, size = 0x40000, scoped, tag = 'input window, operand 5, single buffered']
    #allocation9 [shape = 's32[1]{0}', space=sflag, size = 0x4, scoped, tag = 'scoped memory for discriminator_forward.1']
    #allocation10 [shape = 'u8[512]{0}', space=vmem, size = 0x400, scoped, tag = 'input window, operand 6, single buffered']
    #allocation11 [shape = 'u8[512]{0}', space=vmem, size = 0x400, scoped, tag = 'input window, operand 7, single buffered']
    #allocation12 [shape = 's32[1]{0}', space=sflag, size = 0x4, scoped, tag = 'scoped memory for discriminator_forward.1']
    #allocation13 [shape = 'u8[512]{0}', space=vmem, size = 0x400, scoped, tag = 'input window, operand 8, single buffered']
    #allocation14 [shape = 'u8[65536]{0}', space=vmem, size = 0x10000, scoped, tag = 'input window, operand 9, single buffered']
    #allocation15 [shape = 's32[1]{0}', space=sflag, size = 0x4, scoped, tag = 'scoped memory for discriminator_forward.1']
    #allocation16 [shape = 'u8[16384]{0}', space=vmem, size = 0x4000, scoped, tag = 'input window, operand 10, single buffered']
    #allocation17 [shape = 'u8[512]{0}', space=vmem, size = 0x400, scoped, tag = 'input window, operand 13, single buffered']
    #allocation18 [shape = 's32[1]{0}', space=sflag, size = 0x4, scoped, tag = 'scoped memory for discriminator_forward.1']
    #allocation19 [shape = 'u8[512]{0}', space=vmem, size = 0x400, scoped, tag = 'input window, operand 14, single buffered']
    #allocation20 [shape = 'u8[65536]{0}', space=vmem, size = 0x10000, scoped, tag = 'input window, operand 15, single buffered']
    #allocation21 [shape = 's32[1]{0}', space=sflag, size = 0x4, scoped, tag = 'scoped memory for discriminator_forward.1']
    #allocation22 [shape = 'u8[512]{0}', space=vmem, size = 0x400, scoped, tag = 'input window, operand 19, single buffered']
    #allocation23 [shape = 'u8[512]{0}', space=vmem, size = 0x400, scoped, tag = 'input window, operand 20, single buffered']
    #allocation24 [shape = 's32[1]{0}', space=sflag, size = 0x4, scoped, tag = 'scoped memory for discriminator_forward.1']
    #allocation25 [shape = 'u8[65536]{0}', space=vmem, size = 0x10000, scoped, tag = 'input window, operand 21, single buffered']
    #allocation26 [shape = 'u8[512]{0}', space=vmem, size = 0x400, scoped, tag = 'input window, operand 25, single buffered']
    #allocation27 [shape = 's32[1]{0}', space=sflag, size = 0x4, scoped, tag = 'scoped memory for discriminator_forward.1']
    #allocation28 [shape = 'u8[512]{0}', space=vmem, size = 0x400, scoped, tag = 'input window, operand 26, single buffered']
    #allocation29 [shape = 'u8[65536]{0}', space=vmem, size = 0x10000, scoped, tag = 'input window, operand 28, single buffered']
    #allocation30 [shape = 's32[1]{0}', space=sflag, size = 0x4, scoped, tag = 'scoped memory for discriminator_forward.1']
    %68 = vsyncpa [#allocation4], 0
    %69 = vsyncpa [#allocation6], 0
    %70 = vsyncpa [#allocation9], 0
    %71 = vsyncpa [#allocation12], 0
    %72 = vsyncpa [#allocation15], 0
    %73 = vsyncpa [#allocation18], 0
    %74 = vsyncpa [#allocation21], 0
    %75 = vsyncpa [#allocation24], 0
    %76 = vsyncpa [#allocation27], 0
    %77 = vsyncpa [#allocation30], 0
    // Predicated region
    $region2: #{discriminator_forward.1} parent=1 // pred_check
      _
    $region3: #{discriminator_forward.1} parent=1 // pred_check_branch
      %79 = sbr.rel (0) target = $region5
    $region4: #{discriminator_forward.1} parent=1 // pred_region
      _
    $region5: #{discriminator_forward.1} parent=1 // pred_fallthru
      _
    // Predicated region
    $region6: #{discriminator_forward.1} parent=1 // pred_check
      _
    $region7: #{discriminator_forward.1} parent=1 // pred_check_branch
      %81 = sbr.rel (0) target = $region9
    $region8: #{discriminator_forward.1} parent=1 // pred_region
      %s83 = ssub.s32 2048, 2048
      %84 = vsyncadd [#allocation4], %s83
      %s85 = sshll.u32 [#allocation3], 4
      %s86 = int_to_ptr.vmem [resolvable:$true] %s85
      %91 = dma.hbm_to_vmem [thread:$0]  %s3, 2048, %s86, [#allocation4], 128, 128, 8
    $region9: #{discriminator_forward.1} parent=1 // pred_fallthru
      _
    // Predicated region
    $region10: #{discriminator_forward.1} parent=1 // pred_check
      _
    $region11: #{discriminator_forward.1} parent=1 // pred_check_branch
      %93 = sbr.rel (0) target = $region13
    $region12: #{discriminator_forward.1} parent=1 // pred_region
      %s95 = ssub.s32 8192, 8192
      %96 = vsyncadd [#allocation6], %s95
      %s97 = sshll.u32 [#allocation5], 4
      %s98 = int_to_ptr.vmem [resolvable:$true] %s97
      %103 = dma.hbm_to_vmem [thread:$0]  %s5, 8192, %s98, [#allocation6], 128, 128, 8
    $region13: #{discriminator_forward.1} parent=1 // pred_fallthru
      _
    // Predicated region
    $region14: #{discriminator_forward.1} parent=1 // pred_check
      _
    $region15: #{discriminator_forward.1} parent=1 // pred_check_branch
      %105 = sbr.rel (0) target = $region17
    $region16: #{discriminator_forward.1} parent=1 // pred_region
      _
    $region17: #{discriminator_forward.1} parent=1 // pred_fallthru
      _
    // Predicated region
    $region18: #{discriminator_forward.1} parent=1 // pred_check
      _
    $region19: #{discriminator_forward.1} parent=1 // pred_check_branch
      %107 = sbr.rel (0) target = $region21
    $region20: #{discriminator_forward.1} parent=1 // pred_region
      %s109 = ssub.s32 1024, 1024
      %110 = vsyncadd [#allocation6], %s109
      %s111 = sshll.u32 [#allocation7], 4
      %s112 = int_to_ptr.vmem [resolvable:$true] %s111
      %117 = dma.hbm_to_vmem [thread:$0]  %s9, 1024, %s112, [#allocation6], 128, 128, 8
    $region21: #{discriminator_forward.1} parent=1 // pred_fallthru
      _
    // Predicated region
    $region22: #{discriminator_forward.1} parent=1 // pred_check
      _
    $region23: #{discriminator_forward.1} parent=1 // pred_check_branch
      %119 = sbr.rel (0) target = $region25
    $region24: #{discriminator_forward.1} parent=1 // pred_region
      %s121 = ssub.s32 8192, 8192
      %122 = vsyncadd [#allocation9], %s121
      %s123 = sshll.u32 [#allocation8], 4
      %s124 = int_to_ptr.vmem [resolvable:$true] %s123
      %129 = dma.hbm_to_vmem [thread:$0]  %s11, 8192, %s124, [#allocation9], 128, 128, 8
    $region25: #{discriminator_forward.1} parent=1 // pred_fallthru
      _
    // Predicated region
    $region26: #{discriminator_forward.1} parent=1 // pred_check
      _
    $region27: #{discriminator_forward.1} parent=1 // pred_check_branch
      %131 = sbr.rel (0) target = $region29
    $region28: #{discriminator_forward.1} parent=1 // pred_region
      %s133 = ssub.s32 16, 16
      %134 = vsyncadd [#allocation9], %s133
      %s136 = sshll.u32 [#allocation10], 4
      %s137 = int_to_ptr.vmem [resolvable:$true] %s136
      %139 = dma.hbm_to_vmem [thread:$0]  %s13, 16, %s137, [#allocation9]
    $region29: #{discriminator_forward.1} parent=1 // pred_fallthru
      _
    // Predicated region
    $region30: #{discriminator_forward.1} parent=1 // pred_check
      _
    $region31: #{discriminator_forward.1} parent=1 // pred_check_branch
      %141 = sbr.rel (0) target = $region33
    $region32: #{discriminator_forward.1} parent=1 // pred_region
      %s143 = ssub.s32 16, 16
      %144 = vsyncadd [#allocation12], %s143
      %s146 = sshll.u32 [#allocation11], 4
      %s147 = int_to_ptr.vmem [resolvable:$true] %s146
      %149 = dma.hbm_to_vmem [thread:$0]  %s15, 16, %s147, [#allocation12]
    $region33: #{discriminator_forward.1} parent=1 // pred_fallthru
      _
    // Predicated region
    $region34: #{discriminator_forward.1} parent=1 // pred_check
      _
    $region35: #{discriminator_forward.1} parent=1 // pred_check_branch
      %151 = sbr.rel (0) target = $region37
    $region36: #{discriminator_forward.1} parent=1 // pred_region
      %s153 = ssub.s32 16, 16
      %154 = vsyncadd [#allocation12], %s153
      %s156 = sshll.u32 [#allocation13], 4
      %s157 = int_to_ptr.vmem [resolvable:$true] %s156
      %159 = dma.hbm_to_vmem [thread:$0]  %s17, 16, %s157, [#allocation12]
    $region37: #{discriminator_forward.1} parent=1 // pred_fallthru
      _
    // Predicated region
    $region38: #{discriminator_forward.1} parent=1 // pred_check
      _
    $region39: #{discriminator_forward.1} parent=1 // pred_check_branch
      %161 = sbr.rel (0) target = $region41
    $region40: #{discriminator_forward.1} parent=1 // pred_region
      %s163 = ssub.s32 2048, 2048
      %164 = vsyncadd [#allocation15], %s163
      %s165 = sshll.u32 [#allocation14], 4
      %s166 = int_to_ptr.vmem [resolvable:$true] %s165
      %171 = dma.hbm_to_vmem [thread:$0]  %s19, 2048, %s166, [#allocation15], 128, 128, 8
    $region41: #{discriminator_forward.1} parent=1 // pred_fallthru
      _
    // Predicated region
    $region42: #{discriminator_forward.1} parent=1 // pred_check
      _
    $region43: #{discriminator_forward.1} parent=1 // pred_check_branch
      %173 = sbr.rel (0) target = $region45
    $region44: #{discriminator_forward.1} parent=1 // pred_region
      %s175 = ssub.s32 512, 512
      %176 = vsyncadd [#allocation15], %s175
      %s177 = sshll.u32 [#allocation16], 4
      %s178 = int_to_ptr.vmem [resolvable:$true] %s177
      %183 = dma.hbm_to_vmem [thread:$0]  %s21, 512, %s178, [#allocation15], 128, 128, 8
    $region45: #{discriminator_forward.1} parent=1 // pred_fallthru
      _
    // Predicated region
    $region46: #{discriminator_forward.1} parent=1 // pred_check
      _
    $region47: #{discriminator_forward.1} parent=1 // pred_check_branch
      %185 = sbr.rel (0) target = $region49
    $region48: #{discriminator_forward.1} parent=1 // pred_region
      _
    $region49: #{discriminator_forward.1} parent=1 // pred_fallthru
      _
    // Predicated region
    $region50: #{discriminator_forward.1} parent=1 // pred_check
      _
    $region51: #{discriminator_forward.1} parent=1 // pred_check_branch
      %187 = sbr.rel (0) target = $region53
    $region52: #{discriminator_forward.1} parent=1 // pred_region
      _
    $region53: #{discriminator_forward.1} parent=1 // pred_fallthru
      _
    // Predicated region
    $region54: #{discriminator_forward.1} parent=1 // pred_check
      _
    $region55: #{discriminator_forward.1} parent=1 // pred_check_branch
      %189 = sbr.rel (0) target = $region57
    $region56: #{discriminator_forward.1} parent=1 // pred_region
      %s191 = ssub.s32 16, 16
      %192 = vsyncadd [#allocation18], %s191
      %s194 = sshll.u32 [#allocation17], 4
      %s195 = int_to_ptr.vmem [resolvable:$true] %s194
      %197 = dma.hbm_to_vmem [thread:$0]  %s27, 16, %s195, [#allocation18]
    $region57: #{discriminator_forward.1} parent=1 // pred_fallthru
      _
    // Predicated region
    $region58: #{discriminator_forward.1} parent=1 // pred_check
      _
    $region59: #{discriminator_forward.1} parent=1 // pred_check_branch
      %199 = sbr.rel (0) target = $region61
    $region60: #{discriminator_forward.1} parent=1 // pred_region
      %s201 = ssub.s32 16, 16
      %202 = vsyncadd [#allocation18], %s201
      %s204 = sshll.u32 [#allocation19], 4
      %s205 = int_to_ptr.vmem [resolvable:$true] %s204
      %207 = dma.hbm_to_vmem [thread:$0]  %s29, 16, %s205, [#allocation18]
    $region61: #{discriminator_forward.1} parent=1 // pred_fallthru
      _
    // Predicated region
    $region62: #{discriminator_forward.1} parent=1 // pred_check
      _
    $region63: #{discriminator_forward.1} parent=1 // pred_check_branch
      %209 = sbr.rel (0) target = $region65
    $region64: #{discriminator_forward.1} parent=1 // pred_region
      %s211 = ssub.s32 2048, 2048
      %212 = vsyncadd [#allocation21], %s211
      %s213 = sshll.u32 [#allocation20], 4
      %s214 = int_to_ptr.vmem [resolvable:$true] %s213
      %219 = dma.hbm_to_vmem [thread:$0]  %s31, 2048, %s214, [#allocation21], 128, 128, 8
    $region65: #{discriminator_forward.1} parent=1 // pred_fallthru
      _
    // Predicated region
    $region66: #{discriminator_forward.1} parent=1 // pred_check
      _
    $region67: #{discriminator_forward.1} parent=1 // pred_check_branch
      %221 = sbr.rel (0) target = $region69
    $region68: #{discriminator_forward.1} parent=1 // pred_region
      _
    $region69: #{discriminator_forward.1} parent=1 // pred_fallthru
      _
    // Predicated region
    $region70: #{discriminator_forward.1} parent=1 // pred_check
      _
    $region71: #{discriminator_forward.1} parent=1 // pred_check_branch
      %223 = sbr.rel (0) target = $region73
    $region72: #{discriminator_forward.1} parent=1 // pred_region
      _
    $region73: #{discriminator_forward.1} parent=1 // pred_fallthru
      _
    // Predicated region
    $region74: #{discriminator_forward.1} parent=1 // pred_check
      _
    $region75: #{discriminator_forward.1} parent=1 // pred_check_branch
      %225 = sbr.rel (0) target = $region77
    $region76: #{discriminator_forward.1} parent=1 // pred_region
      _
    $region77: #{discriminator_forward.1} parent=1 // pred_fallthru
      _
    // Predicated region
    $region78: #{discriminator_forward.1} parent=1 // pred_check
      _
    $region79: #{discriminator_forward.1} parent=1 // pred_check_branch
      %227 = sbr.rel (0) target = $region81
    $region80: #{discriminator_forward.1} parent=1 // pred_region
      %s229 = ssub.s32 16, 16
      %230 = vsyncadd [#allocation21], %s229
      %s232 = sshll.u32 [#allocation22], 4
      %s233 = int_to_ptr.vmem [resolvable:$true] %s232
      %235 = dma.hbm_to_vmem [thread:$0]  %s39, 16, %s233, [#allocation21]
    $region81: #{discriminator_forward.1} parent=1 // pred_fallthru
      _
    // Predicated region
    $region82: #{discriminator_forward.1} parent=1 // pred_check
      _
    $region83: #{discriminator_forward.1} parent=1 // pred_check_branch
      %237 = sbr.rel (0) target = $region85
    $region84: #{discriminator_forward.1} parent=1 // pred_region
      %s239 = ssub.s32 16, 16
      %240 = vsyncadd [#allocation24], %s239
      %s242 = sshll.u32 [#allocation23], 4
      %s243 = int_to_ptr.vmem [resolvable:$true] %s242
      %245 = dma.hbm_to_vmem [thread:$0]  %s41, 16, %s243, [#allocation24]
    $region85: #{discriminator_forward.1} parent=1 // pred_fallthru
      _
    // Predicated region
    $region86: #{discriminator_forward.1} parent=1 // pred_check
      _
    $region87: #{discriminator_forward.1} parent=1 // pred_check_branch
      %247 = sbr.rel (0) target = $region89
    $region88: #{discriminator_forward.1} parent=1 // pred_region
      %s249 = ssub.s32 2048, 2048
      %250 = vsyncadd [#allocation24], %s249
      %s251 = sshll.u32 [#allocation25], 4
      %s252 = int_to_ptr.vmem [resolvable:$true] %s251
      %257 = dma.hbm_to_vmem [thread:$0]  %s43, 2048, %s252, [#allocation24], 128, 128, 8
    $region89: #{discriminator_forward.1} parent=1 // pred_fallthru
      _
    // Predicated region
    $region90: #{discriminator_forward.1} parent=1 // pred_check
      _
    $region91: #{discriminator_forward.1} parent=1 // pred_check_branch
      %259 = sbr.rel (0) target = $region93
    $region92: #{discriminator_forward.1} parent=1 // pred_region
      _
    $region93: #{discriminator_forward.1} parent=1 // pred_fallthru
      _
    // Predicated region
    $region94: #{discriminator_forward.1} parent=1 // pred_check
      _
    $region95: #{discriminator_forward.1} parent=1 // pred_check_branch
      %261 = sbr.rel (0) target = $region97
    $region96: #{discriminator_forward.1} parent=1 // pred_region
      _
    $region97: #{discriminator_forward.1} parent=1 // pred_fallthru
      _
    // Predicated region
    $region98: #{discriminator_forward.1} parent=1 // pred_check
      _
    $region99: #{discriminator_forward.1} parent=1 // pred_check_branch
      %263 = sbr.rel (0) target = $region101
    $region100: #{discriminator_forward.1} parent=1 // pred_region
      _
    $region101: #{discriminator_forward.1} parent=1 // pred_fallthru
      _
    // Predicated region
    $region102: #{discriminator_forward.1} parent=1 // pred_check
      _
    $region103: #{discriminator_forward.1} parent=1 // pred_check_branch
      %265 = sbr.rel (0) target = $region105
    $region104: #{discriminator_forward.1} parent=1 // pred_region
      %s267 = ssub.s32 16, 16
      %268 = vsyncadd [#allocation27], %s267
      %s270 = sshll.u32 [#allocation26], 4
      %s271 = int_to_ptr.vmem [resolvable:$true] %s270
      %273 = dma.hbm_to_vmem [thread:$0]  %s51, 16, %s271, [#allocation27]
    $region105: #{discriminator_forward.1} parent=1 // pred_fallthru
      _
    // Predicated region
    $region106: #{discriminator_forward.1} parent=1 // pred_check
      _
    $region107: #{discriminator_forward.1} parent=1 // pred_check_branch
      %275 = sbr.rel (0) target = $region109
    $region108: #{discriminator_forward.1} parent=1 // pred_region
      %s277 = ssub.s32 16, 16
      %278 = vsyncadd [#allocation27], %s277
      %s280 = sshll.u32 [#allocation28], 4
      %s281 = int_to_ptr.vmem [resolvable:$true] %s280
      %283 = dma.hbm_to_vmem [thread:$0]  %s53, 16, %s281, [#allocation27]
    $region109: #{discriminator_forward.1} parent=1 // pred_fallthru
      _
    // Predicated region
    $region110: #{discriminator_forward.1} parent=1 // pred_check
      _
    $region111: #{discriminator_forward.1} parent=1 // pred_check_branch
      %285 = sbr.rel (0) target = $region113
    $region112: #{discriminator_forward.1} parent=1 // pred_region
      _
    $region113: #{discriminator_forward.1} parent=1 // pred_fallthru
      _
    // Predicated region
    $region114: #{discriminator_forward.1} parent=1 // pred_check
      _
    $region115: #{discriminator_forward.1} parent=1 // pred_check_branch
      %287 = sbr.rel (0) target = $region117
    $region116: #{discriminator_forward.1} parent=1 // pred_region
      %s289 = ssub.s32 2048, 2048
      %290 = vsyncadd [#allocation30], %s289
      %s291 = sshll.u32 [#allocation29], 4
      %s292 = int_to_ptr.vmem [resolvable:$true] %s291
      %297 = dma.hbm_to_vmem [thread:$0]  %s57, 2048, %s292, [#allocation30], 128, 128, 8
    $region117: #{discriminator_forward.1} parent=1 // pred_fallthru
      _
    // Predicated region
    $region118: #{discriminator_forward.1} parent=1 // pred_check
      _
    $region119: #{discriminator_forward.1} parent=1 // pred_check_branch
      %299 = sbr.rel (0) target = $region121
    $region120: #{discriminator_forward.1} parent=1 // pred_region
      _
    $region121: #{discriminator_forward.1} parent=1 // pred_fallthru
      _
    // Predicated region
    $region122: #{discriminator_forward.1} parent=1 // pred_check
      _
    $region123: #{discriminator_forward.1} parent=1 // pred_check_branch
      %301 = sbr.rel (0) target = $region125
    $region124: #{discriminator_forward.1} parent=1 // pred_region
      %302 = dma.done [#allocation4], 2048
    $region125: #{discriminator_forward.1} parent=1 // pred_fallthru
      _
    // Predicated region
    $region126: #{discriminator_forward.1} parent=1 // pred_check
      _
    $region127: #{discriminator_forward.1} parent=1 // pred_check_branch
      %304 = sbr.rel (0) target = $region129
    $region128: #{discriminator_forward.1} parent=1 // pred_region
      %305 = dma.done [#allocation6], 8192
    $region129: #{discriminator_forward.1} parent=1 // pred_fallthru
      _
    // Predicated region
    $region130: #{discriminator_forward.1} parent=1 // pred_check
      _
    $region131: #{discriminator_forward.1} parent=1 // pred_check_branch
      %307 = sbr.rel (0) target = $region133
    $region132: #{discriminator_forward.1} parent=1 // pred_region
      %308 = dma.done [#allocation6], 1024
    $region133: #{discriminator_forward.1} parent=1 // pred_fallthru
      _
    // Predicated region
    $region134: #{discriminator_forward.1} parent=1 // pred_check
      _
    $region135: #{discriminator_forward.1} parent=1 // pred_check_branch
      %310 = sbr.rel (0) target = $region137
    $region136: #{discriminator_forward.1} parent=1 // pred_region
      %311 = dma.done [#allocation9], 8192
    $region137: #{discriminator_forward.1} parent=1 // pred_fallthru
      _
    // Predicated region
    $region138: #{discriminator_forward.1} parent=1 // pred_check
      _
    $region139: #{discriminator_forward.1} parent=1 // pred_check_branch
      %313 = sbr.rel (0) target = $region141
    $region140: #{discriminator_forward.1} parent=1 // pred_region
      %314 = dma.done [#allocation9], 16
    $region141: #{discriminator_forward.1} parent=1 // pred_fallthru
      _
    // Predicated region
    $region142: #{discriminator_forward.1} parent=1 // pred_check
      _
    $region143: #{discriminator_forward.1} parent=1 // pred_check_branch
      %316 = sbr.rel (0) target = $region145
    $region144: #{discriminator_forward.1} parent=1 // pred_region
      %317 = dma.done [#allocation12], 16
    $region145: #{discriminator_forward.1} parent=1 // pred_fallthru
      _
    // Predicated region
    $region146: #{discriminator_forward.1} parent=1 // pred_check
      _
    $region147: #{discriminator_forward.1} parent=1 // pred_check_branch
      %319 = sbr.rel (0) target = $region149
    $region148: #{discriminator_forward.1} parent=1 // pred_region
      %320 = dma.done [#allocation12], 16
    $region149: #{discriminator_forward.1} parent=1 // pred_fallthru
      _
    // Predicated region
    $region150: #{discriminator_forward.1} parent=1 // pred_check
      _
    $region151: #{discriminator_forward.1} parent=1 // pred_check_branch
      %322 = sbr.rel (0) target = $region153
    $region152: #{discriminator_forward.1} parent=1 // pred_region
      %323 = dma.done [#allocation15], 2048
    $region153: #{discriminator_forward.1} parent=1 // pred_fallthru
      _
    // Predicated region
    $region154: #{discriminator_forward.1} parent=1 // pred_check
      _
    $region155: #{discriminator_forward.1} parent=1 // pred_check_branch
      %325 = sbr.rel (0) target = $region157
    $region156: #{discriminator_forward.1} parent=1 // pred_region
      %326 = dma.done [#allocation15], 512
    $region157: #{discriminator_forward.1} parent=1 // pred_fallthru
      _
    // Predicated region
    $region158: #{discriminator_forward.1} parent=1 // pred_check
      _
    $region159: #{discriminator_forward.1} parent=1 // pred_check_branch
      %328 = sbr.rel (0) target = $region161
    $region160: #{discriminator_forward.1} parent=1 // pred_region
      %329 = dma.done [#allocation18], 16
    $region161: #{discriminator_forward.1} parent=1 // pred_fallthru
      _
    // Predicated region
    $region162: #{discriminator_forward.1} parent=1 // pred_check
      _
    $region163: #{discriminator_forward.1} parent=1 // pred_check_branch
      %331 = sbr.rel (0) target = $region165
    $region164: #{discriminator_forward.1} parent=1 // pred_region
      %332 = dma.done [#allocation18], 16
    $region165: #{discriminator_forward.1} parent=1 // pred_fallthru
      _
    // Predicated region
    $region166: #{discriminator_forward.1} parent=1 // pred_check
      _
    $region167: #{discriminator_forward.1} parent=1 // pred_check_branch
      %334 = sbr.rel (0) target = $region169
    $region168: #{discriminator_forward.1} parent=1 // pred_region
      %335 = dma.done [#allocation21], 2048
    $region169: #{discriminator_forward.1} parent=1 // pred_fallthru
      _
    // Predicated region
    $region170: #{discriminator_forward.1} parent=1 // pred_check
      _
    $region171: #{discriminator_forward.1} parent=1 // pred_check_branch
      %337 = sbr.rel (0) target = $region173
    $region172: #{discriminator_forward.1} parent=1 // pred_region
      %338 = dma.done [#allocation21], 16
    $region173: #{discriminator_forward.1} parent=1 // pred_fallthru
      _
    // Predicated region
    $region174: #{discriminator_forward.1} parent=1 // pred_check
      _
    $region175: #{discriminator_forward.1} parent=1 // pred_check_branch
      %340 = sbr.rel (0) target = $region177
    $region176: #{discriminator_forward.1} parent=1 // pred_region
      %341 = dma.done [#allocation24], 16
    $region177: #{discriminator_forward.1} parent=1 // pred_fallthru
      _
    // Predicated region
    $region178: #{discriminator_forward.1} parent=1 // pred_check
      _
    $region179: #{discriminator_forward.1} parent=1 // pred_check_branch
      %343 = sbr.rel (0) target = $region181
    $region180: #{discriminator_forward.1} parent=1 // pred_region
      %344 = dma.done [#allocation24], 2048
    $region181: #{discriminator_forward.1} parent=1 // pred_fallthru
      _
    // Predicated region
    $region182: #{discriminator_forward.1} parent=1 // pred_check
      _
    $region183: #{discriminator_forward.1} parent=1 // pred_check_branch
      %346 = sbr.rel (0) target = $region185
    $region184: #{discriminator_forward.1} parent=1 // pred_region
      %347 = dma.done [#allocation27], 16
    $region185: #{discriminator_forward.1} parent=1 // pred_fallthru
      _
    // Predicated region
    $region186: #{discriminator_forward.1} parent=1 // pred_check
      _
    $region187: #{discriminator_forward.1} parent=1 // pred_check_branch
      %349 = sbr.rel (0) target = $region189
    $region188: #{discriminator_forward.1} parent=1 // pred_region
      %350 = dma.done [#allocation27], 16
    $region189: #{discriminator_forward.1} parent=1 // pred_fallthru
      _
    // Predicated region
    $region190: #{discriminator_forward.1} parent=1 // pred_check
      _
    $region191: #{discriminator_forward.1} parent=1 // pred_check_branch
      %352 = sbr.rel (0) target = $region193
    $region192: #{discriminator_forward.1} parent=1 // pred_region
      %353 = dma.done [#allocation30], 2048
    $region193: #{discriminator_forward.1} parent=1 // pred_fallthru
      _
    %v354 = vld [vmem:[%s1] sm:$0xff]
    %v355 = vld [vmem:[%s1 + $0x8] sm:$0xff]
    %v356 = vld [vmem:[%s1 + $0x10] sm:$0xff]
    %v357 = vld [vmem:[%s1 + $0x18] sm:$0xff]
    %v358 = vld [vmem:[%s1 + $0x20] sm:$0xff]
    %v359 = vld [vmem:[%s1 + $0x28] sm:$0xff]
    %v360 = vld [vmem:[%s1 + $0x30] sm:$0xff]
    %v361 = vld [vmem:[%s1 + $0x38] sm:$0xff]
    %v362 = vld [vmem:[%s1 + $0x40] sm:$0xf]
    %v363 = vld [vmem:[#allocation3] sm:$0xff]
    %v364 = vld [vmem:[#allocation3 + $0x8] sm:$0xff]
    %v365 = vld [vmem:[#allocation3 + $0x10] sm:$0xff]
    %v366 = vld [vmem:[#allocation3 + $0x18] sm:$0xff]
    %vm367 = vcmask 556032
    %v369 = vsel %vm367, %v363, 0
    %v372 = vsel %vm367, %v364, 0
    %v375 = vsel %vm367, %v365, 0
    %v378 = vsel %vm367, %v366, 0
    %vm380 = vcmask 1043456
    %v382 = vsel %vm380, %v362, 0
    %384 = vmatprep.subr.mxu0 0.0
    %385 = vmatpush1.msra.mxu0 %v354
    %386 = vmatprep.subr.mxu0 0.0
    %387 = vmatpush1.msra.mxu0 %v355
    %388 = vmatprep.subr.mxu0 0.0
    %389 = vmatpush1.msra.mxu0 %v356
    %390 = vmatprep.subr.mxu0 0.0
    %391 = vmatpush1.msra.mxu0 %v357
    %392 = vmatprep.subr.mxu0 0.0
    %393 = vmatpush1.msra.mxu0 %v358
    %394 = vmatprep.subr.mxu0 0.0
    %395 = vmatpush1.msra.mxu0 %v359
    %396 = vmatprep.subr.mxu0 0.0
    %397 = vmatpush1.msra.mxu0 %v360
    %398 = vmatprep.subr.mxu0 0.0
    %399 = vmatpush1.msra.mxu0 %v361
    %400 = vmatprep.subr.mxu0 0.0
    %401 = vmatpush1.msra.mxu0 %v382
    %402 = vmatprep.subr.mxu0 0.0
    %403 = vmatpush1.msra.mxu0 0.0
    %404 = vmatprep.subr.mxu0 0.0
    %405 = vmatpush1.msra.mxu0 0.0
    %406 = vmatprep.subr.mxu0 0.0
    %407 = vmatpush1.msra.mxu0 0.0
    %408 = vmatprep.subr.mxu0 0.0
    %409 = vmatpush1.msra.mxu0 0.0
    %410 = vmatprep.subr.mxu0 0.0
    %411 = vmatpush1.msra.mxu0 0.0
    %412 = vmatprep.subr.mxu0 0.0
    %413 = vmatpush1.msra.mxu0 0.0
    %414 = vmatprep.subr.mxu0 0.0
    %415 = vmatpush1.msra.mxu0 0.0
    %416 = vmatprep.subr.mxu0 0.0
    %417 = vmatpush1.msra.mxu0 0.0
    %418 = vmatprep.subr.mxu0 0.0
    %419 = vmatpush1.msra.mxu0 0.0
    %420 = vmatprep.subr.mxu0 0.0
    %421 = vmatpush1.msra.mxu0 0.0
    %422 = vmatprep.subr.mxu0 0.0
    %423 = vmatpush1.msra.mxu0 0.0
    %424 = vmatprep.subr.mxu0 0.0
    %425 = vmatpush1.msra.mxu0 0.0
    %426 = vmatprep.subr.mxu0 0.0
    %427 = vmatpush1.msra.mxu0 0.0
    %428 = vmatprep.subr.mxu0 0.0
    %429 = vmatpush1.msra.mxu0 0.0
    %430 = vmatprep.subr.mxu0 0.0
    %431 = vmatpush1.msra.mxu0 0.0
    %432 = vmatprep.subr.mxu0 0.0
    %433 = vmatpush1.msra.mxu0 0.0
    %434 = vmatprep.subr.mxu0 0.0
    %435 = vmatpush1.msra.mxu0 0.0
    %436 = vmatprep.subr.mxu0 0.0
    %437 = vmatpush1.msra.mxu0 0.0
    %438 = vmatprep.subr.mxu0 0.0
    %439 = vmatpush1.msra.mxu0 0.0
    %440 = vmatprep.subr.mxu0 0.0
    %441 = vmatpush1.msra.mxu0 0.0
    %442 = vmatprep.subr.mxu0 0.0
    %443 = vmatpush1.msra.mxu0 0.0
    %444 = vmatprep.subr.mxu0 0.0
    %445 = vmatpush1.msra.mxu0 0.0
    %446 = vmatprep.subr.mxu0 0.0
    %447 = vmatpush1.msra.mxu0 0.0
    %448 = vmatprep.mubr.f32.mxu0 0.0
    %449 = vmatmul.mubr.f32.gmra.mrb[0].mxu0 %v369
    %v450 = vpop.f32.mrb[0].mxu0
    %v451 = vadd.f32 0.0, %v450
    %v452 = vpop.f32.mrb[0].mxu0
    %453 = vmatprep.mubr.f32.mxu0 0.0
    %454 = vmatmul.mubr.f32.gmra.mrb[0].mxu0 %v372
    %v455 = vpop.f32.mrb[0].mxu0
    %v456 = vadd.f32 0.0, %v455
    %v457 = vpop.f32.mrb[0].mxu0
    %458 = vmatprep.mubr.f32.mxu0 0.0
    %459 = vmatmul.mubr.f32.gmra.mrb[0].mxu0 %v375
    %v460 = vpop.f32.mrb[0].mxu0
    %v461 = vadd.f32 0.0, %v460
    %v462 = vpop.f32.mrb[0].mxu0
    %463 = vmatprep.mubr.f32.mxu0 0.0
    %464 = vmatmul.mubr.f32.gmra.mrb[0].mxu0 %v378
    %v465 = vpop.f32.mrb[0].mxu0
    %v466 = vadd.f32 0.0, %v465
    %v467 = vpop.f32.mrb[0].mxu0
    %468 = vdwg.mxu0
    %v469 = vld [vmem:[#allocation5] sm:$0xff]
    %v470 = vld [vmem:[#allocation5 + $0x8] sm:$0xff]
    %v471 = vld [vmem:[#allocation5 + $0x10] sm:$0xff]
    %v472 = vld [vmem:[#allocation5 + $0x18] sm:$0xff]
    %v473 = vld [vmem:[#allocation5 + $0x20] sm:$0xff]
    %v474 = vld [vmem:[#allocation5 + $0x28] sm:$0xff]
    %v475 = vld [vmem:[#allocation5 + $0x30] sm:$0xff]
    %v476 = vld [vmem:[#allocation5 + $0x38] sm:$0xff]
    %v477 = vld [vmem:[#allocation5 + $0x40] sm:$0xff]
    %v478 = vld [vmem:[#allocation5 + $0x48] sm:$0xff]
    %v479 = vld [vmem:[#allocation5 + $0x50] sm:$0xff]
    %v480 = vld [vmem:[#allocation5 + $0x58] sm:$0xff]
    %v481 = vld [vmem:[#allocation5 + $0x60] sm:$0xff]
    %v482 = vld [vmem:[#allocation5 + $0x68] sm:$0xff]
    %v483 = vld [vmem:[#allocation5 + $0x70] sm:$0xff]
    %v484 = vld [vmem:[#allocation5 + $0x78] sm:$0xff]
    %s485 = scalar_lea.vmem [#allocation3], 32
    %v486 = vld [vmem:[%s485] sm:$0xff]
    %v487 = vld [vmem:[%s485 + $0x8] sm:$0xff]
    %v488 = vld [vmem:[%s485 + $0x10] sm:$0xff]
    %v489 = vld [vmem:[%s485 + $0x18] sm:$0xff]
    %v491 = vsel %vm367, %v486, 0
    %v494 = vsel %vm367, %v487, 0
    %v497 = vsel %vm367, %v488, 0
    %v500 = vsel %vm367, %v489, 0
    %502 = vmatprep.subr.mxu0 0.0
    %503 = vmatpush1.msra.mxu0 %v354
    %504 = vmatprep.subr.mxu0 0.0
    %505 = vmatpush1.msra.mxu0 %v355
    %506 = vmatprep.subr.mxu0 0.0
    %507 = vmatpush1.msra.mxu0 %v356
    %508 = vmatprep.subr.mxu0 0.0
    %509 = vmatpush1.msra.mxu0 %v357
    %510 = vmatprep.subr.mxu0 0.0
    %511 = vmatpush1.msra.mxu0 %v358
    %512 = vmatprep.subr.mxu0 0.0
    %513 = vmatpush1.msra.mxu0 %v359
    %514 = vmatprep.subr.mxu0 0.0
    %515 = vmatpush1.msra.mxu0 %v360
    %516 = vmatprep.subr.mxu0 0.0
    %517 = vmatpush1.msra.mxu0 %v361
    %518 = vmatprep.subr.mxu0 0.0
    %519 = vmatpush1.msra.mxu0 %v382
    %520 = vmatprep.subr.mxu0 0.0
    %521 = vmatpush1.msra.mxu0 0.0
    %522 = vmatprep.subr.mxu0 0.0
    %523 = vmatpush1.msra.mxu0 0.0
    %524 = vmatprep.subr.mxu0 0.0
    %525 = vmatpush1.msra.mxu0 0.0
    %526 = vmatprep.subr.mxu0 0.0
    %527 = vmatpush1.msra.mxu0 0.0
    %528 = vmatprep.subr.mxu0 0.0
    %529 = vmatpush1.msra.mxu0 0.0
    %530 = vmatprep.subr.mxu0 0.0
    %531 = vmatpush1.msra.mxu0 0.0
    %532 = vmatprep.subr.mxu0 0.0
    %533 = vmatpush1.msra.mxu0 0.0
    %534 = vmatprep.subr.mxu0 0.0
    %535 = vmatpush1.msra.mxu0 0.0
    %536 = vmatprep.subr.mxu0 0.0
    %537 = vmatpush1.msra.mxu0 0.0
    %538 = vmatprep.subr.mxu0 0.0
    %539 = vmatpush1.msra.mxu0 0.0
    %540 = vmatprep.subr.mxu0 0.0
    %541 = vmatpush1.msra.mxu0 0.0
    %542 = vmatprep.subr.mxu0 0.0
    %543 = vmatpush1.msra.mxu0 0.0
    %544 = vmatprep.subr.mxu0 0.0
    %545 = vmatpush1.msra.mxu0 0.0
    %546 = vmatprep.subr.mxu0 0.0
    %547 = vmatpush1.msra.mxu0 0.0
    %548 = vmatprep.subr.mxu0 0.0
    %549 = vmatpush1.msra.mxu0 0.0
    %550 = vmatprep.subr.mxu0 0.0
    %551 = vmatpush1.msra.mxu0 0.0
    %552 = vmatprep.subr.mxu0 0.0
    %553 = vmatpush1.msra.mxu0 0.0
    %554 = vmatprep.subr.mxu0 0.0
    %555 = vmatpush1.msra.mxu0 0.0
    %556 = vmatprep.subr.mxu0 0.0
    %557 = vmatpush1.msra.mxu0 0.0
    %558 = vmatprep.subr.mxu0 0.0
    %559 = vmatpush1.msra.mxu0 0.0
    %560 = vmatprep.subr.mxu0 0.0
    %561 = vmatpush1.msra.mxu0 0.0
    %562 = vmatprep.subr.mxu0 0.0
    %563 = vmatpush1.msra.mxu0 0.0
    %564 = vmatprep.subr.mxu0 0.0
    %565 = vmatpush1.msra.mxu0 0.0
    %566 = vmatprep.mubr.f32.mxu0 0.0
    %567 = vmatmul.mubr.f32.gmra.mrb[0].mxu0 %v491
    %v568 = vpop.f32.mrb[0].mxu0
    %v569 = vadd.f32 0.0, %v568
    %v570 = vpop.f32.mrb[0].mxu0
    %571 = vmatprep.mubr.f32.mxu0 0.0
    %572 = vmatmul.mubr.f32.gmra.mrb[0].mxu0 %v494
    %v573 = vpop.f32.mrb[0].mxu0
    %v574 = vadd.f32 0.0, %v573
    %v575 = vpop.f32.mrb[0].mxu0
    %576 = vmatprep.mubr.f32.mxu0 0.0
    %577 = vmatmul.mubr.f32.gmra.mrb[0].mxu0 %v497
    %v578 = vpop.f32.mrb[0].mxu0
    %v579 = vadd.f32 0.0, %v578
    %v580 = vpop.f32.mrb[0].mxu0
    %581 = vmatprep.mubr.f32.mxu0 0.0
    %582 = vmatmul.mubr.f32.gmra.mrb[0].mxu0 %v500
    %v583 = vpop.f32.mrb[0].mxu0
    %v584 = vadd.f32 0.0, %v583
    %v585 = vpop.f32.mrb[0].mxu0
    %586 = vdwg.mxu0
    %s587 = scalar_lea.vmem [#allocation5], 128
    %v588 = vld [vmem:[%s587] sm:$0xff]
    %v589 = vld [vmem:[%s587 + $0x8] sm:$0xff]
    %v590 = vld [vmem:[%s587 + $0x10] sm:$0xff]
    %v591 = vld [vmem:[%s587 + $0x18] sm:$0xff]
    %v592 = vld [vmem:[%s587 + $0x20] sm:$0xff]
    %v593 = vld [vmem:[%s587 + $0x28] sm:$0xff]
    %v594 = vld [vmem:[%s587 + $0x30] sm:$0xff]
    %v595 = vld [vmem:[%s587 + $0x38] sm:$0xff]
    %v596 = vld [vmem:[%s587 + $0x40] sm:$0xff]
    %v597 = vld [vmem:[%s587 + $0x48] sm:$0xff]
    %v598 = vld [vmem:[%s587 + $0x50] sm:$0xff]
    %v599 = vld [vmem:[%s587 + $0x58] sm:$0xff]
    %v600 = vld [vmem:[%s587 + $0x60] sm:$0xff]
    %v601 = vld [vmem:[%s587 + $0x68] sm:$0xff]
    %v602 = vld [vmem:[%s587 + $0x70] sm:$0xff]
    %v603 = vld [vmem:[%s587 + $0x78] sm:$0xff]
    %604 = vmatprep.subr.mxu0 0.0
    %605 = vmatpush1.msra.mxu0 %v588
    %606 = vmatprep.subr.mxu0 0.0
    %607 = vmatpush1.msra.mxu0 %v589
    %608 = vmatprep.subr.mxu0 0.0
    %609 = vmatpush1.msra.mxu0 %v590
    %610 = vmatprep.subr.mxu0 0.0
    %611 = vmatpush1.msra.mxu0 %v591
    %612 = vmatprep.subr.mxu0 0.0
    %613 = vmatpush1.msra.mxu0 %v592
    %614 = vmatprep.subr.mxu0 0.0
    %615 = vmatpush1.msra.mxu0 %v593
    %616 = vmatprep.subr.mxu0 0.0
    %617 = vmatpush1.msra.mxu0 %v594
    %618 = vmatprep.subr.mxu0 0.0
    %619 = vmatpush1.msra.mxu0 %v595
    %620 = vmatprep.subr.mxu0 0.0
    %621 = vmatpush1.msra.mxu0 %v596
    %622 = vmatprep.subr.mxu0 0.0
    %623 = vmatpush1.msra.mxu0 %v597
    %624 = vmatprep.subr.mxu0 0.0
    %625 = vmatpush1.msra.mxu0 %v598
    %626 = vmatprep.subr.mxu0 0.0
    %627 = vmatpush1.msra.mxu0 %v599
    %628 = vmatprep.subr.mxu0 0.0
    %629 = vmatpush1.msra.mxu0 %v600
    %630 = vmatprep.subr.mxu0 0.0
    %631 = vmatpush1.msra.mxu0 %v601
    %632 = vmatprep.subr.mxu0 0.0
    %633 = vmatpush1.msra.mxu0 %v602
    %634 = vmatprep.subr.mxu0 0.0
    %635 = vmatpush1.msra.mxu0 %v603
    %636 = vmatprep.subr.mxu0 0.0
    %637 = vmatpush1.msra.mxu0 0.0
    %638 = vmatprep.subr.mxu0 0.0
    %639 = vmatpush1.msra.mxu0 0.0
    %640 = vmatprep.subr.mxu0 0.0
    %641 = vmatpush1.msra.mxu0 0.0
    %642 = vmatprep.subr.mxu0 0.0
    %643 = vmatpush1.msra.mxu0 0.0
    %644 = vmatprep.subr.mxu0 0.0
    %645 = vmatpush1.msra.mxu0 0.0
    %646 = vmatprep.subr.mxu0 0.0
    %647 = vmatpush1.msra.mxu0 0.0
    %648 = vmatprep.subr.mxu0 0.0
    %649 = vmatpush1.msra.mxu0 0.0
    %650 = vmatprep.subr.mxu0 0.0
    %651 = vmatpush1.msra.mxu0 0.0
    %652 = vmatprep.subr.mxu0 0.0
    %653 = vmatpush1.msra.mxu0 0.0
    %654 = vmatprep.subr.mxu0 0.0
    %655 = vmatpush1.msra.mxu0 0.0
    %656 = vmatprep.subr.mxu0 0.0
    %657 = vmatpush1.msra.mxu0 0.0
    %658 = vmatprep.subr.mxu0 0.0
    %659 = vmatpush1.msra.mxu0 0.0
    %660 = vmatprep.subr.mxu0 0.0
    %661 = vmatpush1.msra.mxu0 0.0
    %662 = vmatprep.subr.mxu0 0.0
    %663 = vmatpush1.msra.mxu0 0.0
    %664 = vmatprep.subr.mxu0 0.0
    %665 = vmatpush1.msra.mxu0 0.0
    %666 = vmatprep.subr.mxu0 0.0
    %667 = vmatpush1.msra.mxu0 0.0
    %668 = vmatprep.mubr.f32.mxu0 0.0
    %669 = vmatmul.mubr.f32.gmra.mrb[0].mxu0 %v569
    %v670 = vpop.f32.mrb[0].mxu0
    %v671 = vadd.f32 0.0, %v670
    %v672 = vpop.f32.mrb[0].mxu0
    %673 = vmatprep.mubr.f32.mxu0 0.0
    %674 = vmatmul.mubr.f32.gmra.mrb[0].mxu0 %v574
    %v675 = vpop.f32.mrb[0].mxu0
    %v676 = vadd.f32 0.0, %v675
    %v677 = vpop.f32.mrb[0].mxu0
    %678 = vmatprep.mubr.f32.mxu0 0.0
    %679 = vmatmul.mubr.f32.gmra.mrb[0].mxu0 %v579
    %v680 = vpop.f32.mrb[0].mxu0
    %v681 = vadd.f32 0.0, %v680
    %v682 = vpop.f32.mrb[0].mxu0
    %683 = vmatprep.mubr.f32.mxu0 0.0
    %684 = vmatmul.mubr.f32.gmra.mrb[0].mxu0 %v584
    %v685 = vpop.f32.mrb[0].mxu0
    %v686 = vadd.f32 0.0, %v685
    %v687 = vpop.f32.mrb[0].mxu0
    %688 = vdwg.mxu0
    %689 = vmatprep.subr.mxu0 0.0
    %690 = vmatpush1.msra.mxu0 %v469
    %691 = vmatprep.subr.mxu0 0.0
    %692 = vmatpush1.msra.mxu0 %v470
    %693 = vmatprep.subr.mxu0 0.0
    %694 = vmatpush1.msra.mxu0 %v471
    %695 = vmatprep.subr.mxu0 0.0
    %696 = vmatpush1.msra.mxu0 %v472
    %697 = vmatprep.subr.mxu0 0.0
    %698 = vmatpush1.msra.mxu0 %v473
    %699 = vmatprep.subr.mxu0 0.0
    %700 = vmatpush1.msra.mxu0 %v474
    %701 = vmatprep.subr.mxu0 0.0
    %702 = vmatpush1.msra.mxu0 %v475
    %703 = vmatprep.subr.mxu0 0.0
    %704 = vmatpush1.msra.mxu0 %v476
    %705 = vmatprep.subr.mxu0 0.0
    %706 = vmatpush1.msra.mxu0 %v477
    %707 = vmatprep.subr.mxu0 0.0
    %708 = vmatpush1.msra.mxu0 %v478
    %709 = vmatprep.subr.mxu0 0.0
    %710 = vmatpush1.msra.mxu0 %v479
    %711 = vmatprep.subr.mxu0 0.0
    %712 = vmatpush1.msra.mxu0 %v480
    %713 = vmatprep.subr.mxu0 0.0
    %714 = vmatpush1.msra.mxu0 %v481
    %715 = vmatprep.subr.mxu0 0.0
    %716 = vmatpush1.msra.mxu0 %v482
    %717 = vmatprep.subr.mxu0 0.0
    %718 = vmatpush1.msra.mxu0 %v483
    %719 = vmatprep.subr.mxu0 0.0
    %720 = vmatpush1.msra.mxu0 %v484
    %721 = vmatprep.subr.mxu0 0.0
    %722 = vmatpush1.msra.mxu0 0.0
    %723 = vmatprep.subr.mxu0 0.0
    %724 = vmatpush1.msra.mxu0 0.0
    %725 = vmatprep.subr.mxu0 0.0
    %726 = vmatpush1.msra.mxu0 0.0
    %727 = vmatprep.subr.mxu0 0.0
    %728 = vmatpush1.msra.mxu0 0.0
    %729 = vmatprep.subr.mxu0 0.0
    %730 = vmatpush1.msra.mxu0 0.0
    %731 = vmatprep.subr.mxu0 0.0
    %732 = vmatpush1.msra.mxu0 0.0
    %733 = vmatprep.subr.mxu0 0.0
    %734 = vmatpush1.msra.mxu0 0.0
    %735 = vmatprep.subr.mxu0 0.0
    %736 = vmatpush1.msra.mxu0 0.0
    %737 = vmatprep.subr.mxu0 0.0
    %738 = vmatpush1.msra.mxu0 0.0
    %739 = vmatprep.subr.mxu0 0.0
    %740 = vmatpush1.msra.mxu0 0.0
    %741 = vmatprep.subr.mxu0 0.0
    %742 = vmatpush1.msra.mxu0 0.0
    %743 = vmatprep.subr.mxu0 0.0
    %744 = vmatpush1.msra.mxu0 0.0
    %745 = vmatprep.subr.mxu0 0.0
    %746 = vmatpush1.msra.mxu0 0.0
    %747 = vmatprep.subr.mxu0 0.0
    %748 = vmatpush1.msra.mxu0 0.0
    %749 = vmatprep.subr.mxu0 0.0
    %750 = vmatpush1.msra.mxu0 0.0
    %751 = vmatprep.subr.mxu0 0.0
    %752 = vmatpush1.msra.mxu0 0.0
    %753 = vmatprep.mubr.f32.mxu0 0.0
    %754 = vmatmul.mubr.f32.gmra.mrb[0].mxu0 %v451
    %v755 = vpop.f32.mrb[0].mxu0
    %v756 = vadd.f32 %v671, %v755
    %v757 = vpop.f32.mrb[0].mxu0
    %758 = vmatprep.mubr.f32.mxu0 0.0
    %759 = vmatmul.mubr.f32.gmra.mrb[0].mxu0 %v456
    %v760 = vpop.f32.mrb[0].mxu0
    %v761 = vadd.f32 %v676, %v760
    %v762 = vpop.f32.mrb[0].mxu0
    %763 = vmatprep.mubr.f32.mxu0 0.0
    %764 = vmatmul.mubr.f32.gmra.mrb[0].mxu0 %v461
    %v765 = vpop.f32.mrb[0].mxu0
    %v766 = vadd.f32 %v681, %v765
    %v767 = vpop.f32.mrb[0].mxu0
    %768 = vmatprep.mubr.f32.mxu0 0.0
    %769 = vmatmul.mubr.f32.gmra.mrb[0].mxu0 %v466
    %v770 = vpop.f32.mrb[0].mxu0
    %v771 = vadd.f32 %v686, %v770
    %v772 = vpop.f32.mrb[0].mxu0
    %773 = vdwg.mxu0
    %s774 = scalar_lea.vmem [#allocation3], 64
    %v775 = vld [vmem:[%s774] sm:$0xff]
    %v776 = vld [vmem:[%s774 + $0x8] sm:$0xff]
    %v777 = vld [vmem:[%s774 + $0x10] sm:$0xff]
    %v778 = vld [vmem:[%s774 + $0x18] sm:$0xff]
    %v780 = vsel %vm367, %v775, 0
    %v783 = vsel %vm367, %v776, 0
    %v786 = vsel %vm367, %v777, 0
    %v789 = vsel %vm367, %v778, 0
    %791 = vmatprep.subr.mxu0 0.0
    %792 = vmatpush1.msra.mxu0 %v354
    %793 = vmatprep.subr.mxu0 0.0
    %794 = vmatpush1.msra.mxu0 %v355
    %795 = vmatprep.subr.mxu0 0.0
    %796 = vmatpush1.msra.mxu0 %v356
    %797 = vmatprep.subr.mxu0 0.0
    %798 = vmatpush1.msra.mxu0 %v357
    %799 = vmatprep.subr.mxu0 0.0
    %800 = vmatpush1.msra.mxu0 %v358
    %801 = vmatprep.subr.mxu0 0.0
    %802 = vmatpush1.msra.mxu0 %v359
    %803 = vmatprep.subr.mxu0 0.0
    %804 = vmatpush1.msra.mxu0 %v360
    %805 = vmatprep.subr.mxu0 0.0
    %806 = vmatpush1.msra.mxu0 %v361
    %807 = vmatprep.subr.mxu0 0.0
    %808 = vmatpush1.msra.mxu0 %v382
    %809 = vmatprep.subr.mxu0 0.0
    %810 = vmatpush1.msra.mxu0 0.0
    %811 = vmatprep.subr.mxu0 0.0
    %812 = vmatpush1.msra.mxu0 0.0
    %813 = vmatprep.subr.mxu0 0.0
    %814 = vmatpush1.msra.mxu0 0.0
    %815 = vmatprep.subr.mxu0 0.0
    %816 = vmatpush1.msra.mxu0 0.0
    %817 = vmatprep.subr.mxu0 0.0
    %818 = vmatpush1.msra.mxu0 0.0
    %819 = vmatprep.subr.mxu0 0.0
    %820 = vmatpush1.msra.mxu0 0.0
    %821 = vmatprep.subr.mxu0 0.0
    %822 = vmatpush1.msra.mxu0 0.0
    %823 = vmatprep.subr.mxu0 0.0
    %824 = vmatpush1.msra.mxu0 0.0
    %825 = vmatprep.subr.mxu0 0.0
    %826 = vmatpush1.msra.mxu0 0.0
    %827 = vmatprep.subr.mxu0 0.0
    %828 = vmatpush1.msra.mxu0 0.0
    %829 = vmatprep.subr.mxu0 0.0
    %830 = vmatpush1.msra.mxu0 0.0
    %831 = vmatprep.subr.mxu0 0.0
    %832 = vmatpush1.msra.mxu0 0.0
    %833 = vmatprep.subr.mxu0 0.0
    %834 = vmatpush1.msra.mxu0 0.0
    %835 = vmatprep.subr.mxu0 0.0
    %836 = vmatpush1.msra.mxu0 0.0
    %837 = vmatprep.subr.mxu0 0.0
    %838 = vmatpush1.msra.mxu0 0.0
    %839 = vmatprep.subr.mxu0 0.0
    %840 = vmatpush1.msra.mxu0 0.0
    %841 = vmatprep.subr.mxu0 0.0
    %842 = vmatpush1.msra.mxu0 0.0
    %843 = vmatprep.subr.mxu0 0.0
    %844 = vmatpush1.msra.mxu0 0.0
    %845 = vmatprep.subr.mxu0 0.0
    %846 = vmatpush1.msra.mxu0 0.0
    %847 = vmatprep.subr.mxu0 0.0
    %848 = vmatpush1.msra.mxu0 0.0
    %849 = vmatprep.subr.mxu0 0.0
    %850 = vmatpush1.msra.mxu0 0.0
    %851 = vmatprep.subr.mxu0 0.0
    %852 = vmatpush1.msra.mxu0 0.0
    %853 = vmatprep.subr.mxu0 0.0
    %854 = vmatpush1.msra.mxu0 0.0
    %855 = vmatprep.mubr.f32.mxu0 0.0
    %856 = vmatmul.mubr.f32.gmra.mrb[0].mxu0 %v780
    %v857 = vpop.f32.mrb[0].mxu0
    %v858 = vadd.f32 0.0, %v857
    %v859 = vpop.f32.mrb[0].mxu0
    %860 = vmatprep.mubr.f32.mxu0 0.0
    %861 = vmatmul.mubr.f32.gmra.mrb[0].mxu0 %v783
    %v862 = vpop.f32.mrb[0].mxu0
    %v863 = vadd.f32 0.0, %v862
    %v864 = vpop.f32.mrb[0].mxu0
    %865 = vmatprep.mubr.f32.mxu0 0.0
    %866 = vmatmul.mubr.f32.gmra.mrb[0].mxu0 %v786
    %v867 = vpop.f32.mrb[0].mxu0
    %v868 = vadd.f32 0.0, %v867
    %v869 = vpop.f32.mrb[0].mxu0
    %870 = vmatprep.mubr.f32.mxu0 0.0
    %871 = vmatmul.mubr.f32.gmra.mrb[0].mxu0 %v789
    %v872 = vpop.f32.mrb[0].mxu0
    %v873 = vadd.f32 0.0, %v872
    %v874 = vpop.f32.mrb[0].mxu0
    %875 = vdwg.mxu0
    %s876 = scalar_lea.vmem [#allocation5], 256
    %v877 = vld [vmem:[%s876] sm:$0xff]
    %v878 = vld [vmem:[%s876 + $0x8] sm:$0xff]
    %v879 = vld [vmem:[%s876 + $0x10] sm:$0xff]
    %v880 = vld [vmem:[%s876 + $0x18] sm:$0xff]
    %v881 = vld [vmem:[%s876 + $0x20] sm:$0xff]
    %v882 = vld [vmem:[%s876 + $0x28] sm:$0xff]
    %v883 = vld [vmem:[%s876 + $0x30] sm:$0xff]
    %v884 = vld [vmem:[%s876 + $0x38] sm:$0xff]
    %v885 = vld [vmem:[%s876 + $0x40] sm:$0xff]
    %v886 = vld [vmem:[%s876 + $0x48] sm:$0xff]
    %v887 = vld [vmem:[%s876 + $0x50] sm:$0xff]
    %v888 = vld [vmem:[%s876 + $0x58] sm:$0xff]
    %v889 = vld [vmem:[%s876 + $0x60] sm:$0xff]
    %v890 = vld [vmem:[%s876 + $0x68] sm:$0xff]
    %v891 = vld [vmem:[%s876 + $0x70] sm:$0xff]
    %v892 = vld [vmem:[%s876 + $0x78] sm:$0xff]
    %893 = vmatprep.subr.mxu0 0.0
    %894 = vmatpush1.msra.mxu0 %v877
    %895 = vmatprep.subr.mxu0 0.0
    %896 = vmatpush1.msra.mxu0 %v878
    %897 = vmatprep.subr.mxu0 0.0
    %898 = vmatpush1.msra.mxu0 %v879
    %899 = vmatprep.subr.mxu0 0.0
    %900 = vmatpush1.msra.mxu0 %v880
    %901 = vmatprep.subr.mxu0 0.0
    %902 = vmatpush1.msra.mxu0 %v881
    %903 = vmatprep.subr.mxu0 0.0
    %904 = vmatpush1.msra.mxu0 %v882
    %905 = vmatprep.subr.mxu0 0.0
    %906 = vmatpush1.msra.mxu0 %v883
    %907 = vmatprep.subr.mxu0 0.0
    %908 = vmatpush1.msra.mxu0 %v884
    %909 = vmatprep.subr.mxu0 0.0
    %910 = vmatpush1.msra.mxu0 %v885
    %911 = vmatprep.subr.mxu0 0.0
    %912 = vmatpush1.msra.mxu0 %v886
    %913 = vmatprep.subr.mxu0 0.0
    %914 = vmatpush1.msra.mxu0 %v887
    %915 = vmatprep.subr.mxu0 0.0
    %916 = vmatpush1.msra.mxu0 %v888
    %917 = vmatprep.subr.mxu0 0.0
    %918 = vmatpush1.msra.mxu0 %v889
    %919 = vmatprep.subr.mxu0 0.0
    %920 = vmatpush1.msra.mxu0 %v890
    %921 = vmatprep.subr.mxu0 0.0
    %922 = vmatpush1.msra.mxu0 %v891
    %923 = vmatprep.subr.mxu0 0.0
    %924 = vmatpush1.msra.mxu0 %v892
    %925 = vmatprep.subr.mxu0 0.0
    %926 = vmatpush1.msra.mxu0 0.0
    %927 = vmatprep.subr.mxu0 0.0
    %928 = vmatpush1.msra.mxu0 0.0
    %929 = vmatprep.subr.mxu0 0.0
    %930 = vmatpush1.msra.mxu0 0.0
    %931 = vmatprep.subr.mxu0 0.0
    %932 = vmatpush1.msra.mxu0 0.0
    %933 = vmatprep.subr.mxu0 0.0
    %934 = vmatpush1.msra.mxu0 0.0
    %935 = vmatprep.subr.mxu0 0.0
    %936 = vmatpush1.msra.mxu0 0.0
    %937 = vmatprep.subr.mxu0 0.0
    %938 = vmatpush1.msra.mxu0 0.0
    %939 = vmatprep.subr.mxu0 0.0
    %940 = vmatpush1.msra.mxu0 0.0
    %941 = vmatprep.subr.mxu0 0.0
    %942 = vmatpush1.msra.mxu0 0.0
    %943 = vmatprep.subr.mxu0 0.0
    %944 = vmatpush1.msra.mxu0 0.0
    %945 = vmatprep.subr.mxu0 0.0
    %946 = vmatpush1.msra.mxu0 0.0
    %947 = vmatprep.subr.mxu0 0.0
    %948 = vmatpush1.msra.mxu0 0.0
    %949 = vmatprep.subr.mxu0 0.0
    %950 = vmatpush1.msra.mxu0 0.0
    %951 = vmatprep.subr.mxu0 0.0
    %952 = vmatpush1.msra.mxu0 0.0
    %953 = vmatprep.subr.mxu0 0.0
    %954 = vmatpush1.msra.mxu0 0.0
    %955 = vmatprep.subr.mxu0 0.0
    %956 = vmatpush1.msra.mxu0 0.0
    %957 = vmatprep.mubr.f32.mxu0 0.0
    %958 = vmatmul.mubr.f32.gmra.mrb[0].mxu0 %v858
    %v959 = vpop.f32.mrb[0].mxu0
    %v960 = vadd.f32 0.0, %v959
    %v961 = vpop.f32.mrb[0].mxu0
    %962 = vmatprep.mubr.f32.mxu0 0.0
    %963 = vmatmul.mubr.f32.gmra.mrb[0].mxu0 %v863
    %v964 = vpop.f32.mrb[0].mxu0
    %v965 = vadd.f32 0.0, %v964
    %v966 = vpop.f32.mrb[0].mxu0
    %967 = vmatprep.mubr.f32.mxu0 0.0
    %968 = vmatmul.mubr.f32.gmra.mrb[0].mxu0 %v868
    %v969 = vpop.f32.mrb[0].mxu0
    %v970 = vadd.f32 0.0, %v969
    %v971 = vpop.f32.mrb[0].mxu0
    %972 = vmatprep.mubr.f32.mxu0 0.0
    %973 = vmatmul.mubr.f32.gmra.mrb[0].mxu0 %v873
    %v974 = vpop.f32.mrb[0].mxu0
    %v975 = vadd.f32 0.0, %v974
    %v976 = vpop.f32.mrb[0].mxu0
    %977 = vdwg.mxu0
    %v978 = vadd.f32 %v756, %v960
    %v979 = vadd.f32 %v761, %v965
    %v980 = vadd.f32 %v766, %v970
    %v981 = vadd.f32 %v771, %v975
    %s982 = scalar_lea.vmem [#allocation3], 96
    %v983 = vld [vmem:[%s982] sm:$0xff]
    %v984 = vld [vmem:[%s982 + $0x8] sm:$0xff]
    %v985 = vld [vmem:[%s982 + $0x10] sm:$0xff]
    %v986 = vld [vmem:[%s982 + $0x18] sm:$0xff]
    %v988 = vsel %vm367, %v983, 0
    %v991 = vsel %vm367, %v984, 0
    %v994 = vsel %vm367, %v985, 0
    %v997 = vsel %vm367, %v986, 0
    %999 = vmatprep.subr.mxu0 0.0
    %1000 = vmatpush1.msra.mxu0 %v354
    %1001 = vmatprep.subr.mxu0 0.0
    %1002 = vmatpush1.msra.mxu0 %v355
    %1003 = vmatprep.subr.mxu0 0.0
    %1004 = vmatpush1.msra.mxu0 %v356
    %1005 = vmatprep.subr.mxu0 0.0
    %1006 = vmatpush1.msra.mxu0 %v357
    %1007 = vmatprep.subr.mxu0 0.0
    %1008 = vmatpush1.msra.mxu0 %v358
    %1009 = vmatprep.subr.mxu0 0.0
    %1010 = vmatpush1.msra.mxu0 %v359
    %1011 = vmatprep.subr.mxu0 0.0
    %1012 = vmatpush1.msra.mxu0 %v360
    %1013 = vmatprep.subr.mxu0 0.0
    %1014 = vmatpush1.msra.mxu0 %v361
    %1015 = vmatprep.subr.mxu0 0.0
    %1016 = vmatpush1.msra.mxu0 %v382
    %1017 = vmatprep.subr.mxu0 0.0
    %1018 = vmatpush1.msra.mxu0 0.0
    %1019 = vmatprep.subr.mxu0 0.0
    %1020 = vmatpush1.msra.mxu0 0.0
    %1021 = vmatprep.subr.mxu0 0.0
    %1022 = vmatpush1.msra.mxu0 0.0
    %1023 = vmatprep.subr.mxu0 0.0
    %1024 = vmatpush1.msra.mxu0 0.0
    %1025 = vmatprep.subr.mxu0 0.0
    %1026 = vmatpush1.msra.mxu0 0.0
    %1027 = vmatprep.subr.mxu0 0.0
    %1028 = vmatpush1.msra.mxu0 0.0
    %1029 = vmatprep.subr.mxu0 0.0
    %1030 = vmatpush1.msra.mxu0 0.0
    %1031 = vmatprep.subr.mxu0 0.0
    %1032 = vmatpush1.msra.mxu0 0.0
    %1033 = vmatprep.subr.mxu0 0.0
    %1034 = vmatpush1.msra.mxu0 0.0
    %1035 = vmatprep.subr.mxu0 0.0
    %1036 = vmatpush1.msra.mxu0 0.0
    %1037 = vmatprep.subr.mxu0 0.0
    %1038 = vmatpush1.msra.mxu0 0.0
    %1039 = vmatprep.subr.mxu0 0.0
    %1040 = vmatpush1.msra.mxu0 0.0
    %1041 = vmatprep.subr.mxu0 0.0
    %1042 = vmatpush1.msra.mxu0 0.0
    %1043 = vmatprep.subr.mxu0 0.0
    %1044 = vmatpush1.msra.mxu0 0.0
    %1045 = vmatprep.subr.mxu0 0.0
    %1046 = vmatpush1.msra.mxu0 0.0
    %1047 = vmatprep.subr.mxu0 0.0
    %1048 = vmatpush1.msra.mxu0 0.0
    %1049 = vmatprep.subr.mxu0 0.0
    %1050 = vmatpush1.msra.mxu0 0.0
    %1051 = vmatprep.subr.mxu0 0.0
    %1052 = vmatpush1.msra.mxu0 0.0
    %1053 = vmatprep.subr.mxu0 0.0
    %1054 = vmatpush1.msra.mxu0 0.0
    %1055 = vmatprep.subr.mxu0 0.0
    %1056 = vmatpush1.msra.mxu0 0.0
    %1057 = vmatprep.subr.mxu0 0.0
    %1058 = vmatpush1.msra.mxu0 0.0
    %1059 = vmatprep.subr.mxu0 0.0
    %1060 = vmatpush1.msra.mxu0 0.0
    %1061 = vmatprep.subr.mxu0 0.0
    %1062 = vmatpush1.msra.mxu0 0.0
    %1063 = vmatprep.mubr.f32.mxu0 0.0
    %1064 = vmatmul.mubr.f32.gmra.mrb[0].mxu0 %v988
    %v1065 = vpop.f32.mrb[0].mxu0
    %v1066 = vadd.f32 0.0, %v1065
    %v1067 = vpop.f32.mrb[0].mxu0
    %1068 = vmatprep.mubr.f32.mxu0 0.0
    %1069 = vmatmul.mubr.f32.gmra.mrb[0].mxu0 %v991
    %v1070 = vpop.f32.mrb[0].mxu0
    %v1071 = vadd.f32 0.0, %v1070
    %v1072 = vpop.f32.mrb[0].mxu0
    %1073 = vmatprep.mubr.f32.mxu0 0.0
    %1074 = vmatmul.mubr.f32.gmra.mrb[0].mxu0 %v994
    %v1075 = vpop.f32.mrb[0].mxu0
    %v1076 = vadd.f32 0.0, %v1075
    %v1077 = vpop.f32.mrb[0].mxu0
    %1078 = vmatprep.mubr.f32.mxu0 0.0
    %1079 = vmatmul.mubr.f32.gmra.mrb[0].mxu0 %v997
    %v1080 = vpop.f32.mrb[0].mxu0
    %v1081 = vadd.f32 0.0, %v1080
    %v1082 = vpop.f32.mrb[0].mxu0
    %1083 = vdwg.mxu0
    %s1084 = scalar_lea.vmem [#allocation5], 384
    %v1085 = vld [vmem:[%s1084] sm:$0xff]
    %v1086 = vld [vmem:[%s1084 + $0x8] sm:$0xff]
    %v1087 = vld [vmem:[%s1084 + $0x10] sm:$0xff]
    %v1088 = vld [vmem:[%s1084 + $0x18] sm:$0xff]
    %v1089 = vld [vmem:[%s1084 + $0x20] sm:$0xff]
    %v1090 = vld [vmem:[%s1084 + $0x28] sm:$0xff]
    %v1091 = vld [vmem:[%s1084 + $0x30] sm:$0xff]
    %v1092 = vld [vmem:[%s1084 + $0x38] sm:$0xff]
    %v1093 = vld [vmem:[%s1084 + $0x40] sm:$0xff]
    %v1094 = vld [vmem:[%s1084 + $0x48] sm:$0xff]
    %v1095 = vld [vmem:[%s1084 + $0x50] sm:$0xff]
    %v1096 = vld [vmem:[%s1084 + $0x58] sm:$0xff]
    %v1097 = vld [vmem:[%s1084 + $0x60] sm:$0xff]
    %v1098 = vld [vmem:[%s1084 + $0x68] sm:$0xff]
    %v1099 = vld [vmem:[%s1084 + $0x70] sm:$0xff]
    %v1100 = vld [vmem:[%s1084 + $0x78] sm:$0xff]
    %1101 = vmatprep.subr.mxu0 0.0
    %1102 = vmatpush1.msra.mxu0 %v1085
    %1103 = vmatprep.subr.mxu0 0.0
    %1104 = vmatpush1.msra.mxu0 %v1086
    %1105 = vmatprep.subr.mxu0 0.0
    %1106 = vmatpush1.msra.mxu0 %v1087
    %1107 = vmatprep.subr.mxu0 0.0
    %1108 = vmatpush1.msra.mxu0 %v1088
    %1109 = vmatprep.subr.mxu0 0.0
    %1110 = vmatpush1.msra.mxu0 %v1089
    %1111 = vmatprep.subr.mxu0 0.0
    %1112 = vmatpush1.msra.mxu0 %v1090
    %1113 = vmatprep.subr.mxu0 0.0
    %1114 = vmatpush1.msra.mxu0 %v1091
    %1115 = vmatprep.subr.mxu0 0.0
    %1116 = vmatpush1.msra.mxu0 %v1092
    %1117 = vmatprep.subr.mxu0 0.0
    %1118 = vmatpush1.msra.mxu0 %v1093
    %1119 = vmatprep.subr.mxu0 0.0
    %1120 = vmatpush1.msra.mxu0 %v1094
    %1121 = vmatprep.subr.mxu0 0.0
    %1122 = vmatpush1.msra.mxu0 %v1095
    %1123 = vmatprep.subr.mxu0 0.0
    %1124 = vmatpush1.msra.mxu0 %v1096
    %1125 = vmatprep.subr.mxu0 0.0
    %1126 = vmatpush1.msra.mxu0 %v1097
    %1127 = vmatprep.subr.mxu0 0.0
    %1128 = vmatpush1.msra.mxu0 %v1098
    %1129 = vmatprep.subr.mxu0 0.0
    %1130 = vmatpush1.msra.mxu0 %v1099
    %1131 = vmatprep.subr.mxu0 0.0
    %1132 = vmatpush1.msra.mxu0 %v1100
    %1133 = vmatprep.subr.mxu0 0.0
    %1134 = vmatpush1.msra.mxu0 0.0
    %1135 = vmatprep.subr.mxu0 0.0
    %1136 = vmatpush1.msra.mxu0 0.0
    %1137 = vmatprep.subr.mxu0 0.0
    %1138 = vmatpush1.msra.mxu0 0.0
    %1139 = vmatprep.subr.mxu0 0.0
    %1140 = vmatpush1.msra.mxu0 0.0
    %1141 = vmatprep.subr.mxu0 0.0
    %1142 = vmatpush1.msra.mxu0 0.0
    %1143 = vmatprep.subr.mxu0 0.0
    %1144 = vmatpush1.msra.mxu0 0.0
    %1145 = vmatprep.subr.mxu0 0.0
    %1146 = vmatpush1.msra.mxu0 0.0
    %1147 = vmatprep.subr.mxu0 0.0
    %1148 = vmatpush1.msra.mxu0 0.0
    %1149 = vmatprep.subr.mxu0 0.0
    %1150 = vmatpush1.msra.mxu0 0.0
    %1151 = vmatprep.subr.mxu0 0.0
    %1152 = vmatpush1.msra.mxu0 0.0
    %1153 = vmatprep.subr.mxu0 0.0
    %1154 = vmatpush1.msra.mxu0 0.0
    %1155 = vmatprep.subr.mxu0 0.0
    %1156 = vmatpush1.msra.mxu0 0.0
    %1157 = vmatprep.subr.mxu0 0.0
    %1158 = vmatpush1.msra.mxu0 0.0
    %1159 = vmatprep.subr.mxu0 0.0
    %1160 = vmatpush1.msra.mxu0 0.0
    %1161 = vmatprep.subr.mxu0 0.0
    %1162 = vmatpush1.msra.mxu0 0.0
    %1163 = vmatprep.subr.mxu0 0.0
    %1164 = vmatpush1.msra.mxu0 0.0
    %1165 = vmatprep.mubr.f32.mxu0 0.0
    %1166 = vmatmul.mubr.f32.gmra.mrb[0].mxu0 %v1066
    %v1167 = vpop.f32.mrb[0].mxu0
    %v1168 = vadd.f32 0.0, %v1167
    %v1169 = vpop.f32.mrb[0].mxu0
    %1170 = vmatprep.mubr.f32.mxu0 0.0
    %1171 = vmatmul.mubr.f32.gmra.mrb[0].mxu0 %v1071
    %v1172 = vpop.f32.mrb[0].mxu0
    %v1173 = vadd.f32 0.0, %v1172
    %v1174 = vpop.f32.mrb[0].mxu0
    %1175 = vmatprep.mubr.f32.mxu0 0.0
    %1176 = vmatmul.mubr.f32.gmra.mrb[0].mxu0 %v1076
    %v1177 = vpop.f32.mrb[0].mxu0
    %v1178 = vadd.f32 0.0, %v1177
    %v1179 = vpop.f32.mrb[0].mxu0
    %1180 = vmatprep.mubr.f32.mxu0 0.0
    %1181 = vmatmul.mubr.f32.gmra.mrb[0].mxu0 %v1081
    %v1182 = vpop.f32.mrb[0].mxu0
    %v1183 = vadd.f32 0.0, %v1182
    %v1184 = vpop.f32.mrb[0].mxu0
    %1185 = vdwg.mxu0
    %v1186 = vadd.f32 %v978, %v1168
    %v1187 = vadd.f32 %v979, %v1173
    %v1188 = vadd.f32 %v980, %v1178
    %v1189 = vadd.f32 %v981, %v1183
    %v1190 = vld [vmem:[%s7] sm:$0x1]
    %v1192 = vlaneseq
    %v1193 = vshrl.u32 %v1192, 7
    %v1194 = vsub.s32 0, %v1193
    %v1195 = vrot.slane %v1190, %v1194
    %v1197 = vadd.f32 %v1186, %v1195
    %v1198 = vadd.f32 %v1187, %v1195
    %v1199 = vadd.f32 %v1188, %v1195
    %v1200 = vadd.f32 %v1189, %v1195
    %v1201 = vmax.f32 %v1197, 0.0
    %v1202 = vmax.f32 %v1198, 0.0
    %v1203 = vmax.f32 %v1199, 0.0
    %v1204 = vmax.f32 %v1200, 0.0
    %v1205 = vld [vmem:[#allocation7] sm:$0xff]
    %v1206 = vld [vmem:[#allocation7 + $0x8] sm:$0xff]
    %vm1207 = vcmask 261120
    %v1209 = vsel %vm1207, %v1205, 0
    %v1212 = vsel %vm1207, %v1206, 0
    %1214 = vmatprep.subr.mxu0 0.0
    %1215 = vmatpush1.msra.mxu0 %v1201
    %1216 = vmatprep.subr.mxu0 0.0
    %1217 = vmatpush1.msra.mxu0 %v1202
    %1218 = vmatprep.subr.mxu0 0.0
    %1219 = vmatpush1.msra.mxu0 %v1203
    %1220 = vmatprep.subr.mxu0 0.0
    %1221 = vmatpush1.msra.mxu0 %v1204
    %1222 = vmatprep.subr.mxu0 0.0
    %1223 = vmatpush1.msra.mxu0 0.0
    %1224 = vmatprep.subr.mxu0 0.0
    %1225 = vmatpush1.msra.mxu0 0.0
    %1226 = vmatprep.subr.mxu0 0.0
    %1227 = vmatpush1.msra.mxu0 0.0
    %1228 = vmatprep.subr.mxu0 0.0
    %1229 = vmatpush1.msra.mxu0 0.0
    %1230 = vmatprep.subr.mxu0 0.0
    %1231 = vmatpush1.msra.mxu0 0.0
    %1232 = vmatprep.subr.mxu0 0.0
    %1233 = vmatpush1.msra.mxu0 0.0
    %1234 = vmatprep.subr.mxu0 0.0
    %1235 = vmatpush1.msra.mxu0 0.0
    %1236 = vmatprep.subr.mxu0 0.0
    %1237 = vmatpush1.msra.mxu0 0.0
    %1238 = vmatprep.subr.mxu0 0.0
    %1239 = vmatpush1.msra.mxu0 0.0
    %1240 = vmatprep.subr.mxu0 0.0
    %1241 = vmatpush1.msra.mxu0 0.0
    %1242 = vmatprep.subr.mxu0 0.0
    %1243 = vmatpush1.msra.mxu0 0.0
    %1244 = vmatprep.subr.mxu0 0.0
    %1245 = vmatpush1.msra.mxu0 0.0
    %1246 = vmatprep.subr.mxu0 0.0
    %1247 = vmatpush1.msra.mxu0 0.0
    %1248 = vmatprep.subr.mxu0 0.0
    %1249 = vmatpush1.msra.mxu0 0.0
    %1250 = vmatprep.subr.mxu0 0.0
    %1251 = vmatpush1.msra.mxu0 0.0
    %1252 = vmatprep.subr.mxu0 0.0
    %1253 = vmatpush1.msra.mxu0 0.0
    %1254 = vmatprep.subr.mxu0 0.0
    %1255 = vmatpush1.msra.mxu0 0.0
    %1256 = vmatprep.subr.mxu0 0.0
    %1257 = vmatpush1.msra.mxu0 0.0
    %1258 = vmatprep.subr.mxu0 0.0
    %1259 = vmatpush1.msra.mxu0 0.0
    %1260 = vmatprep.subr.mxu0 0.0
    %1261 = vmatpush1.msra.mxu0 0.0
    %1262 = vmatprep.subr.mxu0 0.0
    %1263 = vmatpush1.msra.mxu0 0.0
    %1264 = vmatprep.subr.mxu0 0.0
    %1265 = vmatpush1.msra.mxu0 0.0
    %1266 = vmatprep.subr.mxu0 0.0
    %1267 = vmatpush1.msra.mxu0 0.0
    %1268 = vmatprep.subr.mxu0 0.0
    %1269 = vmatpush1.msra.mxu0 0.0
    %1270 = vmatprep.subr.mxu0 0.0
    %1271 = vmatpush1.msra.mxu0 0.0
    %1272 = vmatprep.subr.mxu0 0.0
    %1273 = vmatpush1.msra.mxu0 0.0
    %1274 = vmatprep.subr.mxu0 0.0
    %1275 = vmatpush1.msra.mxu0 0.0
    %1276 = vmatprep.subr.mxu0 0.0
    %1277 = vmatpush1.msra.mxu0 0.0
    %1278 = vmatprep.mubr.f32.mxu0 0.0
    %1279 = vmatmul.mubr.f32.gmra.mrb[0].mxu0 %v1209
    %v1280 = vpop.f32.mrb[0].mxu0
    %v1281 = vadd.f32 0.0, %v1280
    %v1282 = vpop.f32.mrb[0].mxu0
    %1283 = vmatprep.mubr.f32.mxu0 0.0
    %1284 = vmatmul.mubr.f32.gmra.mrb[0].mxu0 %v1212
    %v1285 = vpop.f32.mrb[0].mxu0
    %v1286 = vadd.f32 0.0, %v1285
    %v1287 = vpop.f32.mrb[0].mxu0
    %1288 = vdwg.mxu0
    %v1289 = vld [vmem:[#allocation8] sm:$0xff]
    %v1290 = vld [vmem:[#allocation8 + $0x8] sm:$0xff]
    %v1291 = vld [vmem:[#allocation8 + $0x10] sm:$0xff]
    %v1292 = vld [vmem:[#allocation8 + $0x18] sm:$0xff]
    %v1293 = vld [vmem:[#allocation8 + $0x20] sm:$0xff]
    %v1294 = vld [vmem:[#allocation8 + $0x28] sm:$0xff]
    %v1295 = vld [vmem:[#allocation8 + $0x30] sm:$0xff]
    %v1296 = vld [vmem:[#allocation8 + $0x38] sm:$0xff]
    %v1297 = vld [vmem:[#allocation8 + $0x40] sm:$0xff]
    %v1298 = vld [vmem:[#allocation8 + $0x48] sm:$0xff]
    %v1299 = vld [vmem:[#allocation8 + $0x50] sm:$0xff]
    %v1300 = vld [vmem:[#allocation8 + $0x58] sm:$0xff]
    %v1301 = vld [vmem:[#allocation8 + $0x60] sm:$0xff]
    %v1302 = vld [vmem:[#allocation8 + $0x68] sm:$0xff]
    %v1303 = vld [vmem:[#allocation8 + $0x70] sm:$0xff]
    %v1304 = vld [vmem:[#allocation8 + $0x78] sm:$0xff]
    %s1305 = scalar_lea.vmem [#allocation7], 16
    %v1306 = vld [vmem:[%s1305] sm:$0xff]
    %v1307 = vld [vmem:[%s1305 + $0x8] sm:$0xff]
    %v1309 = vsel %vm1207, %v1306, 0
    %v1312 = vsel %vm1207, %v1307, 0
    %1314 = vmatprep.subr.mxu0 0.0
    %1315 = vmatpush1.msra.mxu0 %v1201
    %1316 = vmatprep.subr.mxu0 0.0
    %1317 = vmatpush1.msra.mxu0 %v1202
    %1318 = vmatprep.subr.mxu0 0.0
    %1319 = vmatpush1.msra.mxu0 %v1203
    %1320 = vmatprep.subr.mxu0 0.0
    %1321 = vmatpush1.msra.mxu0 %v1204
    %1322 = vmatprep.subr.mxu0 0.0
    %1323 = vmatpush1.msra.mxu0 0.0
    %1324 = vmatprep.subr.mxu0 0.0
    %1325 = vmatpush1.msra.mxu0 0.0
    %1326 = vmatprep.subr.mxu0 0.0
    %1327 = vmatpush1.msra.mxu0 0.0
    %1328 = vmatprep.subr.mxu0 0.0
    %1329 = vmatpush1.msra.mxu0 0.0
    %1330 = vmatprep.subr.mxu0 0.0
    %1331 = vmatpush1.msra.mxu0 0.0
    %1332 = vmatprep.subr.mxu0 0.0
    %1333 = vmatpush1.msra.mxu0 0.0
    %1334 = vmatprep.subr.mxu0 0.0
    %1335 = vmatpush1.msra.mxu0 0.0
    %1336 = vmatprep.subr.mxu0 0.0
    %1337 = vmatpush1.msra.mxu0 0.0
    %1338 = vmatprep.subr.mxu0 0.0
    %1339 = vmatpush1.msra.mxu0 0.0
    %1340 = vmatprep.subr.mxu0 0.0
    %1341 = vmatpush1.msra.mxu0 0.0
    %1342 = vmatprep.subr.mxu0 0.0
    %1343 = vmatpush1.msra.mxu0 0.0
    %1344 = vmatprep.subr.mxu0 0.0
    %1345 = vmatpush1.msra.mxu0 0.0
    %1346 = vmatprep.subr.mxu0 0.0
    %1347 = vmatpush1.msra.mxu0 0.0
    %1348 = vmatprep.subr.mxu0 0.0
    %1349 = vmatpush1.msra.mxu0 0.0
    %1350 = vmatprep.subr.mxu0 0.0
    %1351 = vmatpush1.msra.mxu0 0.0
    %1352 = vmatprep.subr.mxu0 0.0
    %1353 = vmatpush1.msra.mxu0 0.0
    %1354 = vmatprep.subr.mxu0 0.0
    %1355 = vmatpush1.msra.mxu0 0.0
    %1356 = vmatprep.subr.mxu0 0.0
    %1357 = vmatpush1.msra.mxu0 0.0
    %1358 = vmatprep.subr.mxu0 0.0
    %1359 = vmatpush1.msra.mxu0 0.0
    %1360 = vmatprep.subr.mxu0 0.0
    %1361 = vmatpush1.msra.mxu0 0.0
    %1362 = vmatprep.subr.mxu0 0.0
    %1363 = vmatpush1.msra.mxu0 0.0
    %1364 = vmatprep.subr.mxu0 0.0
    %1365 = vmatpush1.msra.mxu0 0.0
    %1366 = vmatprep.subr.mxu0 0.0
    %1367 = vmatpush1.msra.mxu0 0.0
    %1368 = vmatprep.subr.mxu0 0.0
    %1369 = vmatpush1.msra.mxu0 0.0
    %1370 = vmatprep.subr.mxu0 0.0
    %1371 = vmatpush1.msra.mxu0 0.0
    %1372 = vmatprep.subr.mxu0 0.0
    %1373 = vmatpush1.msra.mxu0 0.0
    %1374 = vmatprep.subr.mxu0 0.0
    %1375 = vmatpush1.msra.mxu0 0.0
    %1376 = vmatprep.subr.mxu0 0.0
    %1377 = vmatpush1.msra.mxu0 0.0
    %1378 = vmatprep.mubr.f32.mxu0 0.0
    %1379 = vmatmul.mubr.f32.gmra.mrb[0].mxu0 %v1309
    %v1380 = vpop.f32.mrb[0].mxu0
    %v1381 = vadd.f32 0.0, %v1380
    %v1382 = vpop.f32.mrb[0].mxu0
    %1383 = vmatprep.mubr.f32.mxu0 0.0
    %1384 = vmatmul.mubr.f32.gmra.mrb[0].mxu0 %v1312
    %v1385 = vpop.f32.mrb[0].mxu0
    %v1386 = vadd.f32 0.0, %v1385
    %v1387 = vpop.f32.mrb[0].mxu0
    %1388 = vdwg.mxu0
    %s1389 = scalar_lea.vmem [#allocation8], 128
    %v1390 = vld [vmem:[%s1389] sm:$0xff]
    %v1391 = vld [vmem:[%s1389 + $0x8] sm:$0xff]
    %v1392 = vld [vmem:[%s1389 + $0x10] sm:$0xff]
    %v1393 = vld [vmem:[%s1389 + $0x18] sm:$0xff]
    %v1394 = vld [vmem:[%s1389 + $0x20] sm:$0xff]
    %v1395 = vld [vmem:[%s1389 + $0x28] sm:$0xff]
    %v1396 = vld [vmem:[%s1389 + $0x30] sm:$0xff]
    %v1397 = vld [vmem:[%s1389 + $0x38] sm:$0xff]
    %v1398 = vld [vmem:[%s1389 + $0x40] sm:$0xff]
    %v1399 = vld [vmem:[%s1389 + $0x48] sm:$0xff]
    %v1400 = vld [vmem:[%s1389 + $0x50] sm:$0xff]
    %v1401 = vld [vmem:[%s1389 + $0x58] sm:$0xff]
    %v1402 = vld [vmem:[%s1389 + $0x60] sm:$0xff]
    %v1403 = vld [vmem:[%s1389 + $0x68] sm:$0xff]
    %v1404 = vld [vmem:[%s1389 + $0x70] sm:$0xff]
    %v1405 = vld [vmem:[%s1389 + $0x78] sm:$0xff]
    %1406 = vmatprep.subr.mxu0 0.0
    %1407 = vmatpush1.msra.mxu0 %v1390
    %1408 = vmatprep.subr.mxu0 0.0
    %1409 = vmatpush1.msra.mxu0 %v1391
    %1410 = vmatprep.subr.mxu0 0.0
    %1411 = vmatpush1.msra.mxu0 %v1392
    %1412 = vmatprep.subr.mxu0 0.0
    %1413 = vmatpush1.msra.mxu0 %v1393
    %1414 = vmatprep.subr.mxu0 0.0
    %1415 = vmatpush1.msra.mxu0 %v1394
    %1416 = vmatprep.subr.mxu0 0.0
    %1417 = vmatpush1.msra.mxu0 %v1395
    %1418 = vmatprep.subr.mxu0 0.0
    %1419 = vmatpush1.msra.mxu0 %v1396
    %1420 = vmatprep.subr.mxu0 0.0
    %1421 = vmatpush1.msra.mxu0 %v1397
    %1422 = vmatprep.subr.mxu0 0.0
    %1423 = vmatpush1.msra.mxu0 %v1398
    %1424 = vmatprep.subr.mxu0 0.0
    %1425 = vmatpush1.msra.mxu0 %v1399
    %1426 = vmatprep.subr.mxu0 0.0
    %1427 = vmatpush1.msra.mxu0 %v1400
    %1428 = vmatprep.subr.mxu0 0.0
    %1429 = vmatpush1.msra.mxu0 %v1401
    %1430 = vmatprep.subr.mxu0 0.0
    %1431 = vmatpush1.msra.mxu0 %v1402
    %1432 = vmatprep.subr.mxu0 0.0
    %1433 = vmatpush1.msra.mxu0 %v1403
    %1434 = vmatprep.subr.mxu0 0.0
    %1435 = vmatpush1.msra.mxu0 %v1404
    %1436 = vmatprep.subr.mxu0 0.0
    %1437 = vmatpush1.msra.mxu0 %v1405
    %1438 = vmatprep.subr.mxu0 0.0
    %1439 = vmatpush1.msra.mxu0 0.0
    %1440 = vmatprep.subr.mxu0 0.0
    %1441 = vmatpush1.msra.mxu0 0.0
    %1442 = vmatprep.subr.mxu0 0.0
    %1443 = vmatpush1.msra.mxu0 0.0
    %1444 = vmatprep.subr.mxu0 0.0
    %1445 = vmatpush1.msra.mxu0 0.0
    %1446 = vmatprep.subr.mxu0 0.0
    %1447 = vmatpush1.msra.mxu0 0.0
    %1448 = vmatprep.subr.mxu0 0.0
    %1449 = vmatpush1.msra.mxu0 0.0
    %1450 = vmatprep.subr.mxu0 0.0
    %1451 = vmatpush1.msra.mxu0 0.0
    %1452 = vmatprep.subr.mxu0 0.0
    %1453 = vmatpush1.msra.mxu0 0.0
    %1454 = vmatprep.subr.mxu0 0.0
    %1455 = vmatpush1.msra.mxu0 0.0
    %1456 = vmatprep.subr.mxu0 0.0
    %1457 = vmatpush1.msra.mxu0 0.0
    %1458 = vmatprep.subr.mxu0 0.0
    %1459 = vmatpush1.msra.mxu0 0.0
    %1460 = vmatprep.subr.mxu0 0.0
    %1461 = vmatpush1.msra.mxu0 0.0
    %1462 = vmatprep.subr.mxu0 0.0
    %1463 = vmatpush1.msra.mxu0 0.0
    %1464 = vmatprep.subr.mxu0 0.0
    %1465 = vmatpush1.msra.mxu0 0.0
    %1466 = vmatprep.subr.mxu0 0.0
    %1467 = vmatpush1.msra.mxu0 0.0
    %1468 = vmatprep.subr.mxu0 0.0
    %1469 = vmatpush1.msra.mxu0 0.0
    %1470 = vmatprep.mubr.f32.mxu0 0.0
    %1471 = vmatmul.mubr.f32.gmra.mrb[0].mxu0 %v1381
    %v1472 = vpop.f32.mrb[0].mxu0
    %v1473 = vadd.f32 0.0, %v1472
    %v1474 = vpop.f32.mrb[0].mxu0
    %1475 = vmatprep.mubr.f32.mxu0 0.0
    %1476 = vmatmul.mubr.f32.gmra.mrb[0].mxu0 %v1386
    %v1477 = vpop.f32.mrb[0].mxu0
    %v1478 = vadd.f32 0.0, %v1477
    %v1479 = vpop.f32.mrb[0].mxu0
    %1480 = vdwg.mxu0
    %1481 = vmatprep.subr.mxu0 0.0
    %1482 = vmatpush1.msra.mxu0 %v1289
    %1483 = vmatprep.subr.mxu0 0.0
    %1484 = vmatpush1.msra.mxu0 %v1290
    %1485 = vmatprep.subr.mxu0 0.0
    %1486 = vmatpush1.msra.mxu0 %v1291
    %1487 = vmatprep.subr.mxu0 0.0
    %1488 = vmatpush1.msra.mxu0 %v1292
    %1489 = vmatprep.subr.mxu0 0.0
    %1490 = vmatpush1.msra.mxu0 %v1293
    %1491 = vmatprep.subr.mxu0 0.0
    %1492 = vmatpush1.msra.mxu0 %v1294
    %1493 = vmatprep.subr.mxu0 0.0
    %1494 = vmatpush1.msra.mxu0 %v1295
    %1495 = vmatprep.subr.mxu0 0.0
    %1496 = vmatpush1.msra.mxu0 %v1296
    %1497 = vmatprep.subr.mxu0 0.0
    %1498 = vmatpush1.msra.mxu0 %v1297
    %1499 = vmatprep.subr.mxu0 0.0
    %1500 = vmatpush1.msra.mxu0 %v1298
    %1501 = vmatprep.subr.mxu0 0.0
    %1502 = vmatpush1.msra.mxu0 %v1299
    %1503 = vmatprep.subr.mxu0 0.0
    %1504 = vmatpush1.msra.mxu0 %v1300
    %1505 = vmatprep.subr.mxu0 0.0
    %1506 = vmatpush1.msra.mxu0 %v1301
    %1507 = vmatprep.subr.mxu0 0.0
    %1508 = vmatpush1.msra.mxu0 %v1302
    %1509 = vmatprep.subr.mxu0 0.0
    %1510 = vmatpush1.msra.mxu0 %v1303
    %1511 = vmatprep.subr.mxu0 0.0
    %1512 = vmatpush1.msra.mxu0 %v1304
    %1513 = vmatprep.subr.mxu0 0.0
    %1514 = vmatpush1.msra.mxu0 0.0
    %1515 = vmatprep.subr.mxu0 0.0
    %1516 = vmatpush1.msra.mxu0 0.0
    %1517 = vmatprep.subr.mxu0 0.0
    %1518 = vmatpush1.msra.mxu0 0.0
    %1519 = vmatprep.subr.mxu0 0.0
    %1520 = vmatpush1.msra.mxu0 0.0
    %1521 = vmatprep.subr.mxu0 0.0
    %1522 = vmatpush1.msra.mxu0 0.0
    %1523 = vmatprep.subr.mxu0 0.0
    %1524 = vmatpush1.msra.mxu0 0.0
    %1525 = vmatprep.subr.mxu0 0.0
    %1526 = vmatpush1.msra.mxu0 0.0
    %1527 = vmatprep.subr.mxu0 0.0
    %1528 = vmatpush1.msra.mxu0 0.0
    %1529 = vmatprep.subr.mxu0 0.0
    %1530 = vmatpush1.msra.mxu0 0.0
    %1531 = vmatprep.subr.mxu0 0.0
    %1532 = vmatpush1.msra.mxu0 0.0
    %1533 = vmatprep.subr.mxu0 0.0
    %1534 = vmatpush1.msra.mxu0 0.0
    %1535 = vmatprep.subr.mxu0 0.0
    %1536 = vmatpush1.msra.mxu0 0.0
    %1537 = vmatprep.subr.mxu0 0.0
    %1538 = vmatpush1.msra.mxu0 0.0
    %1539 = vmatprep.subr.mxu0 0.0
    %1540 = vmatpush1.msra.mxu0 0.0
    %1541 = vmatprep.subr.mxu0 0.0
    %1542 = vmatpush1.msra.mxu0 0.0
    %1543 = vmatprep.subr.mxu0 0.0
    %1544 = vmatpush1.msra.mxu0 0.0
    %1545 = vmatprep.mubr.f32.mxu0 0.0
    %1546 = vmatmul.mubr.f32.gmra.mrb[0].mxu0 %v1281
    %v1547 = vpop.f32.mrb[0].mxu0
    %v1548 = vadd.f32 %v1473, %v1547
    %v1549 = vpop.f32.mrb[0].mxu0
    %1550 = vmatprep.mubr.f32.mxu0 0.0
    %1551 = vmatmul.mubr.f32.gmra.mrb[0].mxu0 %v1286
    %v1552 = vpop.f32.mrb[0].mxu0
    %v1553 = vadd.f32 %v1478, %v1552
    %v1554 = vpop.f32.mrb[0].mxu0
    %1555 = vdwg.mxu0
    %s1556 = scalar_lea.vmem [#allocation7], 32
    %v1557 = vld [vmem:[%s1556] sm:$0xff]
    %v1558 = vld [vmem:[%s1556 + $0x8] sm:$0xff]
    %v1560 = vsel %vm1207, %v1557, 0
    %v1563 = vsel %vm1207, %v1558, 0
    %1565 = vmatprep.subr.mxu0 0.0
    %1566 = vmatpush1.msra.mxu0 %v1201
    %1567 = vmatprep.subr.mxu0 0.0
    %1568 = vmatpush1.msra.mxu0 %v1202
    %1569 = vmatprep.subr.mxu0 0.0
    %1570 = vmatpush1.msra.mxu0 %v1203
    %1571 = vmatprep.subr.mxu0 0.0
    %1572 = vmatpush1.msra.mxu0 %v1204
    %1573 = vmatprep.subr.mxu0 0.0
    %1574 = vmatpush1.msra.mxu0 0.0
    %1575 = vmatprep.subr.mxu0 0.0
    %1576 = vmatpush1.msra.mxu0 0.0
    %1577 = vmatprep.subr.mxu0 0.0
    %1578 = vmatpush1.msra.mxu0 0.0
    %1579 = vmatprep.subr.mxu0 0.0
    %1580 = vmatpush1.msra.mxu0 0.0
    %1581 = vmatprep.subr.mxu0 0.0
    %1582 = vmatpush1.msra.mxu0 0.0
    %1583 = vmatprep.subr.mxu0 0.0
    %1584 = vmatpush1.msra.mxu0 0.0
    %1585 = vmatprep.subr.mxu0 0.0
    %1586 = vmatpush1.msra.mxu0 0.0
    %1587 = vmatprep.subr.mxu0 0.0
    %1588 = vmatpush1.msra.mxu0 0.0
    %1589 = vmatprep.subr.mxu0 0.0
    %1590 = vmatpush1.msra.mxu0 0.0
    %1591 = vmatprep.subr.mxu0 0.0
    %1592 = vmatpush1.msra.mxu0 0.0
    %1593 = vmatprep.subr.mxu0 0.0
    %1594 = vmatpush1.msra.mxu0 0.0
    %1595 = vmatprep.subr.mxu0 0.0
    %1596 = vmatpush1.msra.mxu0 0.0
    %1597 = vmatprep.subr.mxu0 0.0
    %1598 = vmatpush1.msra.mxu0 0.0
    %1599 = vmatprep.subr.mxu0 0.0
    %1600 = vmatpush1.msra.mxu0 0.0
    %1601 = vmatprep.subr.mxu0 0.0
    %1602 = vmatpush1.msra.mxu0 0.0
    %1603 = vmatprep.subr.mxu0 0.0
    %1604 = vmatpush1.msra.mxu0 0.0
    %1605 = vmatprep.subr.mxu0 0.0
    %1606 = vmatpush1.msra.mxu0 0.0
    %1607 = vmatprep.subr.mxu0 0.0
    %1608 = vmatpush1.msra.mxu0 0.0
    %1609 = vmatprep.subr.mxu0 0.0
    %1610 = vmatpush1.msra.mxu0 0.0
    %1611 = vmatprep.subr.mxu0 0.0
    %1612 = vmatpush1.msra.mxu0 0.0
    %1613 = vmatprep.subr.mxu0 0.0
    %1614 = vmatpush1.msra.mxu0 0.0
    %1615 = vmatprep.subr.mxu0 0.0
    %1616 = vmatpush1.msra.mxu0 0.0
    %1617 = vmatprep.subr.mxu0 0.0
    %1618 = vmatpush1.msra.mxu0 0.0
    %1619 = vmatprep.subr.mxu0 0.0
    %1620 = vmatpush1.msra.mxu0 0.0
    %1621 = vmatprep.subr.mxu0 0.0
    %1622 = vmatpush1.msra.mxu0 0.0
    %1623 = vmatprep.subr.mxu0 0.0
    %1624 = vmatpush1.msra.mxu0 0.0
    %1625 = vmatprep.subr.mxu0 0.0
    %1626 = vmatpush1.msra.mxu0 0.0
    %1627 = vmatprep.subr.mxu0 0.0
    %1628 = vmatpush1.msra.mxu0 0.0
    %1629 = vmatprep.mubr.f32.mxu0 0.0
    %1630 = vmatmul.mubr.f32.gmra.mrb[0].mxu0 %v1560
    %v1631 = vpop.f32.mrb[0].mxu0
    %v1632 = vadd.f32 0.0, %v1631
    %v1633 = vpop.f32.mrb[0].mxu0
    %1634 = vmatprep.mubr.f32.mxu0 0.0
    %1635 = vmatmul.mubr.f32.gmra.mrb[0].mxu0 %v1563
    %v1636 = vpop.f32.mrb[0].mxu0
    %v1637 = vadd.f32 0.0, %v1636
    %v1638 = vpop.f32.mrb[0].mxu0
    %1639 = vdwg.mxu0
    %s1640 = scalar_lea.vmem [#allocation8], 256
    %v1641 = vld [vmem:[%s1640] sm:$0xff]
    %v1642 = vld [vmem:[%s1640 + $0x8] sm:$0xff]
    %v1643 = vld [vmem:[%s1640 + $0x10] sm:$0xff]
    %v1644 = vld [vmem:[%s1640 + $0x18] sm:$0xff]
    %v1645 = vld [vmem:[%s1640 + $0x20] sm:$0xff]
    %v1646 = vld [vmem:[%s1640 + $0x28] sm:$0xff]
    %v1647 = vld [vmem:[%s1640 + $0x30] sm:$0xff]
    %v1648 = vld [vmem:[%s1640 + $0x38] sm:$0xff]
    %v1649 = vld [vmem:[%s1640 + $0x40] sm:$0xff]
    %v1650 = vld [vmem:[%s1640 + $0x48] sm:$0xff]
    %v1651 = vld [vmem:[%s1640 + $0x50] sm:$0xff]
    %v1652 = vld [vmem:[%s1640 + $0x58] sm:$0xff]
    %v1653 = vld [vmem:[%s1640 + $0x60] sm:$0xff]
    %v1654 = vld [vmem:[%s1640 + $0x68] sm:$0xff]
    %v1655 = vld [vmem:[%s1640 + $0x70] sm:$0xff]
    %v1656 = vld [vmem:[%s1640 + $0x78] sm:$0xff]
    %1657 = vmatprep.subr.mxu0 0.0
    %1658 = vmatpush1.msra.mxu0 %v1641
    %1659 = vmatprep.subr.mxu0 0.0
    %1660 = vmatpush1.msra.mxu0 %v1642
    %1661 = vmatprep.subr.mxu0 0.0
    %1662 = vmatpush1.msra.mxu0 %v1643
    %1663 = vmatprep.subr.mxu0 0.0
    %1664 = vmatpush1.msra.mxu0 %v1644
    %1665 = vmatprep.subr.mxu0 0.0
    %1666 = vmatpush1.msra.mxu0 %v1645
    %1667 = vmatprep.subr.mxu0 0.0
    %1668 = vmatpush1.msra.mxu0 %v1646
    %1669 = vmatprep.subr.mxu0 0.0
    %1670 = vmatpush1.msra.mxu0 %v1647
    %1671 = vmatprep.subr.mxu0 0.0
    %1672 = vmatpush1.msra.mxu0 %v1648
    %1673 = vmatprep.subr.mxu0 0.0
    %1674 = vmatpush1.msra.mxu0 %v1649
    %1675 = vmatprep.subr.mxu0 0.0
    %1676 = vmatpush1.msra.mxu0 %v1650
    %1677 = vmatprep.subr.mxu0 0.0
    %1678 = vmatpush1.msra.mxu0 %v1651
    %1679 = vmatprep.subr.mxu0 0.0
    %1680 = vmatpush1.msra.mxu0 %v1652
    %1681 = vmatprep.subr.mxu0 0.0
    %1682 = vmatpush1.msra.mxu0 %v1653
    %1683 = vmatprep.subr.mxu0 0.0
    %1684 = vmatpush1.msra.mxu0 %v1654
    %1685 = vmatprep.subr.mxu0 0.0
    %1686 = vmatpush1.msra.mxu0 %v1655
    %1687 = vmatprep.subr.mxu0 0.0
    %1688 = vmatpush1.msra.mxu0 %v1656
    %1689 = vmatprep.subr.mxu0 0.0
    %1690 = vmatpush1.msra.mxu0 0.0
    %1691 = vmatprep.subr.mxu0 0.0
    %1692 = vmatpush1.msra.mxu0 0.0
    %1693 = vmatprep.subr.mxu0 0.0
    %1694 = vmatpush1.msra.mxu0 0.0
    %1695 = vmatprep.subr.mxu0 0.0
    %1696 = vmatpush1.msra.mxu0 0.0
    %1697 = vmatprep.subr.mxu0 0.0
    %1698 = vmatpush1.msra.mxu0 0.0
    %1699 = vmatprep.subr.mxu0 0.0
    %1700 = vmatpush1.msra.mxu0 0.0
    %1701 = vmatprep.subr.mxu0 0.0
    %1702 = vmatpush1.msra.mxu0 0.0
    %1703 = vmatprep.subr.mxu0 0.0
    %1704 = vmatpush1.msra.mxu0 0.0
    %1705 = vmatprep.subr.mxu0 0.0
    %1706 = vmatpush1.msra.mxu0 0.0
    %1707 = vmatprep.subr.mxu0 0.0
    %1708 = vmatpush1.msra.mxu0 0.0
    %1709 = vmatprep.subr.mxu0 0.0
    %1710 = vmatpush1.msra.mxu0 0.0
    %1711 = vmatprep.subr.mxu0 0.0
    %1712 = vmatpush1.msra.mxu0 0.0
    %1713 = vmatprep.subr.mxu0 0.0
    %1714 = vmatpush1.msra.mxu0 0.0
    %1715 = vmatprep.subr.mxu0 0.0
    %1716 = vmatpush1.msra.mxu0 0.0
    %1717 = vmatprep.subr.mxu0 0.0
    %1718 = vmatpush1.msra.mxu0 0.0
    %1719 = vmatprep.subr.mxu0 0.0
    %1720 = vmatpush1.msra.mxu0 0.0
    %1721 = vmatprep.mubr.f32.mxu0 0.0
    %1722 = vmatmul.mubr.f32.gmra.mrb[0].mxu0 %v1632
    %v1723 = vpop.f32.mrb[0].mxu0
    %v1724 = vadd.f32 0.0, %v1723
    %v1725 = vpop.f32.mrb[0].mxu0
    %1726 = vmatprep.mubr.f32.mxu0 0.0
    %1727 = vmatmul.mubr.f32.gmra.mrb[0].mxu0 %v1637
    %v1728 = vpop.f32.mrb[0].mxu0
    %v1729 = vadd.f32 0.0, %v1728
    %v1730 = vpop.f32.mrb[0].mxu0
    %1731 = vdwg.mxu0
    %v1732 = vadd.f32 %v1548, %v1724
    %v1733 = vadd.f32 %v1553, %v1729
    %s1734 = scalar_lea.vmem [#allocation7], 48
    %v1735 = vld [vmem:[%s1734] sm:$0xff]
    %v1736 = vld [vmem:[%s1734 + $0x8] sm:$0xff]
    %v1738 = vsel %vm1207, %v1735, 0
    %v1741 = vsel %vm1207, %v1736, 0
    %1743 = vmatprep.subr.mxu0 0.0
    %1744 = vmatpush1.msra.mxu0 %v1201
    %1745 = vmatprep.subr.mxu0 0.0
    %1746 = vmatpush1.msra.mxu0 %v1202
    %1747 = vmatprep.subr.mxu0 0.0
    %1748 = vmatpush1.msra.mxu0 %v1203
    %1749 = vmatprep.subr.mxu0 0.0
    %1750 = vmatpush1.msra.mxu0 %v1204
    %1751 = vmatprep.subr.mxu0 0.0
    %1752 = vmatpush1.msra.mxu0 0.0
    %1753 = vmatprep.subr.mxu0 0.0
    %1754 = vmatpush1.msra.mxu0 0.0
    %1755 = vmatprep.subr.mxu0 0.0
    %1756 = vmatpush1.msra.mxu0 0.0
    %1757 = vmatprep.subr.mxu0 0.0
    %1758 = vmatpush1.msra.mxu0 0.0
    %1759 = vmatprep.subr.mxu0 0.0
    %1760 = vmatpush1.msra.mxu0 0.0
    %1761 = vmatprep.subr.mxu0 0.0
    %1762 = vmatpush1.msra.mxu0 0.0
    %1763 = vmatprep.subr.mxu0 0.0
    %1764 = vmatpush1.msra.mxu0 0.0
    %1765 = vmatprep.subr.mxu0 0.0
    %1766 = vmatpush1.msra.mxu0 0.0
    %1767 = vmatprep.subr.mxu0 0.0
    %1768 = vmatpush1.msra.mxu0 0.0
    %1769 = vmatprep.subr.mxu0 0.0
    %1770 = vmatpush1.msra.mxu0 0.0
    %1771 = vmatprep.subr.mxu0 0.0
    %1772 = vmatpush1.msra.mxu0 0.0
    %1773 = vmatprep.subr.mxu0 0.0
    %1774 = vmatpush1.msra.mxu0 0.0
    %1775 = vmatprep.subr.mxu0 0.0
    %1776 = vmatpush1.msra.mxu0 0.0
    %1777 = vmatprep.subr.mxu0 0.0
    %1778 = vmatpush1.msra.mxu0 0.0
    %1779 = vmatprep.subr.mxu0 0.0
    %1780 = vmatpush1.msra.mxu0 0.0
    %1781 = vmatprep.subr.mxu0 0.0
    %1782 = vmatpush1.msra.mxu0 0.0
    %1783 = vmatprep.subr.mxu0 0.0
    %1784 = vmatpush1.msra.mxu0 0.0
    %1785 = vmatprep.subr.mxu0 0.0
    %1786 = vmatpush1.msra.mxu0 0.0
    %1787 = vmatprep.subr.mxu0 0.0
    %1788 = vmatpush1.msra.mxu0 0.0
    %1789 = vmatprep.subr.mxu0 0.0
    %1790 = vmatpush1.msra.mxu0 0.0
    %1791 = vmatprep.subr.mxu0 0.0
    %1792 = vmatpush1.msra.mxu0 0.0
    %1793 = vmatprep.subr.mxu0 0.0
    %1794 = vmatpush1.msra.mxu0 0.0
    %1795 = vmatprep.subr.mxu0 0.0
    %1796 = vmatpush1.msra.mxu0 0.0
    %1797 = vmatprep.subr.mxu0 0.0
    %1798 = vmatpush1.msra.mxu0 0.0
    %1799 = vmatprep.subr.mxu0 0.0
    %1800 = vmatpush1.msra.mxu0 0.0
    %1801 = vmatprep.subr.mxu0 0.0
    %1802 = vmatpush1.msra.mxu0 0.0
    %1803 = vmatprep.subr.mxu0 0.0
    %1804 = vmatpush1.msra.mxu0 0.0
    %1805 = vmatprep.subr.mxu0 0.0
    %1806 = vmatpush1.msra.mxu0 0.0
    %1807 = vmatprep.mubr.f32.mxu0 0.0
    %1808 = vmatmul.mubr.f32.gmra.mrb[0].mxu0 %v1738
    %v1809 = vpop.f32.mrb[0].mxu0
    %v1810 = vadd.f32 0.0, %v1809
    %v1811 = vpop.f32.mrb[0].mxu0
    %1812 = vmatprep.mubr.f32.mxu0 0.0
    %1813 = vmatmul.mubr.f32.gmra.mrb[0].mxu0 %v1741
    %v1814 = vpop.f32.mrb[0].mxu0
    %v1815 = vadd.f32 0.0, %v1814
    %v1816 = vpop.f32.mrb[0].mxu0
    %1817 = vdwg.mxu0
    %s1818 = scalar_lea.vmem [#allocation8], 384
    %v1819 = vld [vmem:[%s1818] sm:$0xff]
    %v1820 = vld [vmem:[%s1818 + $0x8] sm:$0xff]
    %v1821 = vld [vmem:[%s1818 + $0x10] sm:$0xff]
    %v1822 = vld [vmem:[%s1818 + $0x18] sm:$0xff]
    %v1823 = vld [vmem:[%s1818 + $0x20] sm:$0xff]
    %v1824 = vld [vmem:[%s1818 + $0x28] sm:$0xff]
    %v1825 = vld [vmem:[%s1818 + $0x30] sm:$0xff]
    %v1826 = vld [vmem:[%s1818 + $0x38] sm:$0xff]
    %v1827 = vld [vmem:[%s1818 + $0x40] sm:$0xff]
    %v1828 = vld [vmem:[%s1818 + $0x48] sm:$0xff]
    %v1829 = vld [vmem:[%s1818 + $0x50] sm:$0xff]
    %v1830 = vld [vmem:[%s1818 + $0x58] sm:$0xff]
    %v1831 = vld [vmem:[%s1818 + $0x60] sm:$0xff]
    %v1832 = vld [vmem:[%s1818 + $0x68] sm:$0xff]
    %v1833 = vld [vmem:[%s1818 + $0x70] sm:$0xff]
    %v1834 = vld [vmem:[%s1818 + $0x78] sm:$0xff]
    %1835 = vmatprep.subr.mxu0 0.0
    %1836 = vmatpush1.msra.mxu0 %v1819
    %1837 = vmatprep.subr.mxu0 0.0
    %1838 = vmatpush1.msra.mxu0 %v1820
    %1839 = vmatprep.subr.mxu0 0.0
    %1840 = vmatpush1.msra.mxu0 %v1821
    %1841 = vmatprep.subr.mxu0 0.0
    %1842 = vmatpush1.msra.mxu0 %v1822
    %1843 = vmatprep.subr.mxu0 0.0
    %1844 = vmatpush1.msra.mxu0 %v1823
    %1845 = vmatprep.subr.mxu0 0.0
    %1846 = vmatpush1.msra.mxu0 %v1824
    %1847 = vmatprep.subr.mxu0 0.0
    %1848 = vmatpush1.msra.mxu0 %v1825
    %1849 = vmatprep.subr.mxu0 0.0
    %1850 = vmatpush1.msra.mxu0 %v1826
    %1851 = vmatprep.subr.mxu0 0.0
    %1852 = vmatpush1.msra.mxu0 %v1827
    %1853 = vmatprep.subr.mxu0 0.0
    %1854 = vmatpush1.msra.mxu0 %v1828
    %1855 = vmatprep.subr.mxu0 0.0
    %1856 = vmatpush1.msra.mxu0 %v1829
    %1857 = vmatprep.subr.mxu0 0.0
    %1858 = vmatpush1.msra.mxu0 %v1830
    %1859 = vmatprep.subr.mxu0 0.0
    %1860 = vmatpush1.msra.mxu0 %v1831
    %1861 = vmatprep.subr.mxu0 0.0
    %1862 = vmatpush1.msra.mxu0 %v1832
    %1863 = vmatprep.subr.mxu0 0.0
    %1864 = vmatpush1.msra.mxu0 %v1833
    %1865 = vmatprep.subr.mxu0 0.0
    %1866 = vmatpush1.msra.mxu0 %v1834
    %1867 = vmatprep.subr.mxu0 0.0
    %1868 = vmatpush1.msra.mxu0 0.0
    %1869 = vmatprep.subr.mxu0 0.0
    %1870 = vmatpush1.msra.mxu0 0.0
    %1871 = vmatprep.subr.mxu0 0.0
    %1872 = vmatpush1.msra.mxu0 0.0
    %1873 = vmatprep.subr.mxu0 0.0
    %1874 = vmatpush1.msra.mxu0 0.0
    %1875 = vmatprep.subr.mxu0 0.0
    %1876 = vmatpush1.msra.mxu0 0.0
    %1877 = vmatprep.subr.mxu0 0.0
    %1878 = vmatpush1.msra.mxu0 0.0
    %1879 = vmatprep.subr.mxu0 0.0
    %1880 = vmatpush1.msra.mxu0 0.0
    %1881 = vmatprep.subr.mxu0 0.0
    %1882 = vmatpush1.msra.mxu0 0.0
    %1883 = vmatprep.subr.mxu0 0.0
    %1884 = vmatpush1.msra.mxu0 0.0
    %1885 = vmatprep.subr.mxu0 0.0
    %1886 = vmatpush1.msra.mxu0 0.0
    %1887 = vmatprep.subr.mxu0 0.0
    %1888 = vmatpush1.msra.mxu0 0.0
    %1889 = vmatprep.subr.mxu0 0.0
    %1890 = vmatpush1.msra.mxu0 0.0
    %1891 = vmatprep.subr.mxu0 0.0
    %1892 = vmatpush1.msra.mxu0 0.0
    %1893 = vmatprep.subr.mxu0 0.0
    %1894 = vmatpush1.msra.mxu0 0.0
    %1895 = vmatprep.subr.mxu0 0.0
    %1896 = vmatpush1.msra.mxu0 0.0
    %1897 = vmatprep.subr.mxu0 0.0
    %1898 = vmatpush1.msra.mxu0 0.0
    %1899 = vmatprep.mubr.f32.mxu0 0.0
    %1900 = vmatmul.mubr.f32.gmra.mrb[0].mxu0 %v1810
    %v1901 = vpop.f32.mrb[0].mxu0
    %v1902 = vadd.f32 0.0, %v1901
    %v1903 = vpop.f32.mrb[0].mxu0
    %1904 = vmatprep.mubr.f32.mxu0 0.0
    %1905 = vmatmul.mubr.f32.gmra.mrb[0].mxu0 %v1815
    %v1906 = vpop.f32.mrb[0].mxu0
    %v1907 = vadd.f32 0.0, %v1906
    %v1908 = vpop.f32.mrb[0].mxu0
    %1909 = vdwg.mxu0
    %v1910 = vadd.f32 %v1732, %v1902
    %v1911 = vadd.f32 %v1733, %v1907
    %v1912 = vld [vmem:[#allocation10] sm:$0x1]
    %v1914 = vlaneseq
    %v1915 = vshrl.u32 %v1914, 7
    %v1916 = vsub.s32 0, %v1915
    %v1917 = vrot.slane %v1912, %v1916
    %v1919 = vadd.f32 %v1910, %v1917
    %v1920 = vadd.f32 %v1911, %v1917
    %v1921 = vld [vmem:[#allocation14] sm:$0xff]
    %v1922 = vld [vmem:[#allocation14 + $0x8] sm:$0xff]
    %v1923 = vld [vmem:[#allocation14 + $0x10] sm:$0xff]
    %v1924 = vld [vmem:[#allocation14 + $0x18] sm:$0xff]
    %v1925 = vld [vmem:[#allocation14 + $0x20] sm:$0xff]
    %v1926 = vld [vmem:[#allocation14 + $0x28] sm:$0xff]
    %v1927 = vld [vmem:[#allocation14 + $0x30] sm:$0xff]
    %v1928 = vld [vmem:[#allocation14 + $0x38] sm:$0xff]
    %v1929 = vld [vmem:[#allocation14 + $0x40] sm:$0xff]
    %v1930 = vld [vmem:[#allocation14 + $0x48] sm:$0xff]
    %v1931 = vld [vmem:[#allocation14 + $0x50] sm:$0xff]
    %v1932 = vld [vmem:[#allocation14 + $0x58] sm:$0xff]
    %v1933 = vld [vmem:[#allocation14 + $0x60] sm:$0xff]
    %v1934 = vld [vmem:[#allocation14 + $0x68] sm:$0xff]
    %v1935 = vld [vmem:[#allocation14 + $0x70] sm:$0xff]
    %v1936 = vld [vmem:[#allocation14 + $0x78] sm:$0xff]
    %1937 = vmatprep.subr.mxu0 0.0
    %1938 = vmatpush1.msra.mxu0 %v1921
    %1939 = vmatprep.subr.mxu0 0.0
    %1940 = vmatpush1.msra.mxu0 %v1922
    %1941 = vmatprep.subr.mxu0 0.0
    %1942 = vmatpush1.msra.mxu0 %v1923
    %1943 = vmatprep.subr.mxu0 0.0
    %1944 = vmatpush1.msra.mxu0 %v1924
    %1945 = vmatprep.subr.mxu0 0.0
    %1946 = vmatpush1.msra.mxu0 %v1925
    %1947 = vmatprep.subr.mxu0 0.0
    %1948 = vmatpush1.msra.mxu0 %v1926
    %1949 = vmatprep.subr.mxu0 0.0
    %1950 = vmatpush1.msra.mxu0 %v1927
    %1951 = vmatprep.subr.mxu0 0.0
    %1952 = vmatpush1.msra.mxu0 %v1928
    %1953 = vmatprep.subr.mxu0 0.0
    %1954 = vmatpush1.msra.mxu0 %v1929
    %1955 = vmatprep.subr.mxu0 0.0
    %1956 = vmatpush1.msra.mxu0 %v1930
    %1957 = vmatprep.subr.mxu0 0.0
    %1958 = vmatpush1.msra.mxu0 %v1931
    %1959 = vmatprep.subr.mxu0 0.0
    %1960 = vmatpush1.msra.mxu0 %v1932
    %1961 = vmatprep.subr.mxu0 0.0
    %1962 = vmatpush1.msra.mxu0 %v1933
    %1963 = vmatprep.subr.mxu0 0.0
    %1964 = vmatpush1.msra.mxu0 %v1934
    %1965 = vmatprep.subr.mxu0 0.0
    %1966 = vmatpush1.msra.mxu0 %v1935
    %1967 = vmatprep.subr.mxu0 0.0
    %1968 = vmatpush1.msra.mxu0 %v1936
    %1969 = vmatprep.subr.mxu0 0.0
    %1970 = vmatpush1.msra.mxu0 0.0
    %1971 = vmatprep.subr.mxu0 0.0
    %1972 = vmatpush1.msra.mxu0 0.0
    %1973 = vmatprep.subr.mxu0 0.0
    %1974 = vmatpush1.msra.mxu0 0.0
    %1975 = vmatprep.subr.mxu0 0.0
    %1976 = vmatpush1.msra.mxu0 0.0
    %1977 = vmatprep.subr.mxu0 0.0
    %1978 = vmatpush1.msra.mxu0 0.0
    %1979 = vmatprep.subr.mxu0 0.0
    %1980 = vmatpush1.msra.mxu0 0.0
    %1981 = vmatprep.subr.mxu0 0.0
    %1982 = vmatpush1.msra.mxu0 0.0
    %1983 = vmatprep.subr.mxu0 0.0
    %1984 = vmatpush1.msra.mxu0 0.0
    %1985 = vmatprep.subr.mxu0 0.0
    %1986 = vmatpush1.msra.mxu0 0.0
    %1987 = vmatprep.subr.mxu0 0.0
    %1988 = vmatpush1.msra.mxu0 0.0
    %1989 = vmatprep.subr.mxu0 0.0
    %1990 = vmatpush1.msra.mxu0 0.0
    %1991 = vmatprep.subr.mxu0 0.0
    %1992 = vmatpush1.msra.mxu0 0.0
    %1993 = vmatprep.subr.mxu0 0.0
    %1994 = vmatpush1.msra.mxu0 0.0
    %1995 = vmatprep.subr.mxu0 0.0
    %1996 = vmatpush1.msra.mxu0 0.0
    %1997 = vmatprep.subr.mxu0 0.0
    %1998 = vmatpush1.msra.mxu0 0.0
    %1999 = vmatprep.subr.mxu0 0.0
    %2000 = vmatpush1.msra.mxu0 0.0
    %2001 = vmatprep.mubr.f32.mxu0 0.0
    %2002 = vmatmul.mubr.f32.gmra.mrb[0].mxu0 %v1919
    %v2003 = vpop.f32.mrb[0].mxu0
    %v2004 = vadd.f32 0.0, %v2003
    %v2005 = vpop.f32.mrb[0].mxu0
    %2006 = vmatprep.mubr.f32.mxu0 0.0
    %2007 = vmatmul.mubr.f32.gmra.mrb[0].mxu0 %v1920
    %v2008 = vpop.f32.mrb[0].mxu0
    %v2009 = vadd.f32 0.0, %v2008
    %v2010 = vpop.f32.mrb[0].mxu0
    %2011 = vdwg.mxu0
    %v2012 = vsub.f32 %v1919, %v2004
    %v2013 = vsub.f32 %v1920, %v2009
    %v2014 = vmul.f32 %v2012, %v2012
    %v2015 = vmul.f32 %v2013, %v2013
    %2016 = vmatprep.subr.mxu0 0.0
    %2017 = vmatpush1.msra.mxu0 %v1921
    %2018 = vmatprep.subr.mxu0 0.0
    %2019 = vmatpush1.msra.mxu0 %v1922
    %2020 = vmatprep.subr.mxu0 0.0
    %2021 = vmatpush1.msra.mxu0 %v1923
    %2022 = vmatprep.subr.mxu0 0.0
    %2023 = vmatpush1.msra.mxu0 %v1924
    %2024 = vmatprep.subr.mxu0 0.0
    %2025 = vmatpush1.msra.mxu0 %v1925
    %2026 = vmatprep.subr.mxu0 0.0
    %2027 = vmatpush1.msra.mxu0 %v1926
    %2028 = vmatprep.subr.mxu0 0.0
    %2029 = vmatpush1.msra.mxu0 %v1927
    %2030 = vmatprep.subr.mxu0 0.0
    %2031 = vmatpush1.msra.mxu0 %v1928
    %2032 = vmatprep.subr.mxu0 0.0
    %2033 = vmatpush1.msra.mxu0 %v1929
    %2034 = vmatprep.subr.mxu0 0.0
    %2035 = vmatpush1.msra.mxu0 %v1930
    %2036 = vmatprep.subr.mxu0 0.0
    %2037 = vmatpush1.msra.mxu0 %v1931
    %2038 = vmatprep.subr.mxu0 0.0
    %2039 = vmatpush1.msra.mxu0 %v1932
    %2040 = vmatprep.subr.mxu0 0.0
    %2041 = vmatpush1.msra.mxu0 %v1933
    %2042 = vmatprep.subr.mxu0 0.0
    %2043 = vmatpush1.msra.mxu0 %v1934
    %2044 = vmatprep.subr.mxu0 0.0
    %2045 = vmatpush1.msra.mxu0 %v1935
    %2046 = vmatprep.subr.mxu0 0.0
    %2047 = vmatpush1.msra.mxu0 %v1936
    %2048 = vmatprep.subr.mxu0 0.0
    %2049 = vmatpush1.msra.mxu0 0.0
    %2050 = vmatprep.subr.mxu0 0.0
    %2051 = vmatpush1.msra.mxu0 0.0
    %2052 = vmatprep.subr.mxu0 0.0
    %2053 = vmatpush1.msra.mxu0 0.0
    %2054 = vmatprep.subr.mxu0 0.0
    %2055 = vmatpush1.msra.mxu0 0.0
    %2056 = vmatprep.subr.mxu0 0.0
    %2057 = vmatpush1.msra.mxu0 0.0
    %2058 = vmatprep.subr.mxu0 0.0
    %2059 = vmatpush1.msra.mxu0 0.0
    %2060 = vmatprep.subr.mxu0 0.0
    %2061 = vmatpush1.msra.mxu0 0.0
    %2062 = vmatprep.subr.mxu0 0.0
    %2063 = vmatpush1.msra.mxu0 0.0
    %2064 = vmatprep.subr.mxu0 0.0
    %2065 = vmatpush1.msra.mxu0 0.0
    %2066 = vmatprep.subr.mxu0 0.0
    %2067 = vmatpush1.msra.mxu0 0.0
    %2068 = vmatprep.subr.mxu0 0.0
    %2069 = vmatpush1.msra.mxu0 0.0
    %2070 = vmatprep.subr.mxu0 0.0
    %2071 = vmatpush1.msra.mxu0 0.0
    %2072 = vmatprep.subr.mxu0 0.0
    %2073 = vmatpush1.msra.mxu0 0.0
    %2074 = vmatprep.subr.mxu0 0.0
    %2075 = vmatpush1.msra.mxu0 0.0
    %2076 = vmatprep.subr.mxu0 0.0
    %2077 = vmatpush1.msra.mxu0 0.0
    %2078 = vmatprep.subr.mxu0 0.0
    %2079 = vmatpush1.msra.mxu0 0.0
    %2080 = vmatprep.mubr.f32.mxu0 0.0
    %2081 = vmatmul.mubr.f32.gmra.mrb[0].mxu0 %v2014
    %v2082 = vpop.f32.mrb[0].mxu0
    %v2083 = vadd.f32 1e-05, %v2082
    %v2084 = vpop.f32.mrb[0].mxu0
    %2085 = vmatprep.mubr.f32.mxu0 0.0
    %2086 = vmatmul.mubr.f32.gmra.mrb[0].mxu0 %v2015
    %v2087 = vpop.f32.mrb[0].mxu0
    %v2088 = vadd.f32 1e-05, %v2087
    %v2089 = vpop.f32.mrb[0].mxu0
    %2090 = vdwg.mxu0
    %v2091 = vrsqrt.pop %v2083
    %v2092 = vrsqrt.pop %v2088
    %v2093 = vmul.f32 %v2012, %v2091
    %v2094 = vmul.f32 %v2013, %v2092
    %v2095 = vld [vmem:[#allocation11] sm:$0x1]
    %v2097 = vlaneseq
    %v2098 = vshrl.u32 %v2097, 7
    %v2099 = vsub.s32 0, %v2098
    %v2100 = vrot.slane %v2095, %v2099
    %v2102 = vmul.f32 %v2093, %v2100
    %v2103 = vmul.f32 %v2094, %v2100
    %v2104 = vld [vmem:[#allocation13] sm:$0x1]
    %v2106 = vlaneseq
    %v2107 = vshrl.u32 %v2106, 7
    %v2108 = vsub.s32 0, %v2107
    %v2109 = vrot.slane %v2104, %v2108
    %v2111 = vadd.f32 %v2102, %v2109
    %v2112 = vadd.f32 %v2103, %v2109
    %v2113 = vmax.f32 %v2111, 0.0
    %v2114 = vmax.f32 %v2112, 0.0
    %v2115 = vld [vmem:[#allocation16] sm:$0xff]
    %vm2116 = vcmask 130048
    %v2118 = vsel %vm2116, %v2115, 0
    %2120 = vmatprep.subr.mxu0 0.0
    %2121 = vmatpush1.msra.mxu0 %v2113
    %2122 = vmatprep.subr.mxu0 0.0
    %2123 = vmatpush1.msra.mxu0 %v2114
    %2124 = vmatprep.subr.mxu0 0.0
    %2125 = vmatpush1.msra.mxu0 0.0
    %2126 = vmatprep.subr.mxu0 0.0
    %2127 = vmatpush1.msra.mxu0 0.0
    %2128 = vmatprep.subr.mxu0 0.0
    %2129 = vmatpush1.msra.mxu0 0.0
    %2130 = vmatprep.subr.mxu0 0.0
    %2131 = vmatpush1.msra.mxu0 0.0
    %2132 = vmatprep.subr.mxu0 0.0
    %2133 = vmatpush1.msra.mxu0 0.0
    %2134 = vmatprep.subr.mxu0 0.0
    %2135 = vmatpush1.msra.mxu0 0.0
    %2136 = vmatprep.subr.mxu0 0.0
    %2137 = vmatpush1.msra.mxu0 0.0
    %2138 = vmatprep.subr.mxu0 0.0
    %2139 = vmatpush1.msra.mxu0 0.0
    %2140 = vmatprep.subr.mxu0 0.0
    %2141 = vmatpush1.msra.mxu0 0.0
    %2142 = vmatprep.subr.mxu0 0.0
    %2143 = vmatpush1.msra.mxu0 0.0
    %2144 = vmatprep.subr.mxu0 0.0
    %2145 = vmatpush1.msra.mxu0 0.0
    %2146 = vmatprep.subr.mxu0 0.0
    %2147 = vmatpush1.msra.mxu0 0.0
    %2148 = vmatprep.subr.mxu0 0.0
    %2149 = vmatpush1.msra.mxu0 0.0
    %2150 = vmatprep.subr.mxu0 0.0
    %2151 = vmatpush1.msra.mxu0 0.0
    %2152 = vmatprep.subr.mxu0 0.0
    %2153 = vmatpush1.msra.mxu0 0.0
    %2154 = vmatprep.subr.mxu0 0.0
    %2155 = vmatpush1.msra.mxu0 0.0
    %2156 = vmatprep.subr.mxu0 0.0
    %2157 = vmatpush1.msra.mxu0 0.0
    %2158 = vmatprep.subr.mxu0 0.0
    %2159 = vmatpush1.msra.mxu0 0.0
    %2160 = vmatprep.subr.mxu0 0.0
    %2161 = vmatpush1.msra.mxu0 0.0
    %2162 = vmatprep.subr.mxu0 0.0
    %2163 = vmatpush1.msra.mxu0 0.0
    %2164 = vmatprep.subr.mxu0 0.0
    %2165 = vmatpush1.msra.mxu0 0.0
    %2166 = vmatprep.subr.mxu0 0.0
    %2167 = vmatpush1.msra.mxu0 0.0
    %2168 = vmatprep.subr.mxu0 0.0
    %2169 = vmatpush1.msra.mxu0 0.0
    %2170 = vmatprep.subr.mxu0 0.0
    %2171 = vmatpush1.msra.mxu0 0.0
    %2172 = vmatprep.subr.mxu0 0.0
    %2173 = vmatpush1.msra.mxu0 0.0
    %2174 = vmatprep.subr.mxu0 0.0
    %2175 = vmatpush1.msra.mxu0 0.0
    %2176 = vmatprep.subr.mxu0 0.0
    %2177 = vmatpush1.msra.mxu0 0.0
    %2178 = vmatprep.subr.mxu0 0.0
    %2179 = vmatpush1.msra.mxu0 0.0
    %2180 = vmatprep.subr.mxu0 0.0
    %2181 = vmatpush1.msra.mxu0 0.0
    %2182 = vmatprep.subr.mxu0 0.0
    %2183 = vmatpush1.msra.mxu0 0.0
    %2184 = vmatprep.mubr.f32.mxu0 0.0
    %2185 = vmatmul.mubr.f32.gmra.mrb[0].mxu0 %v2118
    %v2186 = vpop.f32.mrb[0].mxu0
    %v2187 = vadd.f32 0.0, %v2186
    %v2188 = vpop.f32.mrb[0].mxu0
    %2189 = vdwg.mxu0
    %v2190 = vld [vmem:[%s23] sm:$0xff]
    %v2191 = vld [vmem:[%s23 + $0x8] sm:$0xff]
    %v2192 = vld [vmem:[%s23 + $0x10] sm:$0xff]
    %v2193 = vld [vmem:[%s23 + $0x18] sm:$0xff]
    %v2194 = vld [vmem:[%s23 + $0x20] sm:$0xff]
    %v2195 = vld [vmem:[%s23 + $0x28] sm:$0xff]
    %v2196 = vld [vmem:[%s23 + $0x30] sm:$0xff]
    %v2197 = vld [vmem:[%s23 + $0x38] sm:$0xff]
    %v2198 = vld [vmem:[%s23 + $0x40] sm:$0xff]
    %v2199 = vld [vmem:[%s23 + $0x48] sm:$0xff]
    %v2200 = vld [vmem:[%s23 + $0x50] sm:$0xff]
    %v2201 = vld [vmem:[%s23 + $0x58] sm:$0xff]
    %v2202 = vld [vmem:[%s23 + $0x60] sm:$0xff]
    %v2203 = vld [vmem:[%s23 + $0x68] sm:$0xff]
    %v2204 = vld [vmem:[%s23 + $0x70] sm:$0xff]
    %v2205 = vld [vmem:[%s23 + $0x78] sm:$0xff]
    %s2206 = scalar_lea.vmem [#allocation16], 8
    %v2207 = vld [vmem:[%s2206] sm:$0xff]
    %v2209 = vsel %vm2116, %v2207, 0
    %2211 = vmatprep.subr.mxu0 0.0
    %2212 = vmatpush1.msra.mxu0 %v2113
    %2213 = vmatprep.subr.mxu0 0.0
    %2214 = vmatpush1.msra.mxu0 %v2114
    %2215 = vmatprep.subr.mxu0 0.0
    %2216 = vmatpush1.msra.mxu0 0.0
    %2217 = vmatprep.subr.mxu0 0.0
    %2218 = vmatpush1.msra.mxu0 0.0
    %2219 = vmatprep.subr.mxu0 0.0
    %2220 = vmatpush1.msra.mxu0 0.0
    %2221 = vmatprep.subr.mxu0 0.0
    %2222 = vmatpush1.msra.mxu0 0.0
    %2223 = vmatprep.subr.mxu0 0.0
    %2224 = vmatpush1.msra.mxu0 0.0
    %2225 = vmatprep.subr.mxu0 0.0
    %2226 = vmatpush1.msra.mxu0 0.0
    %2227 = vmatprep.subr.mxu0 0.0
    %2228 = vmatpush1.msra.mxu0 0.0
    %2229 = vmatprep.subr.mxu0 0.0
    %2230 = vmatpush1.msra.mxu0 0.0
    %2231 = vmatprep.subr.mxu0 0.0
    %2232 = vmatpush1.msra.mxu0 0.0
    %2233 = vmatprep.subr.mxu0 0.0
    %2234 = vmatpush1.msra.mxu0 0.0
    %2235 = vmatprep.subr.mxu0 0.0
    %2236 = vmatpush1.msra.mxu0 0.0
    %2237 = vmatprep.subr.mxu0 0.0
    %2238 = vmatpush1.msra.mxu0 0.0
    %2239 = vmatprep.subr.mxu0 0.0
    %2240 = vmatpush1.msra.mxu0 0.0
    %2241 = vmatprep.subr.mxu0 0.0
    %2242 = vmatpush1.msra.mxu0 0.0
    %2243 = vmatprep.subr.mxu0 0.0
    %2244 = vmatpush1.msra.mxu0 0.0
    %2245 = vmatprep.subr.mxu0 0.0
    %2246 = vmatpush1.msra.mxu0 0.0
    %2247 = vmatprep.subr.mxu0 0.0
    %2248 = vmatpush1.msra.mxu0 0.0
    %2249 = vmatprep.subr.mxu0 0.0
    %2250 = vmatpush1.msra.mxu0 0.0
    %2251 = vmatprep.subr.mxu0 0.0
    %2252 = vmatpush1.msra.mxu0 0.0
    %2253 = vmatprep.subr.mxu0 0.0
    %2254 = vmatpush1.msra.mxu0 0.0
    %2255 = vmatprep.subr.mxu0 0.0
    %2256 = vmatpush1.msra.mxu0 0.0
    %2257 = vmatprep.subr.mxu0 0.0
    %2258 = vmatpush1.msra.mxu0 0.0
    %2259 = vmatprep.subr.mxu0 0.0
    %2260 = vmatpush1.msra.mxu0 0.0
    %2261 = vmatprep.subr.mxu0 0.0
    %2262 = vmatpush1.msra.mxu0 0.0
    %2263 = vmatprep.subr.mxu0 0.0
    %2264 = vmatpush1.msra.mxu0 0.0
    %2265 = vmatprep.subr.mxu0 0.0
    %2266 = vmatpush1.msra.mxu0 0.0
    %2267 = vmatprep.subr.mxu0 0.0
    %2268 = vmatpush1.msra.mxu0 0.0
    %2269 = vmatprep.subr.mxu0 0.0
    %2270 = vmatpush1.msra.mxu0 0.0
    %2271 = vmatprep.subr.mxu0 0.0
    %2272 = vmatpush1.msra.mxu0 0.0
    %2273 = vmatprep.subr.mxu0 0.0
    %2274 = vmatpush1.msra.mxu0 0.0
    %2275 = vmatprep.mubr.f32.mxu0 0.0
    %2276 = vmatmul.mubr.f32.gmra.mrb[0].mxu0 %v2209
    %v2277 = vpop.f32.mrb[0].mxu0
    %v2278 = vadd.f32 0.0, %v2277
    %v2279 = vpop.f32.mrb[0].mxu0
    %2280 = vdwg.mxu0
    %s2281 = scalar_lea.vmem %s23, 128
    %v2282 = vld [vmem:[%s2281] sm:$0xff]
    %v2283 = vld [vmem:[%s2281 + $0x8] sm:$0xff]
    %v2284 = vld [vmem:[%s2281 + $0x10] sm:$0xff]
    %v2285 = vld [vmem:[%s2281 + $0x18] sm:$0xff]
    %v2286 = vld [vmem:[%s2281 + $0x20] sm:$0xff]
    %v2287 = vld [vmem:[%s2281 + $0x28] sm:$0xff]
    %v2288 = vld [vmem:[%s2281 + $0x30] sm:$0xff]
    %v2289 = vld [vmem:[%s2281 + $0x38] sm:$0xff]
    %v2290 = vld [vmem:[%s2281 + $0x40] sm:$0xff]
    %v2291 = vld [vmem:[%s2281 + $0x48] sm:$0xff]
    %v2292 = vld [vmem:[%s2281 + $0x50] sm:$0xff]
    %v2293 = vld [vmem:[%s2281 + $0x58] sm:$0xff]
    %v2294 = vld [vmem:[%s2281 + $0x60] sm:$0xff]
    %v2295 = vld [vmem:[%s2281 + $0x68] sm:$0xff]
    %v2296 = vld [vmem:[%s2281 + $0x70] sm:$0xff]
    %v2297 = vld [vmem:[%s2281 + $0x78] sm:$0xff]
    %2298 = vmatprep.subr.mxu0 0.0
    %2299 = vmatpush1.msra.mxu0 %v2282
    %2300 = vmatprep.subr.mxu0 0.0
    %2301 = vmatpush1.msra.mxu0 %v2283
    %2302 = vmatprep.subr.mxu0 0.0
    %2303 = vmatpush1.msra.mxu0 %v2284
    %2304 = vmatprep.subr.mxu0 0.0
    %2305 = vmatpush1.msra.mxu0 %v2285
    %2306 = vmatprep.subr.mxu0 0.0
    %2307 = vmatpush1.msra.mxu0 %v2286
    %2308 = vmatprep.subr.mxu0 0.0
    %2309 = vmatpush1.msra.mxu0 %v2287
    %2310 = vmatprep.subr.mxu0 0.0
    %2311 = vmatpush1.msra.mxu0 %v2288
    %2312 = vmatprep.subr.mxu0 0.0
    %2313 = vmatpush1.msra.mxu0 %v2289
    %2314 = vmatprep.subr.mxu0 0.0
    %2315 = vmatpush1.msra.mxu0 %v2290
    %2316 = vmatprep.subr.mxu0 0.0
    %2317 = vmatpush1.msra.mxu0 %v2291
    %2318 = vmatprep.subr.mxu0 0.0
    %2319 = vmatpush1.msra.mxu0 %v2292
    %2320 = vmatprep.subr.mxu0 0.0
    %2321 = vmatpush1.msra.mxu0 %v2293
    %2322 = vmatprep.subr.mxu0 0.0
    %2323 = vmatpush1.msra.mxu0 %v2294
    %2324 = vmatprep.subr.mxu0 0.0
    %2325 = vmatpush1.msra.mxu0 %v2295
    %2326 = vmatprep.subr.mxu0 0.0
    %2327 = vmatpush1.msra.mxu0 %v2296
    %2328 = vmatprep.subr.mxu0 0.0
    %2329 = vmatpush1.msra.mxu0 %v2297
    %2330 = vmatprep.subr.mxu0 0.0
    %2331 = vmatpush1.msra.mxu0 0.0
    %2332 = vmatprep.subr.mxu0 0.0
    %2333 = vmatpush1.msra.mxu0 0.0
    %2334 = vmatprep.subr.mxu0 0.0
    %2335 = vmatpush1.msra.mxu0 0.0
    %2336 = vmatprep.subr.mxu0 0.0
    %2337 = vmatpush1.msra.mxu0 0.0
    %2338 = vmatprep.subr.mxu0 0.0
    %2339 = vmatpush1.msra.mxu0 0.0
    %2340 = vmatprep.subr.mxu0 0.0
    %2341 = vmatpush1.msra.mxu0 0.0
    %2342 = vmatprep.subr.mxu0 0.0
    %2343 = vmatpush1.msra.mxu0 0.0
    %2344 = vmatprep.subr.mxu0 0.0
    %2345 = vmatpush1.msra.mxu0 0.0
    %2346 = vmatprep.subr.mxu0 0.0
    %2347 = vmatpush1.msra.mxu0 0.0
    %2348 = vmatprep.subr.mxu0 0.0
    %2349 = vmatpush1.msra.mxu0 0.0
    %2350 = vmatprep.subr.mxu0 0.0
    %2351 = vmatpush1.msra.mxu0 0.0
    %2352 = vmatprep.subr.mxu0 0.0
    %2353 = vmatpush1.msra.mxu0 0.0
    %2354 = vmatprep.subr.mxu0 0.0
    %2355 = vmatpush1.msra.mxu0 0.0
    %2356 = vmatprep.subr.mxu0 0.0
    %2357 = vmatpush1.msra.mxu0 0.0
    %2358 = vmatprep.subr.mxu0 0.0
    %2359 = vmatpush1.msra.mxu0 0.0
    %2360 = vmatprep.subr.mxu0 0.0
    %2361 = vmatpush1.msra.mxu0 0.0
    %2362 = vmatprep.mubr.f32.mxu0 0.0
    %2363 = vmatmul.mubr.f32.gmra.mrb[0].mxu0 %v2278
    %v2364 = vpop.f32.mrb[0].mxu0
    %v2365 = vadd.f32 0.0, %v2364
    %v2366 = vpop.f32.mrb[0].mxu0
    %2367 = vdwg.mxu0
    %2368 = vmatprep.subr.mxu0 0.0
    %2369 = vmatpush1.msra.mxu0 %v2190
    %2370 = vmatprep.subr.mxu0 0.0
    %2371 = vmatpush1.msra.mxu0 %v2191
    %2372 = vmatprep.subr.mxu0 0.0
    %2373 = vmatpush1.msra.mxu0 %v2192
    %2374 = vmatprep.subr.mxu0 0.0
    %2375 = vmatpush1.msra.mxu0 %v2193
    %2376 = vmatprep.subr.mxu0 0.0
    %2377 = vmatpush1.msra.mxu0 %v2194
    %2378 = vmatprep.subr.mxu0 0.0
    %2379 = vmatpush1.msra.mxu0 %v2195
    %2380 = vmatprep.subr.mxu0 0.0
    %2381 = vmatpush1.msra.mxu0 %v2196
    %2382 = vmatprep.subr.mxu0 0.0
    %2383 = vmatpush1.msra.mxu0 %v2197
    %2384 = vmatprep.subr.mxu0 0.0
    %2385 = vmatpush1.msra.mxu0 %v2198
    %2386 = vmatprep.subr.mxu0 0.0
    %2387 = vmatpush1.msra.mxu0 %v2199
    %2388 = vmatprep.subr.mxu0 0.0
    %2389 = vmatpush1.msra.mxu0 %v2200
    %2390 = vmatprep.subr.mxu0 0.0
    %2391 = vmatpush1.msra.mxu0 %v2201
    %2392 = vmatprep.subr.mxu0 0.0
    %2393 = vmatpush1.msra.mxu0 %v2202
    %2394 = vmatprep.subr.mxu0 0.0
    %2395 = vmatpush1.msra.mxu0 %v2203
    %2396 = vmatprep.subr.mxu0 0.0
    %2397 = vmatpush1.msra.mxu0 %v2204
    %2398 = vmatprep.subr.mxu0 0.0
    %2399 = vmatpush1.msra.mxu0 %v2205
    %2400 = vmatprep.subr.mxu0 0.0
    %2401 = vmatpush1.msra.mxu0 0.0
    %2402 = vmatprep.subr.mxu0 0.0
    %2403 = vmatpush1.msra.mxu0 0.0
    %2404 = vmatprep.subr.mxu0 0.0
    %2405 = vmatpush1.msra.mxu0 0.0
    %2406 = vmatprep.subr.mxu0 0.0
    %2407 = vmatpush1.msra.mxu0 0.0
    %2408 = vmatprep.subr.mxu0 0.0
    %2409 = vmatpush1.msra.mxu0 0.0
    %2410 = vmatprep.subr.mxu0 0.0
    %2411 = vmatpush1.msra.mxu0 0.0
    %2412 = vmatprep.subr.mxu0 0.0
    %2413 = vmatpush1.msra.mxu0 0.0
    %2414 = vmatprep.subr.mxu0 0.0
    %2415 = vmatpush1.msra.mxu0 0.0
    %2416 = vmatprep.subr.mxu0 0.0
    %2417 = vmatpush1.msra.mxu0 0.0
    %2418 = vmatprep.subr.mxu0 0.0
    %2419 = vmatpush1.msra.mxu0 0.0
    %2420 = vmatprep.subr.mxu0 0.0
    %2421 = vmatpush1.msra.mxu0 0.0
    %2422 = vmatprep.subr.mxu0 0.0
    %2423 = vmatpush1.msra.mxu0 0.0
    %2424 = vmatprep.subr.mxu0 0.0
    %2425 = vmatpush1.msra.mxu0 0.0
    %2426 = vmatprep.subr.mxu0 0.0
    %2427 = vmatpush1.msra.mxu0 0.0
    %2428 = vmatprep.subr.mxu0 0.0
    %2429 = vmatpush1.msra.mxu0 0.0
    %2430 = vmatprep.subr.mxu0 0.0
    %2431 = vmatpush1.msra.mxu0 0.0
    %2432 = vmatprep.mubr.f32.mxu0 0.0
    %2433 = vmatmul.mubr.f32.gmra.mrb[0].mxu0 %v2187
    %v2434 = vpop.f32.mrb[0].mxu0
    %v2435 = vadd.f32 %v2365, %v2434
    %v2436 = vpop.f32.mrb[0].mxu0
    %2437 = vdwg.mxu0
    %s2438 = scalar_lea.vmem [#allocation16], 16
    %v2439 = vld [vmem:[%s2438] sm:$0xff]
    %v2441 = vsel %vm2116, %v2439, 0
    %2443 = vmatprep.subr.mxu0 0.0
    %2444 = vmatpush1.msra.mxu0 %v2113
    %2445 = vmatprep.subr.mxu0 0.0
    %2446 = vmatpush1.msra.mxu0 %v2114
    %2447 = vmatprep.subr.mxu0 0.0
    %2448 = vmatpush1.msra.mxu0 0.0
    %2449 = vmatprep.subr.mxu0 0.0
    %2450 = vmatpush1.msra.mxu0 0.0
    %2451 = vmatprep.subr.mxu0 0.0
    %2452 = vmatpush1.msra.mxu0 0.0
    %2453 = vmatprep.subr.mxu0 0.0
    %2454 = vmatpush1.msra.mxu0 0.0
    %2455 = vmatprep.subr.mxu0 0.0
    %2456 = vmatpush1.msra.mxu0 0.0
    %2457 = vmatprep.subr.mxu0 0.0
    %2458 = vmatpush1.msra.mxu0 0.0
    %2459 = vmatprep.subr.mxu0 0.0
    %2460 = vmatpush1.msra.mxu0 0.0
    %2461 = vmatprep.subr.mxu0 0.0
    %2462 = vmatpush1.msra.mxu0 0.0
    %2463 = vmatprep.subr.mxu0 0.0
    %2464 = vmatpush1.msra.mxu0 0.0
    %2465 = vmatprep.subr.mxu0 0.0
    %2466 = vmatpush1.msra.mxu0 0.0
    %2467 = vmatprep.subr.mxu0 0.0
    %2468 = vmatpush1.msra.mxu0 0.0
    %2469 = vmatprep.subr.mxu0 0.0
    %2470 = vmatpush1.msra.mxu0 0.0
    %2471 = vmatprep.subr.mxu0 0.0
    %2472 = vmatpush1.msra.mxu0 0.0
    %2473 = vmatprep.subr.mxu0 0.0
    %2474 = vmatpush1.msra.mxu0 0.0
    %2475 = vmatprep.subr.mxu0 0.0
    %2476 = vmatpush1.msra.mxu0 0.0
    %2477 = vmatprep.subr.mxu0 0.0
    %2478 = vmatpush1.msra.mxu0 0.0
    %2479 = vmatprep.subr.mxu0 0.0
    %2480 = vmatpush1.msra.mxu0 0.0
    %2481 = vmatprep.subr.mxu0 0.0
    %2482 = vmatpush1.msra.mxu0 0.0
    %2483 = vmatprep.subr.mxu0 0.0
    %2484 = vmatpush1.msra.mxu0 0.0
    %2485 = vmatprep.subr.mxu0 0.0
    %2486 = vmatpush1.msra.mxu0 0.0
    %2487 = vmatprep.subr.mxu0 0.0
    %2488 = vmatpush1.msra.mxu0 0.0
    %2489 = vmatprep.subr.mxu0 0.0
    %2490 = vmatpush1.msra.mxu0 0.0
    %2491 = vmatprep.subr.mxu0 0.0
    %2492 = vmatpush1.msra.mxu0 0.0
    %2493 = vmatprep.subr.mxu0 0.0
    %2494 = vmatpush1.msra.mxu0 0.0
    %2495 = vmatprep.subr.mxu0 0.0
    %2496 = vmatpush1.msra.mxu0 0.0
    %2497 = vmatprep.subr.mxu0 0.0
    %2498 = vmatpush1.msra.mxu0 0.0
    %2499 = vmatprep.subr.mxu0 0.0
    %2500 = vmatpush1.msra.mxu0 0.0
    %2501 = vmatprep.subr.mxu0 0.0
    %2502 = vmatpush1.msra.mxu0 0.0
    %2503 = vmatprep.subr.mxu0 0.0
    %2504 = vmatpush1.msra.mxu0 0.0
    %2505 = vmatprep.subr.mxu0 0.0
    %2506 = vmatpush1.msra.mxu0 0.0
    %2507 = vmatprep.mubr.f32.mxu0 0.0
    %2508 = vmatmul.mubr.f32.gmra.mrb[0].mxu0 %v2441
    %v2509 = vpop.f32.mrb[0].mxu0
    %v2510 = vadd.f32 0.0, %v2509
    %v2511 = vpop.f32.mrb[0].mxu0
    %2512 = vdwg.mxu0
    %s2513 = scalar_lea.vmem %s23, 256
    %v2514 = vld [vmem:[%s2513] sm:$0xff]
    %v2515 = vld [vmem:[%s2513 + $0x8] sm:$0xff]
    %v2516 = vld [vmem:[%s2513 + $0x10] sm:$0xff]
    %v2517 = vld [vmem:[%s2513 + $0x18] sm:$0xff]
    %v2518 = vld [vmem:[%s2513 + $0x20] sm:$0xff]
    %v2519 = vld [vmem:[%s2513 + $0x28] sm:$0xff]
    %v2520 = vld [vmem:[%s2513 + $0x30] sm:$0xff]
    %v2521 = vld [vmem:[%s2513 + $0x38] sm:$0xff]
    %v2522 = vld [vmem:[%s2513 + $0x40] sm:$0xff]
    %v2523 = vld [vmem:[%s2513 + $0x48] sm:$0xff]
    %v2524 = vld [vmem:[%s2513 + $0x50] sm:$0xff]
    %v2525 = vld [vmem:[%s2513 + $0x58] sm:$0xff]
    %v2526 = vld [vmem:[%s2513 + $0x60] sm:$0xff]
    %v2527 = vld [vmem:[%s2513 + $0x68] sm:$0xff]
    %v2528 = vld [vmem:[%s2513 + $0x70] sm:$0xff]
    %v2529 = vld [vmem:[%s2513 + $0x78] sm:$0xff]
    %2530 = vmatprep.subr.mxu0 0.0
    %2531 = vmatpush1.msra.mxu0 %v2514
    %2532 = vmatprep.subr.mxu0 0.0
    %2533 = vmatpush1.msra.mxu0 %v2515
    %2534 = vmatprep.subr.mxu0 0.0
    %2535 = vmatpush1.msra.mxu0 %v2516
    %2536 = vmatprep.subr.mxu0 0.0
    %2537 = vmatpush1.msra.mxu0 %v2517
    %2538 = vmatprep.subr.mxu0 0.0
    %2539 = vmatpush1.msra.mxu0 %v2518
    %2540 = vmatprep.subr.mxu0 0.0
    %2541 = vmatpush1.msra.mxu0 %v2519
    %2542 = vmatprep.subr.mxu0 0.0
    %2543 = vmatpush1.msra.mxu0 %v2520
    %2544 = vmatprep.subr.mxu0 0.0
    %2545 = vmatpush1.msra.mxu0 %v2521
    %2546 = vmatprep.subr.mxu0 0.0
    %2547 = vmatpush1.msra.mxu0 %v2522
    %2548 = vmatprep.subr.mxu0 0.0
    %2549 = vmatpush1.msra.mxu0 %v2523
    %2550 = vmatprep.subr.mxu0 0.0
    %2551 = vmatpush1.msra.mxu0 %v2524
    %2552 = vmatprep.subr.mxu0 0.0
    %2553 = vmatpush1.msra.mxu0 %v2525
    %2554 = vmatprep.subr.mxu0 0.0
    %2555 = vmatpush1.msra.mxu0 %v2526
    %2556 = vmatprep.subr.mxu0 0.0
    %2557 = vmatpush1.msra.mxu0 %v2527
    %2558 = vmatprep.subr.mxu0 0.0
    %2559 = vmatpush1.msra.mxu0 %v2528
    %2560 = vmatprep.subr.mxu0 0.0
    %2561 = vmatpush1.msra.mxu0 %v2529
    %2562 = vmatprep.subr.mxu0 0.0
    %2563 = vmatpush1.msra.mxu0 0.0
    %2564 = vmatprep.subr.mxu0 0.0
    %2565 = vmatpush1.msra.mxu0 0.0
    %2566 = vmatprep.subr.mxu0 0.0
    %2567 = vmatpush1.msra.mxu0 0.0
    %2568 = vmatprep.subr.mxu0 0.0
    %2569 = vmatpush1.msra.mxu0 0.0
    %2570 = vmatprep.subr.mxu0 0.0
    %2571 = vmatpush1.msra.mxu0 0.0
    %2572 = vmatprep.subr.mxu0 0.0
    %2573 = vmatpush1.msra.mxu0 0.0
    %2574 = vmatprep.subr.mxu0 0.0
    %2575 = vmatpush1.msra.mxu0 0.0
    %2576 = vmatprep.subr.mxu0 0.0
    %2577 = vmatpush1.msra.mxu0 0.0
    %2578 = vmatprep.subr.mxu0 0.0
    %2579 = vmatpush1.msra.mxu0 0.0
    %2580 = vmatprep.subr.mxu0 0.0
    %2581 = vmatpush1.msra.mxu0 0.0
    %2582 = vmatprep.subr.mxu0 0.0
    %2583 = vmatpush1.msra.mxu0 0.0
    %2584 = vmatprep.subr.mxu0 0.0
    %2585 = vmatpush1.msra.mxu0 0.0
    %2586 = vmatprep.subr.mxu0 0.0
    %2587 = vmatpush1.msra.mxu0 0.0
    %2588 = vmatprep.subr.mxu0 0.0
    %2589 = vmatpush1.msra.mxu0 0.0
    %2590 = vmatprep.subr.mxu0 0.0
    %2591 = vmatpush1.msra.mxu0 0.0
    %2592 = vmatprep.subr.mxu0 0.0
    %2593 = vmatpush1.msra.mxu0 0.0
    %2594 = vmatprep.mubr.f32.mxu0 0.0
    %2595 = vmatmul.mubr.f32.gmra.mrb[0].mxu0 %v2510
    %v2596 = vpop.f32.mrb[0].mxu0
    %v2597 = vadd.f32 0.0, %v2596
    %v2598 = vpop.f32.mrb[0].mxu0
    %2599 = vdwg.mxu0
    %v2600 = vadd.f32 %v2435, %v2597
    %s2601 = scalar_lea.vmem [#allocation16], 24
    %v2602 = vld [vmem:[%s2601] sm:$0xff]
    %v2604 = vsel %vm2116, %v2602, 0
    %2606 = vmatprep.subr.mxu0 0.0
    %2607 = vmatpush1.msra.mxu0 %v2113
    %2608 = vmatprep.subr.mxu0 0.0
    %2609 = vmatpush1.msra.mxu0 %v2114
    %2610 = vmatprep.subr.mxu0 0.0
    %2611 = vmatpush1.msra.mxu0 0.0
    %2612 = vmatprep.subr.mxu0 0.0
    %2613 = vmatpush1.msra.mxu0 0.0
    %2614 = vmatprep.subr.mxu0 0.0
    %2615 = vmatpush1.msra.mxu0 0.0
    %2616 = vmatprep.subr.mxu0 0.0
    %2617 = vmatpush1.msra.mxu0 0.0
    %2618 = vmatprep.subr.mxu0 0.0
    %2619 = vmatpush1.msra.mxu0 0.0
    %2620 = vmatprep.subr.mxu0 0.0
    %2621 = vmatpush1.msra.mxu0 0.0
    %2622 = vmatprep.subr.mxu0 0.0
    %2623 = vmatpush1.msra.mxu0 0.0
    %2624 = vmatprep.subr.mxu0 0.0
    %2625 = vmatpush1.msra.mxu0 0.0
    %2626 = vmatprep.subr.mxu0 0.0
    %2627 = vmatpush1.msra.mxu0 0.0
    %2628 = vmatprep.subr.mxu0 0.0
    %2629 = vmatpush1.msra.mxu0 0.0
    %2630 = vmatprep.subr.mxu0 0.0
    %2631 = vmatpush1.msra.mxu0 0.0
    %2632 = vmatprep.subr.mxu0 0.0
    %2633 = vmatpush1.msra.mxu0 0.0
    %2634 = vmatprep.subr.mxu0 0.0
    %2635 = vmatpush1.msra.mxu0 0.0
    %2636 = vmatprep.subr.mxu0 0.0
    %2637 = vmatpush1.msra.mxu0 0.0
    %2638 = vmatprep.subr.mxu0 0.0
    %2639 = vmatpush1.msra.mxu0 0.0
    %2640 = vmatprep.subr.mxu0 0.0
    %2641 = vmatpush1.msra.mxu0 0.0
    %2642 = vmatprep.subr.mxu0 0.0
    %2643 = vmatpush1.msra.mxu0 0.0
    %2644 = vmatprep.subr.mxu0 0.0
    %2645 = vmatpush1.msra.mxu0 0.0
    %2646 = vmatprep.subr.mxu0 0.0
    %2647 = vmatpush1.msra.mxu0 0.0
    %2648 = vmatprep.subr.mxu0 0.0
    %2649 = vmatpush1.msra.mxu0 0.0
    %2650 = vmatprep.subr.mxu0 0.0
    %2651 = vmatpush1.msra.mxu0 0.0
    %2652 = vmatprep.subr.mxu0 0.0
    %2653 = vmatpush1.msra.mxu0 0.0
    %2654 = vmatprep.subr.mxu0 0.0
    %2655 = vmatpush1.msra.mxu0 0.0
    %2656 = vmatprep.subr.mxu0 0.0
    %2657 = vmatpush1.msra.mxu0 0.0
    %2658 = vmatprep.subr.mxu0 0.0
    %2659 = vmatpush1.msra.mxu0 0.0
    %2660 = vmatprep.subr.mxu0 0.0
    %2661 = vmatpush1.msra.mxu0 0.0
    %2662 = vmatprep.subr.mxu0 0.0
    %2663 = vmatpush1.msra.mxu0 0.0
    %2664 = vmatprep.subr.mxu0 0.0
    %2665 = vmatpush1.msra.mxu0 0.0
    %2666 = vmatprep.subr.mxu0 0.0
    %2667 = vmatpush1.msra.mxu0 0.0
    %2668 = vmatprep.subr.mxu0 0.0
    %2669 = vmatpush1.msra.mxu0 0.0
    %2670 = vmatprep.mubr.f32.mxu0 0.0
    %2671 = vmatmul.mubr.f32.gmra.mrb[0].mxu0 %v2604
    %v2672 = vpop.f32.mrb[0].mxu0
    %v2673 = vadd.f32 0.0, %v2672
    %v2674 = vpop.f32.mrb[0].mxu0
    %2675 = vdwg.mxu0
    %s2676 = scalar_lea.vmem %s23, 384
    %v2677 = vld [vmem:[%s2676] sm:$0xff]
    %v2678 = vld [vmem:[%s2676 + $0x8] sm:$0xff]
    %v2679 = vld [vmem:[%s2676 + $0x10] sm:$0xff]
    %v2680 = vld [vmem:[%s2676 + $0x18] sm:$0xff]
    %v2681 = vld [vmem:[%s2676 + $0x20] sm:$0xff]
    %v2682 = vld [vmem:[%s2676 + $0x28] sm:$0xff]
    %v2683 = vld [vmem:[%s2676 + $0x30] sm:$0xff]
    %v2684 = vld [vmem:[%s2676 + $0x38] sm:$0xff]
    %v2685 = vld [vmem:[%s2676 + $0x40] sm:$0xff]
    %v2686 = vld [vmem:[%s2676 + $0x48] sm:$0xff]
    %v2687 = vld [vmem:[%s2676 + $0x50] sm:$0xff]
    %v2688 = vld [vmem:[%s2676 + $0x58] sm:$0xff]
    %v2689 = vld [vmem:[%s2676 + $0x60] sm:$0xff]
    %v2690 = vld [vmem:[%s2676 + $0x68] sm:$0xff]
    %v2691 = vld [vmem:[%s2676 + $0x70] sm:$0xff]
    %v2692 = vld [vmem:[%s2676 + $0x78] sm:$0xff]
    %2693 = vmatprep.subr.mxu0 0.0
    %2694 = vmatpush1.msra.mxu0 %v2677
    %2695 = vmatprep.subr.mxu0 0.0
    %2696 = vmatpush1.msra.mxu0 %v2678
    %2697 = vmatprep.subr.mxu0 0.0
    %2698 = vmatpush1.msra.mxu0 %v2679
    %2699 = vmatprep.subr.mxu0 0.0
    %2700 = vmatpush1.msra.mxu0 %v2680
    %2701 = vmatprep.subr.mxu0 0.0
    %2702 = vmatpush1.msra.mxu0 %v2681
    %2703 = vmatprep.subr.mxu0 0.0
    %2704 = vmatpush1.msra.mxu0 %v2682
    %2705 = vmatprep.subr.mxu0 0.0
    %2706 = vmatpush1.msra.mxu0 %v2683
    %2707 = vmatprep.subr.mxu0 0.0
    %2708 = vmatpush1.msra.mxu0 %v2684
    %2709 = vmatprep.subr.mxu0 0.0
    %2710 = vmatpush1.msra.mxu0 %v2685
    %2711 = vmatprep.subr.mxu0 0.0
    %2712 = vmatpush1.msra.mxu0 %v2686
    %2713 = vmatprep.subr.mxu0 0.0
    %2714 = vmatpush1.msra.mxu0 %v2687
    %2715 = vmatprep.subr.mxu0 0.0
    %2716 = vmatpush1.msra.mxu0 %v2688
    %2717 = vmatprep.subr.mxu0 0.0
    %2718 = vmatpush1.msra.mxu0 %v2689
    %2719 = vmatprep.subr.mxu0 0.0
    %2720 = vmatpush1.msra.mxu0 %v2690
    %2721 = vmatprep.subr.mxu0 0.0
    %2722 = vmatpush1.msra.mxu0 %v2691
    %2723 = vmatprep.subr.mxu0 0.0
    %2724 = vmatpush1.msra.mxu0 %v2692
    %2725 = vmatprep.subr.mxu0 0.0
    %2726 = vmatpush1.msra.mxu0 0.0
    %2727 = vmatprep.subr.mxu0 0.0
    %2728 = vmatpush1.msra.mxu0 0.0
    %2729 = vmatprep.subr.mxu0 0.0
    %2730 = vmatpush1.msra.mxu0 0.0
    %2731 = vmatprep.subr.mxu0 0.0
    %2732 = vmatpush1.msra.mxu0 0.0
    %2733 = vmatprep.subr.mxu0 0.0
    %2734 = vmatpush1.msra.mxu0 0.0
    %2735 = vmatprep.subr.mxu0 0.0
    %2736 = vmatpush1.msra.mxu0 0.0
    %2737 = vmatprep.subr.mxu0 0.0
    %2738 = vmatpush1.msra.mxu0 0.0
    %2739 = vmatprep.subr.mxu0 0.0
    %2740 = vmatpush1.msra.mxu0 0.0
    %2741 = vmatprep.subr.mxu0 0.0
    %2742 = vmatpush1.msra.mxu0 0.0
    %2743 = vmatprep.subr.mxu0 0.0
    %2744 = vmatpush1.msra.mxu0 0.0
    %2745 = vmatprep.subr.mxu0 0.0
    %2746 = vmatpush1.msra.mxu0 0.0
    %2747 = vmatprep.subr.mxu0 0.0
    %2748 = vmatpush1.msra.mxu0 0.0
    %2749 = vmatprep.subr.mxu0 0.0
    %2750 = vmatpush1.msra.mxu0 0.0
    %2751 = vmatprep.subr.mxu0 0.0
    %2752 = vmatpush1.msra.mxu0 0.0
    %2753 = vmatprep.subr.mxu0 0.0
    %2754 = vmatpush1.msra.mxu0 0.0
    %2755 = vmatprep.subr.mxu0 0.0
    %2756 = vmatpush1.msra.mxu0 0.0
    %2757 = vmatprep.mubr.f32.mxu0 0.0
    %2758 = vmatmul.mubr.f32.gmra.mrb[0].mxu0 %v2673
    %v2759 = vpop.f32.mrb[0].mxu0
    %v2760 = vadd.f32 0.0, %v2759
    %v2761 = vpop.f32.mrb[0].mxu0
    %2762 = vdwg.mxu0
    %v2763 = vadd.f32 %v2600, %v2760
    %v2764 = vld [vmem:[%s25] sm:$0x1]
    %v2766 = vlaneseq
    %v2767 = vshrl.u32 %v2766, 7
    %v2768 = vsub.s32 0, %v2767
    %v2769 = vrot.slane %v2764, %v2768
    %v2771 = vadd.f32 %v2763, %v2769
    %v2772 = vld [vmem:[#allocation20] sm:$0xff]
    %v2773 = vld [vmem:[#allocation20 + $0x8] sm:$0xff]
    %v2774 = vld [vmem:[#allocation20 + $0x10] sm:$0xff]
    %v2775 = vld [vmem:[#allocation20 + $0x18] sm:$0xff]
    %v2776 = vld [vmem:[#allocation20 + $0x20] sm:$0xff]
    %v2777 = vld [vmem:[#allocation20 + $0x28] sm:$0xff]
    %v2778 = vld [vmem:[#allocation20 + $0x30] sm:$0xff]
    %v2779 = vld [vmem:[#allocation20 + $0x38] sm:$0xff]
    %v2780 = vld [vmem:[#allocation20 + $0x40] sm:$0xff]
    %v2781 = vld [vmem:[#allocation20 + $0x48] sm:$0xff]
    %v2782 = vld [vmem:[#allocation20 + $0x50] sm:$0xff]
    %v2783 = vld [vmem:[#allocation20 + $0x58] sm:$0xff]
    %v2784 = vld [vmem:[#allocation20 + $0x60] sm:$0xff]
    %v2785 = vld [vmem:[#allocation20 + $0x68] sm:$0xff]
    %v2786 = vld [vmem:[#allocation20 + $0x70] sm:$0xff]
    %v2787 = vld [vmem:[#allocation20 + $0x78] sm:$0xff]
    %2788 = vmatprep.subr.mxu0 0.0
    %2789 = vmatpush1.msra.mxu0 %v2772
    %2790 = vmatprep.subr.mxu0 0.0
    %2791 = vmatpush1.msra.mxu0 %v2773
    %2792 = vmatprep.subr.mxu0 0.0
    %2793 = vmatpush1.msra.mxu0 %v2774
    %2794 = vmatprep.subr.mxu0 0.0
    %2795 = vmatpush1.msra.mxu0 %v2775
    %2796 = vmatprep.subr.mxu0 0.0
    %2797 = vmatpush1.msra.mxu0 %v2776
    %2798 = vmatprep.subr.mxu0 0.0
    %2799 = vmatpush1.msra.mxu0 %v2777
    %2800 = vmatprep.subr.mxu0 0.0
    %2801 = vmatpush1.msra.mxu0 %v2778
    %2802 = vmatprep.subr.mxu0 0.0
    %2803 = vmatpush1.msra.mxu0 %v2779
    %2804 = vmatprep.subr.mxu0 0.0
    %2805 = vmatpush1.msra.mxu0 %v2780
    %2806 = vmatprep.subr.mxu0 0.0
    %2807 = vmatpush1.msra.mxu0 %v2781
    %2808 = vmatprep.subr.mxu0 0.0
    %2809 = vmatpush1.msra.mxu0 %v2782
    %2810 = vmatprep.subr.mxu0 0.0
    %2811 = vmatpush1.msra.mxu0 %v2783
    %2812 = vmatprep.subr.mxu0 0.0
    %2813 = vmatpush1.msra.mxu0 %v2784
    %2814 = vmatprep.subr.mxu0 0.0
    %2815 = vmatpush1.msra.mxu0 %v2785
    %2816 = vmatprep.subr.mxu0 0.0
    %2817 = vmatpush1.msra.mxu0 %v2786
    %2818 = vmatprep.subr.mxu0 0.0
    %2819 = vmatpush1.msra.mxu0 %v2787
    %2820 = vmatprep.subr.mxu0 0.0
    %2821 = vmatpush1.msra.mxu0 0.0
    %2822 = vmatprep.subr.mxu0 0.0
    %2823 = vmatpush1.msra.mxu0 0.0
    %2824 = vmatprep.subr.mxu0 0.0
    %2825 = vmatpush1.msra.mxu0 0.0
    %2826 = vmatprep.subr.mxu0 0.0
    %2827 = vmatpush1.msra.mxu0 0.0
    %2828 = vmatprep.subr.mxu0 0.0
    %2829 = vmatpush1.msra.mxu0 0.0
    %2830 = vmatprep.subr.mxu0 0.0
    %2831 = vmatpush1.msra.mxu0 0.0
    %2832 = vmatprep.subr.mxu0 0.0
    %2833 = vmatpush1.msra.mxu0 0.0
    %2834 = vmatprep.subr.mxu0 0.0
    %2835 = vmatpush1.msra.mxu0 0.0
    %2836 = vmatprep.subr.mxu0 0.0
    %2837 = vmatpush1.msra.mxu0 0.0
    %2838 = vmatprep.subr.mxu0 0.0
    %2839 = vmatpush1.msra.mxu0 0.0
    %2840 = vmatprep.subr.mxu0 0.0
    %2841 = vmatpush1.msra.mxu0 0.0
    %2842 = vmatprep.subr.mxu0 0.0
    %2843 = vmatpush1.msra.mxu0 0.0
    %2844 = vmatprep.subr.mxu0 0.0
    %2845 = vmatpush1.msra.mxu0 0.0
    %2846 = vmatprep.subr.mxu0 0.0
    %2847 = vmatpush1.msra.mxu0 0.0
    %2848 = vmatprep.subr.mxu0 0.0
    %2849 = vmatpush1.msra.mxu0 0.0
    %2850 = vmatprep.subr.mxu0 0.0
    %2851 = vmatpush1.msra.mxu0 0.0
    %2852 = vmatprep.mubr.f32.mxu0 0.0
    %2853 = vmatmul.mubr.f32.gmra.mrb[0].mxu0 %v2771
    %v2854 = vpop.f32.mrb[0].mxu0
    %v2855 = vadd.f32 0.0, %v2854
    %v2856 = vpop.f32.mrb[0].mxu0
    %2857 = vdwg.mxu0
    %v2858 = vsub.f32 %v2771, %v2855
    %v2859 = vmul.f32 %v2858, %v2858
    %2860 = vmatprep.subr.mxu0 0.0
    %2861 = vmatpush1.msra.mxu0 %v2772
    %2862 = vmatprep.subr.mxu0 0.0
    %2863 = vmatpush1.msra.mxu0 %v2773
    %2864 = vmatprep.subr.mxu0 0.0
    %2865 = vmatpush1.msra.mxu0 %v2774
    %2866 = vmatprep.subr.mxu0 0.0
    %2867 = vmatpush1.msra.mxu0 %v2775
    %2868 = vmatprep.subr.mxu0 0.0
    %2869 = vmatpush1.msra.mxu0 %v2776
    %2870 = vmatprep.subr.mxu0 0.0
    %2871 = vmatpush1.msra.mxu0 %v2777
    %2872 = vmatprep.subr.mxu0 0.0
    %2873 = vmatpush1.msra.mxu0 %v2778
    %2874 = vmatprep.subr.mxu0 0.0
    %2875 = vmatpush1.msra.mxu0 %v2779
    %2876 = vmatprep.subr.mxu0 0.0
    %2877 = vmatpush1.msra.mxu0 %v2780
    %2878 = vmatprep.subr.mxu0 0.0
    %2879 = vmatpush1.msra.mxu0 %v2781
    %2880 = vmatprep.subr.mxu0 0.0
    %2881 = vmatpush1.msra.mxu0 %v2782
    %2882 = vmatprep.subr.mxu0 0.0
    %2883 = vmatpush1.msra.mxu0 %v2783
    %2884 = vmatprep.subr.mxu0 0.0
    %2885 = vmatpush1.msra.mxu0 %v2784
    %2886 = vmatprep.subr.mxu0 0.0
    %2887 = vmatpush1.msra.mxu0 %v2785
    %2888 = vmatprep.subr.mxu0 0.0
    %2889 = vmatpush1.msra.mxu0 %v2786
    %2890 = vmatprep.subr.mxu0 0.0
    %2891 = vmatpush1.msra.mxu0 %v2787
    %2892 = vmatprep.subr.mxu0 0.0
    %2893 = vmatpush1.msra.mxu0 0.0
    %2894 = vmatprep.subr.mxu0 0.0
    %2895 = vmatpush1.msra.mxu0 0.0
    %2896 = vmatprep.subr.mxu0 0.0
    %2897 = vmatpush1.msra.mxu0 0.0
    %2898 = vmatprep.subr.mxu0 0.0
    %2899 = vmatpush1.msra.mxu0 0.0
    %2900 = vmatprep.subr.mxu0 0.0
    %2901 = vmatpush1.msra.mxu0 0.0
    %2902 = vmatprep.subr.mxu0 0.0
    %2903 = vmatpush1.msra.mxu0 0.0
    %2904 = vmatprep.subr.mxu0 0.0
    %2905 = vmatpush1.msra.mxu0 0.0
    %2906 = vmatprep.subr.mxu0 0.0
    %2907 = vmatpush1.msra.mxu0 0.0
    %2908 = vmatprep.subr.mxu0 0.0
    %2909 = vmatpush1.msra.mxu0 0.0
    %2910 = vmatprep.subr.mxu0 0.0
    %2911 = vmatpush1.msra.mxu0 0.0
    %2912 = vmatprep.subr.mxu0 0.0
    %2913 = vmatpush1.msra.mxu0 0.0
    %2914 = vmatprep.subr.mxu0 0.0
    %2915 = vmatpush1.msra.mxu0 0.0
    %2916 = vmatprep.subr.mxu0 0.0
    %2917 = vmatpush1.msra.mxu0 0.0
    %2918 = vmatprep.subr.mxu0 0.0
    %2919 = vmatpush1.msra.mxu0 0.0
    %2920 = vmatprep.subr.mxu0 0.0
    %2921 = vmatpush1.msra.mxu0 0.0
    %2922 = vmatprep.subr.mxu0 0.0
    %2923 = vmatpush1.msra.mxu0 0.0
    %2924 = vmatprep.mubr.f32.mxu0 0.0
    %2925 = vmatmul.mubr.f32.gmra.mrb[0].mxu0 %v2859
    %v2926 = vpop.f32.mrb[0].mxu0
    %v2927 = vadd.f32 1e-05, %v2926
    %v2928 = vpop.f32.mrb[0].mxu0
    %2929 = vdwg.mxu0
    %v2930 = vrsqrt.pop %v2927
    %v2931 = vmul.f32 %v2858, %v2930
    %v2932 = vld [vmem:[#allocation17] sm:$0x1]
    %v2934 = vlaneseq
    %v2935 = vshrl.u32 %v2934, 7
    %v2936 = vsub.s32 0, %v2935
    %v2937 = vrot.slane %v2932, %v2936
    %v2939 = vmul.f32 %v2931, %v2937
    %v2940 = vld [vmem:[#allocation19] sm:$0x1]
    %v2942 = vlaneseq
    %v2943 = vshrl.u32 %v2942, 7
    %v2944 = vsub.s32 0, %v2943
    %v2945 = vrot.slane %v2940, %v2944
    %v2947 = vadd.f32 %v2939, %v2945
    %v2948 = vmax.f32 %v2947, 0.0
    %v2949 = vld [vmem:[%s33] sm:$0xf]
    %vm2950 = vcmask 64512
    %v2952 = vsel %vm2950, %v2949, 0
    %2954 = vmatprep.subr.mxu0 0.0
    %2955 = vmatpush1.msra.mxu0 %v2948
    %2956 = vmatprep.subr.mxu0 0.0
    %2957 = vmatpush1.msra.mxu0 0.0
    %2958 = vmatprep.subr.mxu0 0.0
    %2959 = vmatpush1.msra.mxu0 0.0
    %2960 = vmatprep.subr.mxu0 0.0
    %2961 = vmatpush1.msra.mxu0 0.0
    %2962 = vmatprep.subr.mxu0 0.0
    %2963 = vmatpush1.msra.mxu0 0.0
    %2964 = vmatprep.subr.mxu0 0.0
    %2965 = vmatpush1.msra.mxu0 0.0
    %2966 = vmatprep.subr.mxu0 0.0
    %2967 = vmatpush1.msra.mxu0 0.0
    %2968 = vmatprep.subr.mxu0 0.0
    %2969 = vmatpush1.msra.mxu0 0.0
    %2970 = vmatprep.subr.mxu0 0.0
    %2971 = vmatpush1.msra.mxu0 0.0
    %2972 = vmatprep.subr.mxu0 0.0
    %2973 = vmatpush1.msra.mxu0 0.0
    %2974 = vmatprep.subr.mxu0 0.0
    %2975 = vmatpush1.msra.mxu0 0.0
    %2976 = vmatprep.subr.mxu0 0.0
    %2977 = vmatpush1.msra.mxu0 0.0
    %2978 = vmatprep.subr.mxu0 0.0
    %2979 = vmatpush1.msra.mxu0 0.0
    %2980 = vmatprep.subr.mxu0 0.0
    %2981 = vmatpush1.msra.mxu0 0.0
    %2982 = vmatprep.subr.mxu0 0.0
    %2983 = vmatpush1.msra.mxu0 0.0
    %2984 = vmatprep.subr.mxu0 0.0
    %2985 = vmatpush1.msra.mxu0 0.0
    %2986 = vmatprep.subr.mxu0 0.0
    %2987 = vmatpush1.msra.mxu0 0.0
    %2988 = vmatprep.subr.mxu0 0.0
    %2989 = vmatpush1.msra.mxu0 0.0
    %2990 = vmatprep.subr.mxu0 0.0
    %2991 = vmatpush1.msra.mxu0 0.0
    %2992 = vmatprep.subr.mxu0 0.0
    %2993 = vmatpush1.msra.mxu0 0.0
    %2994 = vmatprep.subr.mxu0 0.0
    %2995 = vmatpush1.msra.mxu0 0.0
    %2996 = vmatprep.subr.mxu0 0.0
    %2997 = vmatpush1.msra.mxu0 0.0
    %2998 = vmatprep.subr.mxu0 0.0
    %2999 = vmatpush1.msra.mxu0 0.0
    %3000 = vmatprep.subr.mxu0 0.0
    %3001 = vmatpush1.msra.mxu0 0.0
    %3002 = vmatprep.subr.mxu0 0.0
    %3003 = vmatpush1.msra.mxu0 0.0
    %3004 = vmatprep.subr.mxu0 0.0
    %3005 = vmatpush1.msra.mxu0 0.0
    %3006 = vmatprep.subr.mxu0 0.0
    %3007 = vmatpush1.msra.mxu0 0.0
    %3008 = vmatprep.subr.mxu0 0.0
    %3009 = vmatpush1.msra.mxu0 0.0
    %3010 = vmatprep.subr.mxu0 0.0
    %3011 = vmatpush1.msra.mxu0 0.0
    %3012 = vmatprep.subr.mxu0 0.0
    %3013 = vmatpush1.msra.mxu0 0.0
    %3014 = vmatprep.subr.mxu0 0.0
    %3015 = vmatpush1.msra.mxu0 0.0
    %3016 = vmatprep.subr.mxu0 0.0
    %3017 = vmatpush1.msra.mxu0 0.0
    %3018 = vmatprep.mubr.f32.mxu0 0.0
    %3019 = vmatmul.mubr.f32.gmra.mrb[0].mxu0 %v2952
    %v3020 = vpop.f32.mrb[0].mxu0
    %v3021 = vadd.f32 0.0, %v3020
    %v3022 = vpop.f32.mrb[0].mxu0
    %3023 = vdwg.mxu0
    %v3024 = vld [vmem:[%s35] sm:$0xff]
    %v3025 = vld [vmem:[%s35 + $0x8] sm:$0xff]
    %v3026 = vld [vmem:[%s35 + $0x10] sm:$0xff]
    %v3027 = vld [vmem:[%s35 + $0x18] sm:$0xff]
    %v3028 = vld [vmem:[%s35 + $0x20] sm:$0xff]
    %v3029 = vld [vmem:[%s35 + $0x28] sm:$0xff]
    %v3030 = vld [vmem:[%s35 + $0x30] sm:$0xff]
    %v3031 = vld [vmem:[%s35 + $0x38] sm:$0xff]
    %v3032 = vld [vmem:[%s35 + $0x40] sm:$0xff]
    %v3033 = vld [vmem:[%s35 + $0x48] sm:$0xff]
    %v3034 = vld [vmem:[%s35 + $0x50] sm:$0xff]
    %v3035 = vld [vmem:[%s35 + $0x58] sm:$0xff]
    %v3036 = vld [vmem:[%s35 + $0x60] sm:$0xff]
    %v3037 = vld [vmem:[%s35 + $0x68] sm:$0xff]
    %v3038 = vld [vmem:[%s35 + $0x70] sm:$0xff]
    %v3039 = vld [vmem:[%s35 + $0x78] sm:$0xff]
    %s3040 = scalar_lea.vmem %s33, 4
    %v3041 = vld [vmem:[%s3040] sm:$0xf]
    %v3043 = vsel %vm2950, %v3041, 0
    %3045 = vmatprep.subr.mxu0 0.0
    %3046 = vmatpush1.msra.mxu0 %v2948
    %3047 = vmatprep.subr.mxu0 0.0
    %3048 = vmatpush1.msra.mxu0 0.0
    %3049 = vmatprep.subr.mxu0 0.0
    %3050 = vmatpush1.msra.mxu0 0.0
    %3051 = vmatprep.subr.mxu0 0.0
    %3052 = vmatpush1.msra.mxu0 0.0
    %3053 = vmatprep.subr.mxu0 0.0
    %3054 = vmatpush1.msra.mxu0 0.0
    %3055 = vmatprep.subr.mxu0 0.0
    %3056 = vmatpush1.msra.mxu0 0.0
    %3057 = vmatprep.subr.mxu0 0.0
    %3058 = vmatpush1.msra.mxu0 0.0
    %3059 = vmatprep.subr.mxu0 0.0
    %3060 = vmatpush1.msra.mxu0 0.0
    %3061 = vmatprep.subr.mxu0 0.0
    %3062 = vmatpush1.msra.mxu0 0.0
    %3063 = vmatprep.subr.mxu0 0.0
    %3064 = vmatpush1.msra.mxu0 0.0
    %3065 = vmatprep.subr.mxu0 0.0
    %3066 = vmatpush1.msra.mxu0 0.0
    %3067 = vmatprep.subr.mxu0 0.0
    %3068 = vmatpush1.msra.mxu0 0.0
    %3069 = vmatprep.subr.mxu0 0.0
    %3070 = vmatpush1.msra.mxu0 0.0
    %3071 = vmatprep.subr.mxu0 0.0
    %3072 = vmatpush1.msra.mxu0 0.0
    %3073 = vmatprep.subr.mxu0 0.0
    %3074 = vmatpush1.msra.mxu0 0.0
    %3075 = vmatprep.subr.mxu0 0.0
    %3076 = vmatpush1.msra.mxu0 0.0
    %3077 = vmatprep.subr.mxu0 0.0
    %3078 = vmatpush1.msra.mxu0 0.0
    %3079 = vmatprep.subr.mxu0 0.0
    %3080 = vmatpush1.msra.mxu0 0.0
    %3081 = vmatprep.subr.mxu0 0.0
    %3082 = vmatpush1.msra.mxu0 0.0
    %3083 = vmatprep.subr.mxu0 0.0
    %3084 = vmatpush1.msra.mxu0 0.0
    %3085 = vmatprep.subr.mxu0 0.0
    %3086 = vmatpush1.msra.mxu0 0.0
    %3087 = vmatprep.subr.mxu0 0.0
    %3088 = vmatpush1.msra.mxu0 0.0
    %3089 = vmatprep.subr.mxu0 0.0
    %3090 = vmatpush1.msra.mxu0 0.0
    %3091 = vmatprep.subr.mxu0 0.0
    %3092 = vmatpush1.msra.mxu0 0.0
    %3093 = vmatprep.subr.mxu0 0.0
    %3094 = vmatpush1.msra.mxu0 0.0
    %3095 = vmatprep.subr.mxu0 0.0
    %3096 = vmatpush1.msra.mxu0 0.0
    %3097 = vmatprep.subr.mxu0 0.0
    %3098 = vmatpush1.msra.mxu0 0.0
    %3099 = vmatprep.subr.mxu0 0.0
    %3100 = vmatpush1.msra.mxu0 0.0
    %3101 = vmatprep.subr.mxu0 0.0
    %3102 = vmatpush1.msra.mxu0 0.0
    %3103 = vmatprep.subr.mxu0 0.0
    %3104 = vmatpush1.msra.mxu0 0.0
    %3105 = vmatprep.subr.mxu0 0.0
    %3106 = vmatpush1.msra.mxu0 0.0
    %3107 = vmatprep.subr.mxu0 0.0
    %3108 = vmatpush1.msra.mxu0 0.0
    %3109 = vmatprep.mubr.f32.mxu0 0.0
    %3110 = vmatmul.mubr.f32.gmra.mrb[0].mxu0 %v3043
    %v3111 = vpop.f32.mrb[0].mxu0
    %v3112 = vadd.f32 0.0, %v3111
    %v3113 = vpop.f32.mrb[0].mxu0
    %3114 = vdwg.mxu0
    %s3115 = scalar_lea.vmem %s35, 128
    %v3116 = vld [vmem:[%s3115] sm:$0xff]
    %v3117 = vld [vmem:[%s3115 + $0x8] sm:$0xff]
    %v3118 = vld [vmem:[%s3115 + $0x10] sm:$0xff]
    %v3119 = vld [vmem:[%s3115 + $0x18] sm:$0xff]
    %v3120 = vld [vmem:[%s3115 + $0x20] sm:$0xff]
    %v3121 = vld [vmem:[%s3115 + $0x28] sm:$0xff]
    %v3122 = vld [vmem:[%s3115 + $0x30] sm:$0xff]
    %v3123 = vld [vmem:[%s3115 + $0x38] sm:$0xff]
    %v3124 = vld [vmem:[%s3115 + $0x40] sm:$0xff]
    %v3125 = vld [vmem:[%s3115 + $0x48] sm:$0xff]
    %v3126 = vld [vmem:[%s3115 + $0x50] sm:$0xff]
    %v3127 = vld [vmem:[%s3115 + $0x58] sm:$0xff]
    %v3128 = vld [vmem:[%s3115 + $0x60] sm:$0xff]
    %v3129 = vld [vmem:[%s3115 + $0x68] sm:$0xff]
    %v3130 = vld [vmem:[%s3115 + $0x70] sm:$0xff]
    %v3131 = vld [vmem:[%s3115 + $0x78] sm:$0xff]
    %3132 = vmatprep.subr.mxu0 0.0
    %3133 = vmatpush1.msra.mxu0 %v3116
    %3134 = vmatprep.subr.mxu0 0.0
    %3135 = vmatpush1.msra.mxu0 %v3117
    %3136 = vmatprep.subr.mxu0 0.0
    %3137 = vmatpush1.msra.mxu0 %v3118
    %3138 = vmatprep.subr.mxu0 0.0
    %3139 = vmatpush1.msra.mxu0 %v3119
    %3140 = vmatprep.subr.mxu0 0.0
    %3141 = vmatpush1.msra.mxu0 %v3120
    %3142 = vmatprep.subr.mxu0 0.0
    %3143 = vmatpush1.msra.mxu0 %v3121
    %3144 = vmatprep.subr.mxu0 0.0
    %3145 = vmatpush1.msra.mxu0 %v3122
    %3146 = vmatprep.subr.mxu0 0.0
    %3147 = vmatpush1.msra.mxu0 %v3123
    %3148 = vmatprep.subr.mxu0 0.0
    %3149 = vmatpush1.msra.mxu0 %v3124
    %3150 = vmatprep.subr.mxu0 0.0
    %3151 = vmatpush1.msra.mxu0 %v3125
    %3152 = vmatprep.subr.mxu0 0.0
    %3153 = vmatpush1.msra.mxu0 %v3126
    %3154 = vmatprep.subr.mxu0 0.0
    %3155 = vmatpush1.msra.mxu0 %v3127
    %3156 = vmatprep.subr.mxu0 0.0
    %3157 = vmatpush1.msra.mxu0 %v3128
    %3158 = vmatprep.subr.mxu0 0.0
    %3159 = vmatpush1.msra.mxu0 %v3129
    %3160 = vmatprep.subr.mxu0 0.0
    %3161 = vmatpush1.msra.mxu0 %v3130
    %3162 = vmatprep.subr.mxu0 0.0
    %3163 = vmatpush1.msra.mxu0 %v3131
    %3164 = vmatprep.subr.mxu0 0.0
    %3165 = vmatpush1.msra.mxu0 0.0
    %3166 = vmatprep.subr.mxu0 0.0
    %3167 = vmatpush1.msra.mxu0 0.0
    %3168 = vmatprep.subr.mxu0 0.0
    %3169 = vmatpush1.msra.mxu0 0.0
    %3170 = vmatprep.subr.mxu0 0.0
    %3171 = vmatpush1.msra.mxu0 0.0
    %3172 = vmatprep.subr.mxu0 0.0
    %3173 = vmatpush1.msra.mxu0 0.0
    %3174 = vmatprep.subr.mxu0 0.0
    %3175 = vmatpush1.msra.mxu0 0.0
    %3176 = vmatprep.subr.mxu0 0.0
    %3177 = vmatpush1.msra.mxu0 0.0
    %3178 = vmatprep.subr.mxu0 0.0
    %3179 = vmatpush1.msra.mxu0 0.0
    %3180 = vmatprep.subr.mxu0 0.0
    %3181 = vmatpush1.msra.mxu0 0.0
    %3182 = vmatprep.subr.mxu0 0.0
    %3183 = vmatpush1.msra.mxu0 0.0
    %3184 = vmatprep.subr.mxu0 0.0
    %3185 = vmatpush1.msra.mxu0 0.0
    %3186 = vmatprep.subr.mxu0 0.0
    %3187 = vmatpush1.msra.mxu0 0.0
    %3188 = vmatprep.subr.mxu0 0.0
    %3189 = vmatpush1.msra.mxu0 0.0
    %3190 = vmatprep.subr.mxu0 0.0
    %3191 = vmatpush1.msra.mxu0 0.0
    %3192 = vmatprep.subr.mxu0 0.0
    %3193 = vmatpush1.msra.mxu0 0.0
    %3194 = vmatprep.subr.mxu0 0.0
    %3195 = vmatpush1.msra.mxu0 0.0
    %3196 = vmatprep.mubr.f32.mxu0 0.0
    %3197 = vmatmul.mubr.f32.gmra.mrb[0].mxu0 %v3112
    %v3198 = vpop.f32.mrb[0].mxu0
    %v3199 = vadd.f32 0.0, %v3198
    %v3200 = vpop.f32.mrb[0].mxu0
    %3201 = vdwg.mxu0
    %3202 = vmatprep.subr.mxu0 0.0
    %3203 = vmatpush1.msra.mxu0 %v3024
    %3204 = vmatprep.subr.mxu0 0.0
    %3205 = vmatpush1.msra.mxu0 %v3025
    %3206 = vmatprep.subr.mxu0 0.0
    %3207 = vmatpush1.msra.mxu0 %v3026
    %3208 = vmatprep.subr.mxu0 0.0
    %3209 = vmatpush1.msra.mxu0 %v3027
    %3210 = vmatprep.subr.mxu0 0.0
    %3211 = vmatpush1.msra.mxu0 %v3028
    %3212 = vmatprep.subr.mxu0 0.0
    %3213 = vmatpush1.msra.mxu0 %v3029
    %3214 = vmatprep.subr.mxu0 0.0
    %3215 = vmatpush1.msra.mxu0 %v3030
    %3216 = vmatprep.subr.mxu0 0.0
    %3217 = vmatpush1.msra.mxu0 %v3031
    %3218 = vmatprep.subr.mxu0 0.0
    %3219 = vmatpush1.msra.mxu0 %v3032
    %3220 = vmatprep.subr.mxu0 0.0
    %3221 = vmatpush1.msra.mxu0 %v3033
    %3222 = vmatprep.subr.mxu0 0.0
    %3223 = vmatpush1.msra.mxu0 %v3034
    %3224 = vmatprep.subr.mxu0 0.0
    %3225 = vmatpush1.msra.mxu0 %v3035
    %3226 = vmatprep.subr.mxu0 0.0
    %3227 = vmatpush1.msra.mxu0 %v3036
    %3228 = vmatprep.subr.mxu0 0.0
    %3229 = vmatpush1.msra.mxu0 %v3037
    %3230 = vmatprep.subr.mxu0 0.0
    %3231 = vmatpush1.msra.mxu0 %v3038
    %3232 = vmatprep.subr.mxu0 0.0
    %3233 = vmatpush1.msra.mxu0 %v3039
    %3234 = vmatprep.subr.mxu0 0.0
    %3235 = vmatpush1.msra.mxu0 0.0
    %3236 = vmatprep.subr.mxu0 0.0
    %3237 = vmatpush1.msra.mxu0 0.0
    %3238 = vmatprep.subr.mxu0 0.0
    %3239 = vmatpush1.msra.mxu0 0.0
    %3240 = vmatprep.subr.mxu0 0.0
    %3241 = vmatpush1.msra.mxu0 0.0
    %3242 = vmatprep.subr.mxu0 0.0
    %3243 = vmatpush1.msra.mxu0 0.0
    %3244 = vmatprep.subr.mxu0 0.0
    %3245 = vmatpush1.msra.mxu0 0.0
    %3246 = vmatprep.subr.mxu0 0.0
    %3247 = vmatpush1.msra.mxu0 0.0
    %3248 = vmatprep.subr.mxu0 0.0
    %3249 = vmatpush1.msra.mxu0 0.0
    %3250 = vmatprep.subr.mxu0 0.0
    %3251 = vmatpush1.msra.mxu0 0.0
    %3252 = vmatprep.subr.mxu0 0.0
    %3253 = vmatpush1.msra.mxu0 0.0
    %3254 = vmatprep.subr.mxu0 0.0
    %3255 = vmatpush1.msra.mxu0 0.0
    %3256 = vmatprep.subr.mxu0 0.0
    %3257 = vmatpush1.msra.mxu0 0.0
    %3258 = vmatprep.subr.mxu0 0.0
    %3259 = vmatpush1.msra.mxu0 0.0
    %3260 = vmatprep.subr.mxu0 0.0
    %3261 = vmatpush1.msra.mxu0 0.0
    %3262 = vmatprep.subr.mxu0 0.0
    %3263 = vmatpush1.msra.mxu0 0.0
    %3264 = vmatprep.subr.mxu0 0.0
    %3265 = vmatpush1.msra.mxu0 0.0
    %3266 = vmatprep.mubr.f32.mxu0 0.0
    %3267 = vmatmul.mubr.f32.gmra.mrb[0].mxu0 %v3021
    %v3268 = vpop.f32.mrb[0].mxu0
    %v3269 = vadd.f32 %v3199, %v3268
    %v3270 = vpop.f32.mrb[0].mxu0
    %3271 = vdwg.mxu0
    %s3272 = scalar_lea.vmem %s33, 8
    %v3273 = vld [vmem:[%s3272] sm:$0xf]
    %v3275 = vsel %vm2950, %v3273, 0
    %3277 = vmatprep.subr.mxu0 0.0
    %3278 = vmatpush1.msra.mxu0 %v2948
    %3279 = vmatprep.subr.mxu0 0.0
    %3280 = vmatpush1.msra.mxu0 0.0
    %3281 = vmatprep.subr.mxu0 0.0
    %3282 = vmatpush1.msra.mxu0 0.0
    %3283 = vmatprep.subr.mxu0 0.0
    %3284 = vmatpush1.msra.mxu0 0.0
    %3285 = vmatprep.subr.mxu0 0.0
    %3286 = vmatpush1.msra.mxu0 0.0
    %3287 = vmatprep.subr.mxu0 0.0
    %3288 = vmatpush1.msra.mxu0 0.0
    %3289 = vmatprep.subr.mxu0 0.0
    %3290 = vmatpush1.msra.mxu0 0.0
    %3291 = vmatprep.subr.mxu0 0.0
    %3292 = vmatpush1.msra.mxu0 0.0
    %3293 = vmatprep.subr.mxu0 0.0
    %3294 = vmatpush1.msra.mxu0 0.0
    %3295 = vmatprep.subr.mxu0 0.0
    %3296 = vmatpush1.msra.mxu0 0.0
    %3297 = vmatprep.subr.mxu0 0.0
    %3298 = vmatpush1.msra.mxu0 0.0
    %3299 = vmatprep.subr.mxu0 0.0
    %3300 = vmatpush1.msra.mxu0 0.0
    %3301 = vmatprep.subr.mxu0 0.0
    %3302 = vmatpush1.msra.mxu0 0.0
    %3303 = vmatprep.subr.mxu0 0.0
    %3304 = vmatpush1.msra.mxu0 0.0
    %3305 = vmatprep.subr.mxu0 0.0
    %3306 = vmatpush1.msra.mxu0 0.0
    %3307 = vmatprep.subr.mxu0 0.0
    %3308 = vmatpush1.msra.mxu0 0.0
    %3309 = vmatprep.subr.mxu0 0.0
    %3310 = vmatpush1.msra.mxu0 0.0
    %3311 = vmatprep.subr.mxu0 0.0
    %3312 = vmatpush1.msra.mxu0 0.0
    %3313 = vmatprep.subr.mxu0 0.0
    %3314 = vmatpush1.msra.mxu0 0.0
    %3315 = vmatprep.subr.mxu0 0.0
    %3316 = vmatpush1.msra.mxu0 0.0
    %3317 = vmatprep.subr.mxu0 0.0
    %3318 = vmatpush1.msra.mxu0 0.0
    %3319 = vmatprep.subr.mxu0 0.0
    %3320 = vmatpush1.msra.mxu0 0.0
    %3321 = vmatprep.subr.mxu0 0.0
    %3322 = vmatpush1.msra.mxu0 0.0
    %3323 = vmatprep.subr.mxu0 0.0
    %3324 = vmatpush1.msra.mxu0 0.0
    %3325 = vmatprep.subr.mxu0 0.0
    %3326 = vmatpush1.msra.mxu0 0.0
    %3327 = vmatprep.subr.mxu0 0.0
    %3328 = vmatpush1.msra.mxu0 0.0
    %3329 = vmatprep.subr.mxu0 0.0
    %3330 = vmatpush1.msra.mxu0 0.0
    %3331 = vmatprep.subr.mxu0 0.0
    %3332 = vmatpush1.msra.mxu0 0.0
    %3333 = vmatprep.subr.mxu0 0.0
    %3334 = vmatpush1.msra.mxu0 0.0
    %3335 = vmatprep.subr.mxu0 0.0
    %3336 = vmatpush1.msra.mxu0 0.0
    %3337 = vmatprep.subr.mxu0 0.0
    %3338 = vmatpush1.msra.mxu0 0.0
    %3339 = vmatprep.subr.mxu0 0.0
    %3340 = vmatpush1.msra.mxu0 0.0
    %3341 = vmatprep.mubr.f32.mxu0 0.0
    %3342 = vmatmul.mubr.f32.gmra.mrb[0].mxu0 %v3275
    %v3343 = vpop.f32.mrb[0].mxu0
    %v3344 = vadd.f32 0.0, %v3343
    %v3345 = vpop.f32.mrb[0].mxu0
    %3346 = vdwg.mxu0
    %s3347 = scalar_lea.vmem %s35, 256
    %v3348 = vld [vmem:[%s3347] sm:$0xff]
    %v3349 = vld [vmem:[%s3347 + $0x8] sm:$0xff]
    %v3350 = vld [vmem:[%s3347 + $0x10] sm:$0xff]
    %v3351 = vld [vmem:[%s3347 + $0x18] sm:$0xff]
    %v3352 = vld [vmem:[%s3347 + $0x20] sm:$0xff]
    %v3353 = vld [vmem:[%s3347 + $0x28] sm:$0xff]
    %v3354 = vld [vmem:[%s3347 + $0x30] sm:$0xff]
    %v3355 = vld [vmem:[%s3347 + $0x38] sm:$0xff]
    %v3356 = vld [vmem:[%s3347 + $0x40] sm:$0xff]
    %v3357 = vld [vmem:[%s3347 + $0x48] sm:$0xff]
    %v3358 = vld [vmem:[%s3347 + $0x50] sm:$0xff]
    %v3359 = vld [vmem:[%s3347 + $0x58] sm:$0xff]
    %v3360 = vld [vmem:[%s3347 + $0x60] sm:$0xff]
    %v3361 = vld [vmem:[%s3347 + $0x68] sm:$0xff]
    %v3362 = vld [vmem:[%s3347 + $0x70] sm:$0xff]
    %v3363 = vld [vmem:[%s3347 + $0x78] sm:$0xff]
    %3364 = vmatprep.subr.mxu0 0.0
    %3365 = vmatpush1.msra.mxu0 %v3348
    %3366 = vmatprep.subr.mxu0 0.0
    %3367 = vmatpush1.msra.mxu0 %v3349
    %3368 = vmatprep.subr.mxu0 0.0
    %3369 = vmatpush1.msra.mxu0 %v3350
    %3370 = vmatprep.subr.mxu0 0.0
    %3371 = vmatpush1.msra.mxu0 %v3351
    %3372 = vmatprep.subr.mxu0 0.0
    %3373 = vmatpush1.msra.mxu0 %v3352
    %3374 = vmatprep.subr.mxu0 0.0
    %3375 = vmatpush1.msra.mxu0 %v3353
    %3376 = vmatprep.subr.mxu0 0.0
    %3377 = vmatpush1.msra.mxu0 %v3354
    %3378 = vmatprep.subr.mxu0 0.0
    %3379 = vmatpush1.msra.mxu0 %v3355
    %3380 = vmatprep.subr.mxu0 0.0
    %3381 = vmatpush1.msra.mxu0 %v3356
    %3382 = vmatprep.subr.mxu0 0.0
    %3383 = vmatpush1.msra.mxu0 %v3357
    %3384 = vmatprep.subr.mxu0 0.0
    %3385 = vmatpush1.msra.mxu0 %v3358
    %3386 = vmatprep.subr.mxu0 0.0
    %3387 = vmatpush1.msra.mxu0 %v3359
    %3388 = vmatprep.subr.mxu0 0.0
    %3389 = vmatpush1.msra.mxu0 %v3360
    %3390 = vmatprep.subr.mxu0 0.0
    %3391 = vmatpush1.msra.mxu0 %v3361
    %3392 = vmatprep.subr.mxu0 0.0
    %3393 = vmatpush1.msra.mxu0 %v3362
    %3394 = vmatprep.subr.mxu0 0.0
    %3395 = vmatpush1.msra.mxu0 %v3363
    %3396 = vmatprep.subr.mxu0 0.0
    %3397 = vmatpush1.msra.mxu0 0.0
    %3398 = vmatprep.subr.mxu0 0.0
    %3399 = vmatpush1.msra.mxu0 0.0
    %3400 = vmatprep.subr.mxu0 0.0
    %3401 = vmatpush1.msra.mxu0 0.0
    %3402 = vmatprep.subr.mxu0 0.0
    %3403 = vmatpush1.msra.mxu0 0.0
    %3404 = vmatprep.subr.mxu0 0.0
    %3405 = vmatpush1.msra.mxu0 0.0
    %3406 = vmatprep.subr.mxu0 0.0
    %3407 = vmatpush1.msra.mxu0 0.0
    %3408 = vmatprep.subr.mxu0 0.0
    %3409 = vmatpush1.msra.mxu0 0.0
    %3410 = vmatprep.subr.mxu0 0.0
    %3411 = vmatpush1.msra.mxu0 0.0
    %3412 = vmatprep.subr.mxu0 0.0
    %3413 = vmatpush1.msra.mxu0 0.0
    %3414 = vmatprep.subr.mxu0 0.0
    %3415 = vmatpush1.msra.mxu0 0.0
    %3416 = vmatprep.subr.mxu0 0.0
    %3417 = vmatpush1.msra.mxu0 0.0
    %3418 = vmatprep.subr.mxu0 0.0
    %3419 = vmatpush1.msra.mxu0 0.0
    %3420 = vmatprep.subr.mxu0 0.0
    %3421 = vmatpush1.msra.mxu0 0.0
    %3422 = vmatprep.subr.mxu0 0.0
    %3423 = vmatpush1.msra.mxu0 0.0
    %3424 = vmatprep.subr.mxu0 0.0
    %3425 = vmatpush1.msra.mxu0 0.0
    %3426 = vmatprep.subr.mxu0 0.0
    %3427 = vmatpush1.msra.mxu0 0.0
    %3428 = vmatprep.mubr.f32.mxu0 0.0
    %3429 = vmatmul.mubr.f32.gmra.mrb[0].mxu0 %v3344
    %v3430 = vpop.f32.mrb[0].mxu0
    %v3431 = vadd.f32 0.0, %v3430
    %v3432 = vpop.f32.mrb[0].mxu0
    %3433 = vdwg.mxu0
    %v3434 = vadd.f32 %v3269, %v3431
    %s3435 = scalar_lea.vmem %s33, 12
    %v3436 = vld [vmem:[%s3435] sm:$0xf]
    %v3438 = vsel %vm2950, %v3436, 0
    %3440 = vmatprep.subr.mxu0 0.0
    %3441 = vmatpush1.msra.mxu0 %v2948
    %3442 = vmatprep.subr.mxu0 0.0
    %3443 = vmatpush1.msra.mxu0 0.0
    %3444 = vmatprep.subr.mxu0 0.0
    %3445 = vmatpush1.msra.mxu0 0.0
    %3446 = vmatprep.subr.mxu0 0.0
    %3447 = vmatpush1.msra.mxu0 0.0
    %3448 = vmatprep.subr.mxu0 0.0
    %3449 = vmatpush1.msra.mxu0 0.0
    %3450 = vmatprep.subr.mxu0 0.0
    %3451 = vmatpush1.msra.mxu0 0.0
    %3452 = vmatprep.subr.mxu0 0.0
    %3453 = vmatpush1.msra.mxu0 0.0
    %3454 = vmatprep.subr.mxu0 0.0
    %3455 = vmatpush1.msra.mxu0 0.0
    %3456 = vmatprep.subr.mxu0 0.0
    %3457 = vmatpush1.msra.mxu0 0.0
    %3458 = vmatprep.subr.mxu0 0.0
    %3459 = vmatpush1.msra.mxu0 0.0
    %3460 = vmatprep.subr.mxu0 0.0
    %3461 = vmatpush1.msra.mxu0 0.0
    %3462 = vmatprep.subr.mxu0 0.0
    %3463 = vmatpush1.msra.mxu0 0.0
    %3464 = vmatprep.subr.mxu0 0.0
    %3465 = vmatpush1.msra.mxu0 0.0
    %3466 = vmatprep.subr.mxu0 0.0
    %3467 = vmatpush1.msra.mxu0 0.0
    %3468 = vmatprep.subr.mxu0 0.0
    %3469 = vmatpush1.msra.mxu0 0.0
    %3470 = vmatprep.subr.mxu0 0.0
    %3471 = vmatpush1.msra.mxu0 0.0
    %3472 = vmatprep.subr.mxu0 0.0
    %3473 = vmatpush1.msra.mxu0 0.0
    %3474 = vmatprep.subr.mxu0 0.0
    %3475 = vmatpush1.msra.mxu0 0.0
    %3476 = vmatprep.subr.mxu0 0.0
    %3477 = vmatpush1.msra.mxu0 0.0
    %3478 = vmatprep.subr.mxu0 0.0
    %3479 = vmatpush1.msra.mxu0 0.0
    %3480 = vmatprep.subr.mxu0 0.0
    %3481 = vmatpush1.msra.mxu0 0.0
    %3482 = vmatprep.subr.mxu0 0.0
    %3483 = vmatpush1.msra.mxu0 0.0
    %3484 = vmatprep.subr.mxu0 0.0
    %3485 = vmatpush1.msra.mxu0 0.0
    %3486 = vmatprep.subr.mxu0 0.0
    %3487 = vmatpush1.msra.mxu0 0.0
    %3488 = vmatprep.subr.mxu0 0.0
    %3489 = vmatpush1.msra.mxu0 0.0
    %3490 = vmatprep.subr.mxu0 0.0
    %3491 = vmatpush1.msra.mxu0 0.0
    %3492 = vmatprep.subr.mxu0 0.0
    %3493 = vmatpush1.msra.mxu0 0.0
    %3494 = vmatprep.subr.mxu0 0.0
    %3495 = vmatpush1.msra.mxu0 0.0
    %3496 = vmatprep.subr.mxu0 0.0
    %3497 = vmatpush1.msra.mxu0 0.0
    %3498 = vmatprep.subr.mxu0 0.0
    %3499 = vmatpush1.msra.mxu0 0.0
    %3500 = vmatprep.subr.mxu0 0.0
    %3501 = vmatpush1.msra.mxu0 0.0
    %3502 = vmatprep.subr.mxu0 0.0
    %3503 = vmatpush1.msra.mxu0 0.0
    %3504 = vmatprep.mubr.f32.mxu0 0.0
    %3505 = vmatmul.mubr.f32.gmra.mrb[0].mxu0 %v3438
    %v3506 = vpop.f32.mrb[0].mxu0
    %v3507 = vadd.f32 0.0, %v3506
    %v3508 = vpop.f32.mrb[0].mxu0
    %3509 = vdwg.mxu0
    %s3510 = scalar_lea.vmem %s35, 384
    %v3511 = vld [vmem:[%s3510] sm:$0xff]
    %v3512 = vld [vmem:[%s3510 + $0x8] sm:$0xff]
    %v3513 = vld [vmem:[%s3510 + $0x10] sm:$0xff]
    %v3514 = vld [vmem:[%s3510 + $0x18] sm:$0xff]
    %v3515 = vld [vmem:[%s3510 + $0x20] sm:$0xff]
    %v3516 = vld [vmem:[%s3510 + $0x28] sm:$0xff]
    %v3517 = vld [vmem:[%s3510 + $0x30] sm:$0xff]
    %v3518 = vld [vmem:[%s3510 + $0x38] sm:$0xff]
    %v3519 = vld [vmem:[%s3510 + $0x40] sm:$0xff]
    %v3520 = vld [vmem:[%s3510 + $0x48] sm:$0xff]
    %v3521 = vld [vmem:[%s3510 + $0x50] sm:$0xff]
    %v3522 = vld [vmem:[%s3510 + $0x58] sm:$0xff]
    %v3523 = vld [vmem:[%s3510 + $0x60] sm:$0xff]
    %v3524 = vld [vmem:[%s3510 + $0x68] sm:$0xff]
    %v3525 = vld [vmem:[%s3510 + $0x70] sm:$0xff]
    %v3526 = vld [vmem:[%s3510 + $0x78] sm:$0xff]
    %3527 = vmatprep.subr.mxu0 0.0
    %3528 = vmatpush1.msra.mxu0 %v3511
    %3529 = vmatprep.subr.mxu0 0.0
    %3530 = vmatpush1.msra.mxu0 %v3512
    %3531 = vmatprep.subr.mxu0 0.0
    %3532 = vmatpush1.msra.mxu0 %v3513
    %3533 = vmatprep.subr.mxu0 0.0
    %3534 = vmatpush1.msra.mxu0 %v3514
    %3535 = vmatprep.subr.mxu0 0.0
    %3536 = vmatpush1.msra.mxu0 %v3515
    %3537 = vmatprep.subr.mxu0 0.0
    %3538 = vmatpush1.msra.mxu0 %v3516
    %3539 = vmatprep.subr.mxu0 0.0
    %3540 = vmatpush1.msra.mxu0 %v3517
    %3541 = vmatprep.subr.mxu0 0.0
    %3542 = vmatpush1.msra.mxu0 %v3518
    %3543 = vmatprep.subr.mxu0 0.0
    %3544 = vmatpush1.msra.mxu0 %v3519
    %3545 = vmatprep.subr.mxu0 0.0
    %3546 = vmatpush1.msra.mxu0 %v3520
    %3547 = vmatprep.subr.mxu0 0.0
    %3548 = vmatpush1.msra.mxu0 %v3521
    %3549 = vmatprep.subr.mxu0 0.0
    %3550 = vmatpush1.msra.mxu0 %v3522
    %3551 = vmatprep.subr.mxu0 0.0
    %3552 = vmatpush1.msra.mxu0 %v3523
    %3553 = vmatprep.subr.mxu0 0.0
    %3554 = vmatpush1.msra.mxu0 %v3524
    %3555 = vmatprep.subr.mxu0 0.0
    %3556 = vmatpush1.msra.mxu0 %v3525
    %3557 = vmatprep.subr.mxu0 0.0
    %3558 = vmatpush1.msra.mxu0 %v3526
    %3559 = vmatprep.subr.mxu0 0.0
    %3560 = vmatpush1.msra.mxu0 0.0
    %3561 = vmatprep.subr.mxu0 0.0
    %3562 = vmatpush1.msra.mxu0 0.0
    %3563 = vmatprep.subr.mxu0 0.0
    %3564 = vmatpush1.msra.mxu0 0.0
    %3565 = vmatprep.subr.mxu0 0.0
    %3566 = vmatpush1.msra.mxu0 0.0
    %3567 = vmatprep.subr.mxu0 0.0
    %3568 = vmatpush1.msra.mxu0 0.0
    %3569 = vmatprep.subr.mxu0 0.0
    %3570 = vmatpush1.msra.mxu0 0.0
    %3571 = vmatprep.subr.mxu0 0.0
    %3572 = vmatpush1.msra.mxu0 0.0
    %3573 = vmatprep.subr.mxu0 0.0
    %3574 = vmatpush1.msra.mxu0 0.0
    %3575 = vmatprep.subr.mxu0 0.0
    %3576 = vmatpush1.msra.mxu0 0.0
    %3577 = vmatprep.subr.mxu0 0.0
    %3578 = vmatpush1.msra.mxu0 0.0
    %3579 = vmatprep.subr.mxu0 0.0
    %3580 = vmatpush1.msra.mxu0 0.0
    %3581 = vmatprep.subr.mxu0 0.0
    %3582 = vmatpush1.msra.mxu0 0.0
    %3583 = vmatprep.subr.mxu0 0.0
    %3584 = vmatpush1.msra.mxu0 0.0
    %3585 = vmatprep.subr.mxu0 0.0
    %3586 = vmatpush1.msra.mxu0 0.0
    %3587 = vmatprep.subr.mxu0 0.0
    %3588 = vmatpush1.msra.mxu0 0.0
    %3589 = vmatprep.subr.mxu0 0.0
    %3590 = vmatpush1.msra.mxu0 0.0
    %3591 = vmatprep.mubr.f32.mxu0 0.0
    %3592 = vmatmul.mubr.f32.gmra.mrb[0].mxu0 %v3507
    %v3593 = vpop.f32.mrb[0].mxu0
    %v3594 = vadd.f32 0.0, %v3593
    %v3595 = vpop.f32.mrb[0].mxu0
    %3596 = vdwg.mxu0
    %v3597 = vadd.f32 %v3434, %v3594
    %v3598 = vld [vmem:[%s37] sm:$0x1]
    %v3600 = vlaneseq
    %v3601 = vshrl.u32 %v3600, 7
    %v3602 = vsub.s32 0, %v3601
    %v3603 = vrot.slane %v3598, %v3602
    %v3605 = vadd.f32 %v3597, %v3603
    %v3606 = vld [vmem:[#allocation25] sm:$0xff]
    %v3607 = vld [vmem:[#allocation25 + $0x8] sm:$0xff]
    %v3608 = vld [vmem:[#allocation25 + $0x10] sm:$0xff]
    %v3609 = vld [vmem:[#allocation25 + $0x18] sm:$0xff]
    %v3610 = vld [vmem:[#allocation25 + $0x20] sm:$0xff]
    %v3611 = vld [vmem:[#allocation25 + $0x28] sm:$0xff]
    %v3612 = vld [vmem:[#allocation25 + $0x30] sm:$0xff]
    %v3613 = vld [vmem:[#allocation25 + $0x38] sm:$0xff]
    %v3614 = vld [vmem:[#allocation25 + $0x40] sm:$0xff]
    %v3615 = vld [vmem:[#allocation25 + $0x48] sm:$0xff]
    %v3616 = vld [vmem:[#allocation25 + $0x50] sm:$0xff]
    %v3617 = vld [vmem:[#allocation25 + $0x58] sm:$0xff]
    %v3618 = vld [vmem:[#allocation25 + $0x60] sm:$0xff]
    %v3619 = vld [vmem:[#allocation25 + $0x68] sm:$0xff]
    %v3620 = vld [vmem:[#allocation25 + $0x70] sm:$0xff]
    %v3621 = vld [vmem:[#allocation25 + $0x78] sm:$0xff]
    %3622 = vmatprep.subr.mxu0 0.0
    %3623 = vmatpush1.msra.mxu0 %v3606
    %3624 = vmatprep.subr.mxu0 0.0
    %3625 = vmatpush1.msra.mxu0 %v3607
    %3626 = vmatprep.subr.mxu0 0.0
    %3627 = vmatpush1.msra.mxu0 %v3608
    %3628 = vmatprep.subr.mxu0 0.0
    %3629 = vmatpush1.msra.mxu0 %v3609
    %3630 = vmatprep.subr.mxu0 0.0
    %3631 = vmatpush1.msra.mxu0 %v3610
    %3632 = vmatprep.subr.mxu0 0.0
    %3633 = vmatpush1.msra.mxu0 %v3611
    %3634 = vmatprep.subr.mxu0 0.0
    %3635 = vmatpush1.msra.mxu0 %v3612
    %3636 = vmatprep.subr.mxu0 0.0
    %3637 = vmatpush1.msra.mxu0 %v3613
    %3638 = vmatprep.subr.mxu0 0.0
    %3639 = vmatpush1.msra.mxu0 %v3614
    %3640 = vmatprep.subr.mxu0 0.0
    %3641 = vmatpush1.msra.mxu0 %v3615
    %3642 = vmatprep.subr.mxu0 0.0
    %3643 = vmatpush1.msra.mxu0 %v3616
    %3644 = vmatprep.subr.mxu0 0.0
    %3645 = vmatpush1.msra.mxu0 %v3617
    %3646 = vmatprep.subr.mxu0 0.0
    %3647 = vmatpush1.msra.mxu0 %v3618
    %3648 = vmatprep.subr.mxu0 0.0
    %3649 = vmatpush1.msra.mxu0 %v3619
    %3650 = vmatprep.subr.mxu0 0.0
    %3651 = vmatpush1.msra.mxu0 %v3620
    %3652 = vmatprep.subr.mxu0 0.0
    %3653 = vmatpush1.msra.mxu0 %v3621
    %3654 = vmatprep.subr.mxu0 0.0
    %3655 = vmatpush1.msra.mxu0 0.0
    %3656 = vmatprep.subr.mxu0 0.0
    %3657 = vmatpush1.msra.mxu0 0.0
    %3658 = vmatprep.subr.mxu0 0.0
    %3659 = vmatpush1.msra.mxu0 0.0
    %3660 = vmatprep.subr.mxu0 0.0
    %3661 = vmatpush1.msra.mxu0 0.0
    %3662 = vmatprep.subr.mxu0 0.0
    %3663 = vmatpush1.msra.mxu0 0.0
    %3664 = vmatprep.subr.mxu0 0.0
    %3665 = vmatpush1.msra.mxu0 0.0
    %3666 = vmatprep.subr.mxu0 0.0
    %3667 = vmatpush1.msra.mxu0 0.0
    %3668 = vmatprep.subr.mxu0 0.0
    %3669 = vmatpush1.msra.mxu0 0.0
    %3670 = vmatprep.subr.mxu0 0.0
    %3671 = vmatpush1.msra.mxu0 0.0
    %3672 = vmatprep.subr.mxu0 0.0
    %3673 = vmatpush1.msra.mxu0 0.0
    %3674 = vmatprep.subr.mxu0 0.0
    %3675 = vmatpush1.msra.mxu0 0.0
    %3676 = vmatprep.subr.mxu0 0.0
    %3677 = vmatpush1.msra.mxu0 0.0
    %3678 = vmatprep.subr.mxu0 0.0
    %3679 = vmatpush1.msra.mxu0 0.0
    %3680 = vmatprep.subr.mxu0 0.0
    %3681 = vmatpush1.msra.mxu0 0.0
    %3682 = vmatprep.subr.mxu0 0.0
    %3683 = vmatpush1.msra.mxu0 0.0
    %3684 = vmatprep.subr.mxu0 0.0
    %3685 = vmatpush1.msra.mxu0 0.0
    %3686 = vmatprep.mubr.f32.mxu0 0.0
    %3687 = vmatmul.mubr.f32.gmra.mrb[0].mxu0 %v3605
    %v3688 = vpop.f32.mrb[0].mxu0
    %v3689 = vadd.f32 0.0, %v3688
    %v3690 = vpop.f32.mrb[0].mxu0
    %3691 = vdwg.mxu0
    %v3692 = vsub.f32 %v3605, %v3689
    %v3693 = vmul.f32 %v3692, %v3692
    %3694 = vmatprep.subr.mxu0 0.0
    %3695 = vmatpush1.msra.mxu0 %v3606
    %3696 = vmatprep.subr.mxu0 0.0
    %3697 = vmatpush1.msra.mxu0 %v3607
    %3698 = vmatprep.subr.mxu0 0.0
    %3699 = vmatpush1.msra.mxu0 %v3608
    %3700 = vmatprep.subr.mxu0 0.0
    %3701 = vmatpush1.msra.mxu0 %v3609
    %3702 = vmatprep.subr.mxu0 0.0
    %3703 = vmatpush1.msra.mxu0 %v3610
    %3704 = vmatprep.subr.mxu0 0.0
    %3705 = vmatpush1.msra.mxu0 %v3611
    %3706 = vmatprep.subr.mxu0 0.0
    %3707 = vmatpush1.msra.mxu0 %v3612
    %3708 = vmatprep.subr.mxu0 0.0
    %3709 = vmatpush1.msra.mxu0 %v3613
    %3710 = vmatprep.subr.mxu0 0.0
    %3711 = vmatpush1.msra.mxu0 %v3614
    %3712 = vmatprep.subr.mxu0 0.0
    %3713 = vmatpush1.msra.mxu0 %v3615
    %3714 = vmatprep.subr.mxu0 0.0
    %3715 = vmatpush1.msra.mxu0 %v3616
    %3716 = vmatprep.subr.mxu0 0.0
    %3717 = vmatpush1.msra.mxu0 %v3617
    %3718 = vmatprep.subr.mxu0 0.0
    %3719 = vmatpush1.msra.mxu0 %v3618
    %3720 = vmatprep.subr.mxu0 0.0
    %3721 = vmatpush1.msra.mxu0 %v3619
    %3722 = vmatprep.subr.mxu0 0.0
    %3723 = vmatpush1.msra.mxu0 %v3620
    %3724 = vmatprep.subr.mxu0 0.0
    %3725 = vmatpush1.msra.mxu0 %v3621
    %3726 = vmatprep.subr.mxu0 0.0
    %3727 = vmatpush1.msra.mxu0 0.0
    %3728 = vmatprep.subr.mxu0 0.0
    %3729 = vmatpush1.msra.mxu0 0.0
    %3730 = vmatprep.subr.mxu0 0.0
    %3731 = vmatpush1.msra.mxu0 0.0
    %3732 = vmatprep.subr.mxu0 0.0
    %3733 = vmatpush1.msra.mxu0 0.0
    %3734 = vmatprep.subr.mxu0 0.0
    %3735 = vmatpush1.msra.mxu0 0.0
    %3736 = vmatprep.subr.mxu0 0.0
    %3737 = vmatpush1.msra.mxu0 0.0
    %3738 = vmatprep.subr.mxu0 0.0
    %3739 = vmatpush1.msra.mxu0 0.0
    %3740 = vmatprep.subr.mxu0 0.0
    %3741 = vmatpush1.msra.mxu0 0.0
    %3742 = vmatprep.subr.mxu0 0.0
    %3743 = vmatpush1.msra.mxu0 0.0
    %3744 = vmatprep.subr.mxu0 0.0
    %3745 = vmatpush1.msra.mxu0 0.0
    %3746 = vmatprep.subr.mxu0 0.0
    %3747 = vmatpush1.msra.mxu0 0.0
    %3748 = vmatprep.subr.mxu0 0.0
    %3749 = vmatpush1.msra.mxu0 0.0
    %3750 = vmatprep.subr.mxu0 0.0
    %3751 = vmatpush1.msra.mxu0 0.0
    %3752 = vmatprep.subr.mxu0 0.0
    %3753 = vmatpush1.msra.mxu0 0.0
    %3754 = vmatprep.subr.mxu0 0.0
    %3755 = vmatpush1.msra.mxu0 0.0
    %3756 = vmatprep.subr.mxu0 0.0
    %3757 = vmatpush1.msra.mxu0 0.0
    %3758 = vmatprep.mubr.f32.mxu0 0.0
    %3759 = vmatmul.mubr.f32.gmra.mrb[0].mxu0 %v3693
    %v3760 = vpop.f32.mrb[0].mxu0
    %v3761 = vadd.f32 1e-05, %v3760
    %v3762 = vpop.f32.mrb[0].mxu0
    %3763 = vdwg.mxu0
    %v3764 = vrsqrt.pop %v3761
    %v3765 = vmul.f32 %v3692, %v3764
    %v3766 = vld [vmem:[#allocation22] sm:$0x1]
    %v3768 = vlaneseq
    %v3769 = vshrl.u32 %v3768, 7
    %v3770 = vsub.s32 0, %v3769
    %v3771 = vrot.slane %v3766, %v3770
    %v3773 = vmul.f32 %v3765, %v3771
    %v3774 = vld [vmem:[#allocation23] sm:$0x1]
    %v3776 = vlaneseq
    %v3777 = vshrl.u32 %v3776, 7
    %v3778 = vsub.s32 0, %v3777
    %v3779 = vrot.slane %v3774, %v3778
    %v3781 = vadd.f32 %v3773, %v3779
    %v3782 = vmax.f32 %v3781, 0.0
    %v3783 = vld [vmem:[%s45] sm:$0x3]
    %vm3784 = vcmask 31744
    %v3786 = vsel %vm3784, %v3783, 0
    %v3789 = vsel %vm380, %v3782, 0
    %3791 = vmatprep.subr.mxu0 0.0
    %3792 = vmatpush1.msra.mxu0 %v3789
    %3793 = vmatprep.subr.mxu0 0.0
    %3794 = vmatpush1.msra.mxu0 0.0
    %3795 = vmatprep.subr.mxu0 0.0
    %3796 = vmatpush1.msra.mxu0 0.0
    %3797 = vmatprep.subr.mxu0 0.0
    %3798 = vmatpush1.msra.mxu0 0.0
    %3799 = vmatprep.subr.mxu0 0.0
    %3800 = vmatpush1.msra.mxu0 0.0
    %3801 = vmatprep.subr.mxu0 0.0
    %3802 = vmatpush1.msra.mxu0 0.0
    %3803 = vmatprep.subr.mxu0 0.0
    %3804 = vmatpush1.msra.mxu0 0.0
    %3805 = vmatprep.subr.mxu0 0.0
    %3806 = vmatpush1.msra.mxu0 0.0
    %3807 = vmatprep.subr.mxu0 0.0
    %3808 = vmatpush1.msra.mxu0 0.0
    %3809 = vmatprep.subr.mxu0 0.0
    %3810 = vmatpush1.msra.mxu0 0.0
    %3811 = vmatprep.subr.mxu0 0.0
    %3812 = vmatpush1.msra.mxu0 0.0
    %3813 = vmatprep.subr.mxu0 0.0
    %3814 = vmatpush1.msra.mxu0 0.0
    %3815 = vmatprep.subr.mxu0 0.0
    %3816 = vmatpush1.msra.mxu0 0.0
    %3817 = vmatprep.subr.mxu0 0.0
    %3818 = vmatpush1.msra.mxu0 0.0
    %3819 = vmatprep.subr.mxu0 0.0
    %3820 = vmatpush1.msra.mxu0 0.0
    %3821 = vmatprep.subr.mxu0 0.0
    %3822 = vmatpush1.msra.mxu0 0.0
    %3823 = vmatprep.subr.mxu0 0.0
    %3824 = vmatpush1.msra.mxu0 0.0
    %3825 = vmatprep.subr.mxu0 0.0
    %3826 = vmatpush1.msra.mxu0 0.0
    %3827 = vmatprep.subr.mxu0 0.0
    %3828 = vmatpush1.msra.mxu0 0.0
    %3829 = vmatprep.subr.mxu0 0.0
    %3830 = vmatpush1.msra.mxu0 0.0
    %3831 = vmatprep.subr.mxu0 0.0
    %3832 = vmatpush1.msra.mxu0 0.0
    %3833 = vmatprep.subr.mxu0 0.0
    %3834 = vmatpush1.msra.mxu0 0.0
    %3835 = vmatprep.subr.mxu0 0.0
    %3836 = vmatpush1.msra.mxu0 0.0
    %3837 = vmatprep.subr.mxu0 0.0
    %3838 = vmatpush1.msra.mxu0 0.0
    %3839 = vmatprep.subr.mxu0 0.0
    %3840 = vmatpush1.msra.mxu0 0.0
    %3841 = vmatprep.subr.mxu0 0.0
    %3842 = vmatpush1.msra.mxu0 0.0
    %3843 = vmatprep.subr.mxu0 0.0
    %3844 = vmatpush1.msra.mxu0 0.0
    %3845 = vmatprep.subr.mxu0 0.0
    %3846 = vmatpush1.msra.mxu0 0.0
    %3847 = vmatprep.subr.mxu0 0.0
    %3848 = vmatpush1.msra.mxu0 0.0
    %3849 = vmatprep.subr.mxu0 0.0
    %3850 = vmatpush1.msra.mxu0 0.0
    %3851 = vmatprep.subr.mxu0 0.0
    %3852 = vmatpush1.msra.mxu0 0.0
    %3853 = vmatprep.subr.mxu0 0.0
    %3854 = vmatpush1.msra.mxu0 0.0
    %3855 = vmatprep.mubr.f32.mxu0 0.0
    %3856 = vmatmul.mubr.f32.gmra.mrb[0].mxu0 %v3786
    %v3857 = vpop.f32.mrb[0].mxu0
    %v3858 = vadd.f32 0.0, %v3857
    %v3859 = vpop.f32.mrb[0].mxu0
    %3860 = vdwg.mxu0
    %v3861 = vld [vmem:[%s47] sm:$0xff]
    %v3862 = vld [vmem:[%s47 + $0x8] sm:$0xff]
    %v3863 = vld [vmem:[%s47 + $0x10] sm:$0xff]
    %v3864 = vld [vmem:[%s47 + $0x18] sm:$0xff]
    %v3865 = vld [vmem:[%s47 + $0x20] sm:$0xff]
    %v3866 = vld [vmem:[%s47 + $0x28] sm:$0xff]
    %v3867 = vld [vmem:[%s47 + $0x30] sm:$0xff]
    %v3868 = vld [vmem:[%s47 + $0x38] sm:$0xff]
    %v3869 = vld [vmem:[%s47 + $0x40] sm:$0xff]
    %v3870 = vld [vmem:[%s47 + $0x48] sm:$0xff]
    %v3871 = vld [vmem:[%s47 + $0x50] sm:$0xff]
    %v3872 = vld [vmem:[%s47 + $0x58] sm:$0xff]
    %v3873 = vld [vmem:[%s47 + $0x60] sm:$0xff]
    %v3874 = vld [vmem:[%s47 + $0x68] sm:$0xff]
    %v3875 = vld [vmem:[%s47 + $0x70] sm:$0xff]
    %v3876 = vld [vmem:[%s47 + $0x78] sm:$0xff]
    %s3877 = scalar_lea.vmem %s45, 2
    %v3878 = vld [vmem:[%s3877] sm:$0x3]
    %v3880 = vsel %vm3784, %v3878, 0
    %3882 = vmatprep.subr.mxu0 0.0
    %3883 = vmatpush1.msra.mxu0 %v3789
    %3884 = vmatprep.subr.mxu0 0.0
    %3885 = vmatpush1.msra.mxu0 0.0
    %3886 = vmatprep.subr.mxu0 0.0
    %3887 = vmatpush1.msra.mxu0 0.0
    %3888 = vmatprep.subr.mxu0 0.0
    %3889 = vmatpush1.msra.mxu0 0.0
    %3890 = vmatprep.subr.mxu0 0.0
    %3891 = vmatpush1.msra.mxu0 0.0
    %3892 = vmatprep.subr.mxu0 0.0
    %3893 = vmatpush1.msra.mxu0 0.0
    %3894 = vmatprep.subr.mxu0 0.0
    %3895 = vmatpush1.msra.mxu0 0.0
    %3896 = vmatprep.subr.mxu0 0.0
    %3897 = vmatpush1.msra.mxu0 0.0
    %3898 = vmatprep.subr.mxu0 0.0
    %3899 = vmatpush1.msra.mxu0 0.0
    %3900 = vmatprep.subr.mxu0 0.0
    %3901 = vmatpush1.msra.mxu0 0.0
    %3902 = vmatprep.subr.mxu0 0.0
    %3903 = vmatpush1.msra.mxu0 0.0
    %3904 = vmatprep.subr.mxu0 0.0
    %3905 = vmatpush1.msra.mxu0 0.0
    %3906 = vmatprep.subr.mxu0 0.0
    %3907 = vmatpush1.msra.mxu0 0.0
    %3908 = vmatprep.subr.mxu0 0.0
    %3909 = vmatpush1.msra.mxu0 0.0
    %3910 = vmatprep.subr.mxu0 0.0
    %3911 = vmatpush1.msra.mxu0 0.0
    %3912 = vmatprep.subr.mxu0 0.0
    %3913 = vmatpush1.msra.mxu0 0.0
    %3914 = vmatprep.subr.mxu0 0.0
    %3915 = vmatpush1.msra.mxu0 0.0
    %3916 = vmatprep.subr.mxu0 0.0
    %3917 = vmatpush1.msra.mxu0 0.0
    %3918 = vmatprep.subr.mxu0 0.0
    %3919 = vmatpush1.msra.mxu0 0.0
    %3920 = vmatprep.subr.mxu0 0.0
    %3921 = vmatpush1.msra.mxu0 0.0
    %3922 = vmatprep.subr.mxu0 0.0
    %3923 = vmatpush1.msra.mxu0 0.0
    %3924 = vmatprep.subr.mxu0 0.0
    %3925 = vmatpush1.msra.mxu0 0.0
    %3926 = vmatprep.subr.mxu0 0.0
    %3927 = vmatpush1.msra.mxu0 0.0
    %3928 = vmatprep.subr.mxu0 0.0
    %3929 = vmatpush1.msra.mxu0 0.0
    %3930 = vmatprep.subr.mxu0 0.0
    %3931 = vmatpush1.msra.mxu0 0.0
    %3932 = vmatprep.subr.mxu0 0.0
    %3933 = vmatpush1.msra.mxu0 0.0
    %3934 = vmatprep.subr.mxu0 0.0
    %3935 = vmatpush1.msra.mxu0 0.0
    %3936 = vmatprep.subr.mxu0 0.0
    %3937 = vmatpush1.msra.mxu0 0.0
    %3938 = vmatprep.subr.mxu0 0.0
    %3939 = vmatpush1.msra.mxu0 0.0
    %3940 = vmatprep.subr.mxu0 0.0
    %3941 = vmatpush1.msra.mxu0 0.0
    %3942 = vmatprep.subr.mxu0 0.0
    %3943 = vmatpush1.msra.mxu0 0.0
    %3944 = vmatprep.subr.mxu0 0.0
    %3945 = vmatpush1.msra.mxu0 0.0
    %3946 = vmatprep.mubr.f32.mxu0 0.0
    %3947 = vmatmul.mubr.f32.gmra.mrb[0].mxu0 %v3880
    %v3948 = vpop.f32.mrb[0].mxu0
    %v3949 = vadd.f32 0.0, %v3948
    %v3950 = vpop.f32.mrb[0].mxu0
    %3951 = vdwg.mxu0
    %s3952 = scalar_lea.vmem %s47, 128
    %v3953 = vld [vmem:[%s3952] sm:$0xff]
    %v3954 = vld [vmem:[%s3952 + $0x8] sm:$0xff]
    %v3955 = vld [vmem:[%s3952 + $0x10] sm:$0xff]
    %v3956 = vld [vmem:[%s3952 + $0x18] sm:$0xff]
    %v3957 = vld [vmem:[%s3952 + $0x20] sm:$0xff]
    %v3958 = vld [vmem:[%s3952 + $0x28] sm:$0xff]
    %v3959 = vld [vmem:[%s3952 + $0x30] sm:$0xff]
    %v3960 = vld [vmem:[%s3952 + $0x38] sm:$0xff]
    %v3961 = vld [vmem:[%s3952 + $0x40] sm:$0xff]
    %v3962 = vld [vmem:[%s3952 + $0x48] sm:$0xff]
    %v3963 = vld [vmem:[%s3952 + $0x50] sm:$0xff]
    %v3964 = vld [vmem:[%s3952 + $0x58] sm:$0xff]
    %v3965 = vld [vmem:[%s3952 + $0x60] sm:$0xff]
    %v3966 = vld [vmem:[%s3952 + $0x68] sm:$0xff]
    %v3967 = vld [vmem:[%s3952 + $0x70] sm:$0xff]
    %v3968 = vld [vmem:[%s3952 + $0x78] sm:$0xff]
    %3969 = vmatprep.subr.mxu0 0.0
    %3970 = vmatpush1.msra.mxu0 %v3953
    %3971 = vmatprep.subr.mxu0 0.0
    %3972 = vmatpush1.msra.mxu0 %v3954
    %3973 = vmatprep.subr.mxu0 0.0
    %3974 = vmatpush1.msra.mxu0 %v3955
    %3975 = vmatprep.subr.mxu0 0.0
    %3976 = vmatpush1.msra.mxu0 %v3956
    %3977 = vmatprep.subr.mxu0 0.0
    %3978 = vmatpush1.msra.mxu0 %v3957
    %3979 = vmatprep.subr.mxu0 0.0
    %3980 = vmatpush1.msra.mxu0 %v3958
    %3981 = vmatprep.subr.mxu0 0.0
    %3982 = vmatpush1.msra.mxu0 %v3959
    %3983 = vmatprep.subr.mxu0 0.0
    %3984 = vmatpush1.msra.mxu0 %v3960
    %3985 = vmatprep.subr.mxu0 0.0
    %3986 = vmatpush1.msra.mxu0 %v3961
    %3987 = vmatprep.subr.mxu0 0.0
    %3988 = vmatpush1.msra.mxu0 %v3962
    %3989 = vmatprep.subr.mxu0 0.0
    %3990 = vmatpush1.msra.mxu0 %v3963
    %3991 = vmatprep.subr.mxu0 0.0
    %3992 = vmatpush1.msra.mxu0 %v3964
    %3993 = vmatprep.subr.mxu0 0.0
    %3994 = vmatpush1.msra.mxu0 %v3965
    %3995 = vmatprep.subr.mxu0 0.0
    %3996 = vmatpush1.msra.mxu0 %v3966
    %3997 = vmatprep.subr.mxu0 0.0
    %3998 = vmatpush1.msra.mxu0 %v3967
    %3999 = vmatprep.subr.mxu0 0.0
    %4000 = vmatpush1.msra.mxu0 %v3968
    %4001 = vmatprep.subr.mxu0 0.0
    %4002 = vmatpush1.msra.mxu0 0.0
    %4003 = vmatprep.subr.mxu0 0.0
    %4004 = vmatpush1.msra.mxu0 0.0
    %4005 = vmatprep.subr.mxu0 0.0
    %4006 = vmatpush1.msra.mxu0 0.0
    %4007 = vmatprep.subr.mxu0 0.0
    %4008 = vmatpush1.msra.mxu0 0.0
    %4009 = vmatprep.subr.mxu0 0.0
    %4010 = vmatpush1.msra.mxu0 0.0
    %4011 = vmatprep.subr.mxu0 0.0
    %4012 = vmatpush1.msra.mxu0 0.0
    %4013 = vmatprep.subr.mxu0 0.0
    %4014 = vmatpush1.msra.mxu0 0.0
    %4015 = vmatprep.subr.mxu0 0.0
    %4016 = vmatpush1.msra.mxu0 0.0
    %4017 = vmatprep.subr.mxu0 0.0
    %4018 = vmatpush1.msra.mxu0 0.0
    %4019 = vmatprep.subr.mxu0 0.0
    %4020 = vmatpush1.msra.mxu0 0.0
    %4021 = vmatprep.subr.mxu0 0.0
    %4022 = vmatpush1.msra.mxu0 0.0
    %4023 = vmatprep.subr.mxu0 0.0
    %4024 = vmatpush1.msra.mxu0 0.0
    %4025 = vmatprep.subr.mxu0 0.0
    %4026 = vmatpush1.msra.mxu0 0.0
    %4027 = vmatprep.subr.mxu0 0.0
    %4028 = vmatpush1.msra.mxu0 0.0
    %4029 = vmatprep.subr.mxu0 0.0
    %4030 = vmatpush1.msra.mxu0 0.0
    %4031 = vmatprep.subr.mxu0 0.0
    %4032 = vmatpush1.msra.mxu0 0.0
    %4033 = vmatprep.mubr.f32.mxu0 0.0
    %4034 = vmatmul.mubr.f32.gmra.mrb[0].mxu0 %v3949
    %v4035 = vpop.f32.mrb[0].mxu0
    %v4036 = vadd.f32 0.0, %v4035
    %v4037 = vpop.f32.mrb[0].mxu0
    %4038 = vdwg.mxu0
    %4039 = vmatprep.subr.mxu0 0.0
    %4040 = vmatpush1.msra.mxu0 %v3861
    %4041 = vmatprep.subr.mxu0 0.0
    %4042 = vmatpush1.msra.mxu0 %v3862
    %4043 = vmatprep.subr.mxu0 0.0
    %4044 = vmatpush1.msra.mxu0 %v3863
    %4045 = vmatprep.subr.mxu0 0.0
    %4046 = vmatpush1.msra.mxu0 %v3864
    %4047 = vmatprep.subr.mxu0 0.0
    %4048 = vmatpush1.msra.mxu0 %v3865
    %4049 = vmatprep.subr.mxu0 0.0
    %4050 = vmatpush1.msra.mxu0 %v3866
    %4051 = vmatprep.subr.mxu0 0.0
    %4052 = vmatpush1.msra.mxu0 %v3867
    %4053 = vmatprep.subr.mxu0 0.0
    %4054 = vmatpush1.msra.mxu0 %v3868
    %4055 = vmatprep.subr.mxu0 0.0
    %4056 = vmatpush1.msra.mxu0 %v3869
    %4057 = vmatprep.subr.mxu0 0.0
    %4058 = vmatpush1.msra.mxu0 %v3870
    %4059 = vmatprep.subr.mxu0 0.0
    %4060 = vmatpush1.msra.mxu0 %v3871
    %4061 = vmatprep.subr.mxu0 0.0
    %4062 = vmatpush1.msra.mxu0 %v3872
    %4063 = vmatprep.subr.mxu0 0.0
    %4064 = vmatpush1.msra.mxu0 %v3873
    %4065 = vmatprep.subr.mxu0 0.0
    %4066 = vmatpush1.msra.mxu0 %v3874
    %4067 = vmatprep.subr.mxu0 0.0
    %4068 = vmatpush1.msra.mxu0 %v3875
    %4069 = vmatprep.subr.mxu0 0.0
    %4070 = vmatpush1.msra.mxu0 %v3876
    %4071 = vmatprep.subr.mxu0 0.0
    %4072 = vmatpush1.msra.mxu0 0.0
    %4073 = vmatprep.subr.mxu0 0.0
    %4074 = vmatpush1.msra.mxu0 0.0
    %4075 = vmatprep.subr.mxu0 0.0
    %4076 = vmatpush1.msra.mxu0 0.0
    %4077 = vmatprep.subr.mxu0 0.0
    %4078 = vmatpush1.msra.mxu0 0.0
    %4079 = vmatprep.subr.mxu0 0.0
    %4080 = vmatpush1.msra.mxu0 0.0
    %4081 = vmatprep.subr.mxu0 0.0
    %4082 = vmatpush1.msra.mxu0 0.0
    %4083 = vmatprep.subr.mxu0 0.0
    %4084 = vmatpush1.msra.mxu0 0.0
    %4085 = vmatprep.subr.mxu0 0.0
    %4086 = vmatpush1.msra.mxu0 0.0
    %4087 = vmatprep.subr.mxu0 0.0
    %4088 = vmatpush1.msra.mxu0 0.0
    %4089 = vmatprep.subr.mxu0 0.0
    %4090 = vmatpush1.msra.mxu0 0.0
    %4091 = vmatprep.subr.mxu0 0.0
    %4092 = vmatpush1.msra.mxu0 0.0
    %4093 = vmatprep.subr.mxu0 0.0
    %4094 = vmatpush1.msra.mxu0 0.0
    %4095 = vmatprep.subr.mxu0 0.0
    %4096 = vmatpush1.msra.mxu0 0.0
    %4097 = vmatprep.subr.mxu0 0.0
    %4098 = vmatpush1.msra.mxu0 0.0
    %4099 = vmatprep.subr.mxu0 0.0
    %4100 = vmatpush1.msra.mxu0 0.0
    %4101 = vmatprep.subr.mxu0 0.0
    %4102 = vmatpush1.msra.mxu0 0.0
    %4103 = vmatprep.mubr.f32.mxu0 0.0
    %4104 = vmatmul.mubr.f32.gmra.mrb[0].mxu0 %v3858
    %v4105 = vpop.f32.mrb[0].mxu0
    %v4106 = vadd.f32 %v4036, %v4105
    %v4107 = vpop.f32.mrb[0].mxu0
    %4108 = vdwg.mxu0
    %s4109 = scalar_lea.vmem %s45, 4
    %v4110 = vld [vmem:[%s4109] sm:$0x3]
    %v4112 = vsel %vm3784, %v4110, 0
    %4114 = vmatprep.subr.mxu0 0.0
    %4115 = vmatpush1.msra.mxu0 %v3789
    %4116 = vmatprep.subr.mxu0 0.0
    %4117 = vmatpush1.msra.mxu0 0.0
    %4118 = vmatprep.subr.mxu0 0.0
    %4119 = vmatpush1.msra.mxu0 0.0
    %4120 = vmatprep.subr.mxu0 0.0
    %4121 = vmatpush1.msra.mxu0 0.0
    %4122 = vmatprep.subr.mxu0 0.0
    %4123 = vmatpush1.msra.mxu0 0.0
    %4124 = vmatprep.subr.mxu0 0.0
    %4125 = vmatpush1.msra.mxu0 0.0
    %4126 = vmatprep.subr.mxu0 0.0
    %4127 = vmatpush1.msra.mxu0 0.0
    %4128 = vmatprep.subr.mxu0 0.0
    %4129 = vmatpush1.msra.mxu0 0.0
    %4130 = vmatprep.subr.mxu0 0.0
    %4131 = vmatpush1.msra.mxu0 0.0
    %4132 = vmatprep.subr.mxu0 0.0
    %4133 = vmatpush1.msra.mxu0 0.0
    %4134 = vmatprep.subr.mxu0 0.0
    %4135 = vmatpush1.msra.mxu0 0.0
    %4136 = vmatprep.subr.mxu0 0.0
    %4137 = vmatpush1.msra.mxu0 0.0
    %4138 = vmatprep.subr.mxu0 0.0
    %4139 = vmatpush1.msra.mxu0 0.0
    %4140 = vmatprep.subr.mxu0 0.0
    %4141 = vmatpush1.msra.mxu0 0.0
    %4142 = vmatprep.subr.mxu0 0.0
    %4143 = vmatpush1.msra.mxu0 0.0
    %4144 = vmatprep.subr.mxu0 0.0
    %4145 = vmatpush1.msra.mxu0 0.0
    %4146 = vmatprep.subr.mxu0 0.0
    %4147 = vmatpush1.msra.mxu0 0.0
    %4148 = vmatprep.subr.mxu0 0.0
    %4149 = vmatpush1.msra.mxu0 0.0
    %4150 = vmatprep.subr.mxu0 0.0
    %4151 = vmatpush1.msra.mxu0 0.0
    %4152 = vmatprep.subr.mxu0 0.0
    %4153 = vmatpush1.msra.mxu0 0.0
    %4154 = vmatprep.subr.mxu0 0.0
    %4155 = vmatpush1.msra.mxu0 0.0
    %4156 = vmatprep.subr.mxu0 0.0
    %4157 = vmatpush1.msra.mxu0 0.0
    %4158 = vmatprep.subr.mxu0 0.0
    %4159 = vmatpush1.msra.mxu0 0.0
    %4160 = vmatprep.subr.mxu0 0.0
    %4161 = vmatpush1.msra.mxu0 0.0
    %4162 = vmatprep.subr.mxu0 0.0
    %4163 = vmatpush1.msra.mxu0 0.0
    %4164 = vmatprep.subr.mxu0 0.0
    %4165 = vmatpush1.msra.mxu0 0.0
    %4166 = vmatprep.subr.mxu0 0.0
    %4167 = vmatpush1.msra.mxu0 0.0
    %4168 = vmatprep.subr.mxu0 0.0
    %4169 = vmatpush1.msra.mxu0 0.0
    %4170 = vmatprep.subr.mxu0 0.0
    %4171 = vmatpush1.msra.mxu0 0.0
    %4172 = vmatprep.subr.mxu0 0.0
    %4173 = vmatpush1.msra.mxu0 0.0
    %4174 = vmatprep.subr.mxu0 0.0
    %4175 = vmatpush1.msra.mxu0 0.0
    %4176 = vmatprep.subr.mxu0 0.0
    %4177 = vmatpush1.msra.mxu0 0.0
    %4178 = vmatprep.mubr.f32.mxu0 0.0
    %4179 = vmatmul.mubr.f32.gmra.mrb[0].mxu0 %v4112
    %v4180 = vpop.f32.mrb[0].mxu0
    %v4181 = vadd.f32 0.0, %v4180
    %v4182 = vpop.f32.mrb[0].mxu0
    %4183 = vdwg.mxu0
    %s4184 = scalar_lea.vmem %s47, 256
    %v4185 = vld [vmem:[%s4184] sm:$0xff]
    %v4186 = vld [vmem:[%s4184 + $0x8] sm:$0xff]
    %v4187 = vld [vmem:[%s4184 + $0x10] sm:$0xff]
    %v4188 = vld [vmem:[%s4184 + $0x18] sm:$0xff]
    %v4189 = vld [vmem:[%s4184 + $0x20] sm:$0xff]
    %v4190 = vld [vmem:[%s4184 + $0x28] sm:$0xff]
    %v4191 = vld [vmem:[%s4184 + $0x30] sm:$0xff]
    %v4192 = vld [vmem:[%s4184 + $0x38] sm:$0xff]
    %v4193 = vld [vmem:[%s4184 + $0x40] sm:$0xff]
    %v4194 = vld [vmem:[%s4184 + $0x48] sm:$0xff]
    %v4195 = vld [vmem:[%s4184 + $0x50] sm:$0xff]
    %v4196 = vld [vmem:[%s4184 + $0x58] sm:$0xff]
    %v4197 = vld [vmem:[%s4184 + $0x60] sm:$0xff]
    %v4198 = vld [vmem:[%s4184 + $0x68] sm:$0xff]
    %v4199 = vld [vmem:[%s4184 + $0x70] sm:$0xff]
    %v4200 = vld [vmem:[%s4184 + $0x78] sm:$0xff]
    %4201 = vmatprep.subr.mxu0 0.0
    %4202 = vmatpush1.msra.mxu0 %v4185
    %4203 = vmatprep.subr.mxu0 0.0
    %4204 = vmatpush1.msra.mxu0 %v4186
    %4205 = vmatprep.subr.mxu0 0.0
    %4206 = vmatpush1.msra.mxu0 %v4187
    %4207 = vmatprep.subr.mxu0 0.0
    %4208 = vmatpush1.msra.mxu0 %v4188
    %4209 = vmatprep.subr.mxu0 0.0
    %4210 = vmatpush1.msra.mxu0 %v4189
    %4211 = vmatprep.subr.mxu0 0.0
    %4212 = vmatpush1.msra.mxu0 %v4190
    %4213 = vmatprep.subr.mxu0 0.0
    %4214 = vmatpush1.msra.mxu0 %v4191
    %4215 = vmatprep.subr.mxu0 0.0
    %4216 = vmatpush1.msra.mxu0 %v4192
    %4217 = vmatprep.subr.mxu0 0.0
    %4218 = vmatpush1.msra.mxu0 %v4193
    %4219 = vmatprep.subr.mxu0 0.0
    %4220 = vmatpush1.msra.mxu0 %v4194
    %4221 = vmatprep.subr.mxu0 0.0
    %4222 = vmatpush1.msra.mxu0 %v4195
    %4223 = vmatprep.subr.mxu0 0.0
    %4224 = vmatpush1.msra.mxu0 %v4196
    %4225 = vmatprep.subr.mxu0 0.0
    %4226 = vmatpush1.msra.mxu0 %v4197
    %4227 = vmatprep.subr.mxu0 0.0
    %4228 = vmatpush1.msra.mxu0 %v4198
    %4229 = vmatprep.subr.mxu0 0.0
    %4230 = vmatpush1.msra.mxu0 %v4199
    %4231 = vmatprep.subr.mxu0 0.0
    %4232 = vmatpush1.msra.mxu0 %v4200
    %4233 = vmatprep.subr.mxu0 0.0
    %4234 = vmatpush1.msra.mxu0 0.0
    %4235 = vmatprep.subr.mxu0 0.0
    %4236 = vmatpush1.msra.mxu0 0.0
    %4237 = vmatprep.subr.mxu0 0.0
    %4238 = vmatpush1.msra.mxu0 0.0
    %4239 = vmatprep.subr.mxu0 0.0
    %4240 = vmatpush1.msra.mxu0 0.0
    %4241 = vmatprep.subr.mxu0 0.0
    %4242 = vmatpush1.msra.mxu0 0.0
    %4243 = vmatprep.subr.mxu0 0.0
    %4244 = vmatpush1.msra.mxu0 0.0
    %4245 = vmatprep.subr.mxu0 0.0
    %4246 = vmatpush1.msra.mxu0 0.0
    %4247 = vmatprep.subr.mxu0 0.0
    %4248 = vmatpush1.msra.mxu0 0.0
    %4249 = vmatprep.subr.mxu0 0.0
    %4250 = vmatpush1.msra.mxu0 0.0
    %4251 = vmatprep.subr.mxu0 0.0
    %4252 = vmatpush1.msra.mxu0 0.0
    %4253 = vmatprep.subr.mxu0 0.0
    %4254 = vmatpush1.msra.mxu0 0.0
    %4255 = vmatprep.subr.mxu0 0.0
    %4256 = vmatpush1.msra.mxu0 0.0
    %4257 = vmatprep.subr.mxu0 0.0
    %4258 = vmatpush1.msra.mxu0 0.0
    %4259 = vmatprep.subr.mxu0 0.0
    %4260 = vmatpush1.msra.mxu0 0.0
    %4261 = vmatprep.subr.mxu0 0.0
    %4262 = vmatpush1.msra.mxu0 0.0
    %4263 = vmatprep.subr.mxu0 0.0
    %4264 = vmatpush1.msra.mxu0 0.0
    %4265 = vmatprep.mubr.f32.mxu0 0.0
    %4266 = vmatmul.mubr.f32.gmra.mrb[0].mxu0 %v4181
    %v4267 = vpop.f32.mrb[0].mxu0
    %v4268 = vadd.f32 0.0, %v4267
    %v4269 = vpop.f32.mrb[0].mxu0
    %4270 = vdwg.mxu0
    %v4271 = vadd.f32 %v4106, %v4268
    %s4272 = scalar_lea.vmem %s45, 6
    %v4273 = vld [vmem:[%s4272] sm:$0x3]
    %v4275 = vsel %vm3784, %v4273, 0
    %4277 = vmatprep.subr.mxu0 0.0
    %4278 = vmatpush1.msra.mxu0 %v3789
    %4279 = vmatprep.subr.mxu0 0.0
    %4280 = vmatpush1.msra.mxu0 0.0
    %4281 = vmatprep.subr.mxu0 0.0
    %4282 = vmatpush1.msra.mxu0 0.0
    %4283 = vmatprep.subr.mxu0 0.0
    %4284 = vmatpush1.msra.mxu0 0.0
    %4285 = vmatprep.subr.mxu0 0.0
    %4286 = vmatpush1.msra.mxu0 0.0
    %4287 = vmatprep.subr.mxu0 0.0
    %4288 = vmatpush1.msra.mxu0 0.0
    %4289 = vmatprep.subr.mxu0 0.0
    %4290 = vmatpush1.msra.mxu0 0.0
    %4291 = vmatprep.subr.mxu0 0.0
    %4292 = vmatpush1.msra.mxu0 0.0
    %4293 = vmatprep.subr.mxu0 0.0
    %4294 = vmatpush1.msra.mxu0 0.0
    %4295 = vmatprep.subr.mxu0 0.0
    %4296 = vmatpush1.msra.mxu0 0.0
    %4297 = vmatprep.subr.mxu0 0.0
    %4298 = vmatpush1.msra.mxu0 0.0
    %4299 = vmatprep.subr.mxu0 0.0
    %4300 = vmatpush1.msra.mxu0 0.0
    %4301 = vmatprep.subr.mxu0 0.0
    %4302 = vmatpush1.msra.mxu0 0.0
    %4303 = vmatprep.subr.mxu0 0.0
    %4304 = vmatpush1.msra.mxu0 0.0
    %4305 = vmatprep.subr.mxu0 0.0
    %4306 = vmatpush1.msra.mxu0 0.0
    %4307 = vmatprep.subr.mxu0 0.0
    %4308 = vmatpush1.msra.mxu0 0.0
    %4309 = vmatprep.subr.mxu0 0.0
    %4310 = vmatpush1.msra.mxu0 0.0
    %4311 = vmatprep.subr.mxu0 0.0
    %4312 = vmatpush1.msra.mxu0 0.0
    %4313 = vmatprep.subr.mxu0 0.0
    %4314 = vmatpush1.msra.mxu0 0.0
    %4315 = vmatprep.subr.mxu0 0.0
    %4316 = vmatpush1.msra.mxu0 0.0
    %4317 = vmatprep.subr.mxu0 0.0
    %4318 = vmatpush1.msra.mxu0 0.0
    %4319 = vmatprep.subr.mxu0 0.0
    %4320 = vmatpush1.msra.mxu0 0.0
    %4321 = vmatprep.subr.mxu0 0.0
    %4322 = vmatpush1.msra.mxu0 0.0
    %4323 = vmatprep.subr.mxu0 0.0
    %4324 = vmatpush1.msra.mxu0 0.0
    %4325 = vmatprep.subr.mxu0 0.0
    %4326 = vmatpush1.msra.mxu0 0.0
    %4327 = vmatprep.subr.mxu0 0.0
    %4328 = vmatpush1.msra.mxu0 0.0
    %4329 = vmatprep.subr.mxu0 0.0
    %4330 = vmatpush1.msra.mxu0 0.0
    %4331 = vmatprep.subr.mxu0 0.0
    %4332 = vmatpush1.msra.mxu0 0.0
    %4333 = vmatprep.subr.mxu0 0.0
    %4334 = vmatpush1.msra.mxu0 0.0
    %4335 = vmatprep.subr.mxu0 0.0
    %4336 = vmatpush1.msra.mxu0 0.0
    %4337 = vmatprep.subr.mxu0 0.0
    %4338 = vmatpush1.msra.mxu0 0.0
    %4339 = vmatprep.subr.mxu0 0.0
    %4340 = vmatpush1.msra.mxu0 0.0
    %4341 = vmatprep.mubr.f32.mxu0 0.0
    %4342 = vmatmul.mubr.f32.gmra.mrb[0].mxu0 %v4275
    %v4343 = vpop.f32.mrb[0].mxu0
    %v4344 = vadd.f32 0.0, %v4343
    %v4345 = vpop.f32.mrb[0].mxu0
    %4346 = vdwg.mxu0
    %s4347 = scalar_lea.vmem %s47, 384
    %v4348 = vld [vmem:[%s4347] sm:$0xff]
    %v4349 = vld [vmem:[%s4347 + $0x8] sm:$0xff]
    %v4350 = vld [vmem:[%s4347 + $0x10] sm:$0xff]
    %v4351 = vld [vmem:[%s4347 + $0x18] sm:$0xff]
    %v4352 = vld [vmem:[%s4347 + $0x20] sm:$0xff]
    %v4353 = vld [vmem:[%s4347 + $0x28] sm:$0xff]
    %v4354 = vld [vmem:[%s4347 + $0x30] sm:$0xff]
    %v4355 = vld [vmem:[%s4347 + $0x38] sm:$0xff]
    %v4356 = vld [vmem:[%s4347 + $0x40] sm:$0xff]
    %v4357 = vld [vmem:[%s4347 + $0x48] sm:$0xff]
    %v4358 = vld [vmem:[%s4347 + $0x50] sm:$0xff]
    %v4359 = vld [vmem:[%s4347 + $0x58] sm:$0xff]
    %v4360 = vld [vmem:[%s4347 + $0x60] sm:$0xff]
    %v4361 = vld [vmem:[%s4347 + $0x68] sm:$0xff]
    %v4362 = vld [vmem:[%s4347 + $0x70] sm:$0xff]
    %v4363 = vld [vmem:[%s4347 + $0x78] sm:$0xff]
    %4364 = vmatprep.subr.mxu0 0.0
    %4365 = vmatpush1.msra.mxu0 %v4348
    %4366 = vmatprep.subr.mxu0 0.0
    %4367 = vmatpush1.msra.mxu0 %v4349
    %4368 = vmatprep.subr.mxu0 0.0
    %4369 = vmatpush1.msra.mxu0 %v4350
    %4370 = vmatprep.subr.mxu0 0.0
    %4371 = vmatpush1.msra.mxu0 %v4351
    %4372 = vmatprep.subr.mxu0 0.0
    %4373 = vmatpush1.msra.mxu0 %v4352
    %4374 = vmatprep.subr.mxu0 0.0
    %4375 = vmatpush1.msra.mxu0 %v4353
    %4376 = vmatprep.subr.mxu0 0.0
    %4377 = vmatpush1.msra.mxu0 %v4354
    %4378 = vmatprep.subr.mxu0 0.0
    %4379 = vmatpush1.msra.mxu0 %v4355
    %4380 = vmatprep.subr.mxu0 0.0
    %4381 = vmatpush1.msra.mxu0 %v4356
    %4382 = vmatprep.subr.mxu0 0.0
    %4383 = vmatpush1.msra.mxu0 %v4357
    %4384 = vmatprep.subr.mxu0 0.0
    %4385 = vmatpush1.msra.mxu0 %v4358
    %4386 = vmatprep.subr.mxu0 0.0
    %4387 = vmatpush1.msra.mxu0 %v4359
    %4388 = vmatprep.subr.mxu0 0.0
    %4389 = vmatpush1.msra.mxu0 %v4360
    %4390 = vmatprep.subr.mxu0 0.0
    %4391 = vmatpush1.msra.mxu0 %v4361
    %4392 = vmatprep.subr.mxu0 0.0
    %4393 = vmatpush1.msra.mxu0 %v4362
    %4394 = vmatprep.subr.mxu0 0.0
    %4395 = vmatpush1.msra.mxu0 %v4363
    %4396 = vmatprep.subr.mxu0 0.0
    %4397 = vmatpush1.msra.mxu0 0.0
    %4398 = vmatprep.subr.mxu0 0.0
    %4399 = vmatpush1.msra.mxu0 0.0
    %4400 = vmatprep.subr.mxu0 0.0
    %4401 = vmatpush1.msra.mxu0 0.0
    %4402 = vmatprep.subr.mxu0 0.0
    %4403 = vmatpush1.msra.mxu0 0.0
    %4404 = vmatprep.subr.mxu0 0.0
    %4405 = vmatpush1.msra.mxu0 0.0
    %4406 = vmatprep.subr.mxu0 0.0
    %4407 = vmatpush1.msra.mxu0 0.0
    %4408 = vmatprep.subr.mxu0 0.0
    %4409 = vmatpush1.msra.mxu0 0.0
    %4410 = vmatprep.subr.mxu0 0.0
    %4411 = vmatpush1.msra.mxu0 0.0
    %4412 = vmatprep.subr.mxu0 0.0
    %4413 = vmatpush1.msra.mxu0 0.0
    %4414 = vmatprep.subr.mxu0 0.0
    %4415 = vmatpush1.msra.mxu0 0.0
    %4416 = vmatprep.subr.mxu0 0.0
    %4417 = vmatpush1.msra.mxu0 0.0
    %4418 = vmatprep.subr.mxu0 0.0
    %4419 = vmatpush1.msra.mxu0 0.0
    %4420 = vmatprep.subr.mxu0 0.0
    %4421 = vmatpush1.msra.mxu0 0.0
    %4422 = vmatprep.subr.mxu0 0.0
    %4423 = vmatpush1.msra.mxu0 0.0
    %4424 = vmatprep.subr.mxu0 0.0
    %4425 = vmatpush1.msra.mxu0 0.0
    %4426 = vmatprep.subr.mxu0 0.0
    %4427 = vmatpush1.msra.mxu0 0.0
    %4428 = vmatprep.mubr.f32.mxu0 0.0
    %4429 = vmatmul.mubr.f32.gmra.mrb[0].mxu0 %v4344
    %v4430 = vpop.f32.mrb[0].mxu0
    %v4431 = vadd.f32 0.0, %v4430
    %v4432 = vpop.f32.mrb[0].mxu0
    %4433 = vdwg.mxu0
    %v4434 = vadd.f32 %v4271, %v4431
    %v4435 = vld [vmem:[%s49] sm:$0x1]
    %v4437 = vlaneseq
    %v4438 = vshrl.u32 %v4437, 7
    %v4439 = vsub.s32 0, %v4438
    %v4440 = vrot.slane %v4435, %v4439
    %v4442 = vadd.f32 %v4434, %v4440
    %v4443 = vld [vmem:[%s55] sm:$0xff]
    %v4444 = vld [vmem:[%s55 + $0x8] sm:$0xff]
    %v4445 = vld [vmem:[%s55 + $0x10] sm:$0xff]
    %v4446 = vld [vmem:[%s55 + $0x18] sm:$0xff]
    %v4447 = vld [vmem:[%s55 + $0x20] sm:$0xff]
    %v4448 = vld [vmem:[%s55 + $0x28] sm:$0xff]
    %v4449 = vld [vmem:[%s55 + $0x30] sm:$0xff]
    %v4450 = vld [vmem:[%s55 + $0x38] sm:$0xff]
    %v4451 = vld [vmem:[%s55 + $0x40] sm:$0xff]
    %v4452 = vld [vmem:[%s55 + $0x48] sm:$0xff]
    %v4453 = vld [vmem:[%s55 + $0x50] sm:$0xff]
    %v4454 = vld [vmem:[%s55 + $0x58] sm:$0xff]
    %v4455 = vld [vmem:[%s55 + $0x60] sm:$0xff]
    %v4456 = vld [vmem:[%s55 + $0x68] sm:$0xff]
    %v4457 = vld [vmem:[%s55 + $0x70] sm:$0xff]
    %v4458 = vld [vmem:[%s55 + $0x78] sm:$0xff]
    %4459 = vmatprep.subr.mxu0 0.0
    %4460 = vmatpush1.msra.mxu0 %v4443
    %4461 = vmatprep.subr.mxu0 0.0
    %4462 = vmatpush1.msra.mxu0 %v4444
    %4463 = vmatprep.subr.mxu0 0.0
    %4464 = vmatpush1.msra.mxu0 %v4445
    %4465 = vmatprep.subr.mxu0 0.0
    %4466 = vmatpush1.msra.mxu0 %v4446
    %4467 = vmatprep.subr.mxu0 0.0
    %4468 = vmatpush1.msra.mxu0 %v4447
    %4469 = vmatprep.subr.mxu0 0.0
    %4470 = vmatpush1.msra.mxu0 %v4448
    %4471 = vmatprep.subr.mxu0 0.0
    %4472 = vmatpush1.msra.mxu0 %v4449
    %4473 = vmatprep.subr.mxu0 0.0
    %4474 = vmatpush1.msra.mxu0 %v4450
    %4475 = vmatprep.subr.mxu0 0.0
    %4476 = vmatpush1.msra.mxu0 %v4451
    %4477 = vmatprep.subr.mxu0 0.0
    %4478 = vmatpush1.msra.mxu0 %v4452
    %4479 = vmatprep.subr.mxu0 0.0
    %4480 = vmatpush1.msra.mxu0 %v4453
    %4481 = vmatprep.subr.mxu0 0.0
    %4482 = vmatpush1.msra.mxu0 %v4454
    %4483 = vmatprep.subr.mxu0 0.0
    %4484 = vmatpush1.msra.mxu0 %v4455
    %4485 = vmatprep.subr.mxu0 0.0
    %4486 = vmatpush1.msra.mxu0 %v4456
    %4487 = vmatprep.subr.mxu0 0.0
    %4488 = vmatpush1.msra.mxu0 %v4457
    %4489 = vmatprep.subr.mxu0 0.0
    %4490 = vmatpush1.msra.mxu0 %v4458
    %4491 = vmatprep.subr.mxu0 0.0
    %4492 = vmatpush1.msra.mxu0 0.0
    %4493 = vmatprep.subr.mxu0 0.0
    %4494 = vmatpush1.msra.mxu0 0.0
    %4495 = vmatprep.subr.mxu0 0.0
    %4496 = vmatpush1.msra.mxu0 0.0
    %4497 = vmatprep.subr.mxu0 0.0
    %4498 = vmatpush1.msra.mxu0 0.0
    %4499 = vmatprep.subr.mxu0 0.0
    %4500 = vmatpush1.msra.mxu0 0.0
    %4501 = vmatprep.subr.mxu0 0.0
    %4502 = vmatpush1.msra.mxu0 0.0
    %4503 = vmatprep.subr.mxu0 0.0
    %4504 = vmatpush1.msra.mxu0 0.0
    %4505 = vmatprep.subr.mxu0 0.0
    %4506 = vmatpush1.msra.mxu0 0.0
    %4507 = vmatprep.subr.mxu0 0.0
    %4508 = vmatpush1.msra.mxu0 0.0
    %4509 = vmatprep.subr.mxu0 0.0
    %4510 = vmatpush1.msra.mxu0 0.0
    %4511 = vmatprep.subr.mxu0 0.0
    %4512 = vmatpush1.msra.mxu0 0.0
    %4513 = vmatprep.subr.mxu0 0.0
    %4514 = vmatpush1.msra.mxu0 0.0
    %4515 = vmatprep.subr.mxu0 0.0
    %4516 = vmatpush1.msra.mxu0 0.0
    %4517 = vmatprep.subr.mxu0 0.0
    %4518 = vmatpush1.msra.mxu0 0.0
    %4519 = vmatprep.subr.mxu0 0.0
    %4520 = vmatpush1.msra.mxu0 0.0
    %4521 = vmatprep.subr.mxu0 0.0
    %4522 = vmatpush1.msra.mxu0 0.0
    %4523 = vmatprep.mubr.f32.mxu0 0.0
    %4524 = vmatmul.mubr.f32.gmra.mrb[0].mxu0 %v4442
    %v4525 = vpop.f32.mrb[0].mxu0
    %v4526 = vadd.f32 0.0, %v4525
    %v4527 = vpop.f32.mrb[0].mxu0
    %4528 = vdwg.mxu0
    %v4529 = vsub.f32 %v4442, %v4526
    %v4530 = vmul.f32 %v4529, %v4529
    %4531 = vmatprep.subr.mxu0 0.0
    %4532 = vmatpush1.msra.mxu0 %v4443
    %4533 = vmatprep.subr.mxu0 0.0
    %4534 = vmatpush1.msra.mxu0 %v4444
    %4535 = vmatprep.subr.mxu0 0.0
    %4536 = vmatpush1.msra.mxu0 %v4445
    %4537 = vmatprep.subr.mxu0 0.0
    %4538 = vmatpush1.msra.mxu0 %v4446
    %4539 = vmatprep.subr.mxu0 0.0
    %4540 = vmatpush1.msra.mxu0 %v4447
    %4541 = vmatprep.subr.mxu0 0.0
    %4542 = vmatpush1.msra.mxu0 %v4448
    %4543 = vmatprep.subr.mxu0 0.0
    %4544 = vmatpush1.msra.mxu0 %v4449
    %4545 = vmatprep.subr.mxu0 0.0
    %4546 = vmatpush1.msra.mxu0 %v4450
    %4547 = vmatprep.subr.mxu0 0.0
    %4548 = vmatpush1.msra.mxu0 %v4451
    %4549 = vmatprep.subr.mxu0 0.0
    %4550 = vmatpush1.msra.mxu0 %v4452
    %4551 = vmatprep.subr.mxu0 0.0
    %4552 = vmatpush1.msra.mxu0 %v4453
    %4553 = vmatprep.subr.mxu0 0.0
    %4554 = vmatpush1.msra.mxu0 %v4454
    %4555 = vmatprep.subr.mxu0 0.0
    %4556 = vmatpush1.msra.mxu0 %v4455
    %4557 = vmatprep.subr.mxu0 0.0
    %4558 = vmatpush1.msra.mxu0 %v4456
    %4559 = vmatprep.subr.mxu0 0.0
    %4560 = vmatpush1.msra.mxu0 %v4457
    %4561 = vmatprep.subr.mxu0 0.0
    %4562 = vmatpush1.msra.mxu0 %v4458
    %4563 = vmatprep.subr.mxu0 0.0
    %4564 = vmatpush1.msra.mxu0 0.0
    %4565 = vmatprep.subr.mxu0 0.0
    %4566 = vmatpush1.msra.mxu0 0.0
    %4567 = vmatprep.subr.mxu0 0.0
    %4568 = vmatpush1.msra.mxu0 0.0
    %4569 = vmatprep.subr.mxu0 0.0
    %4570 = vmatpush1.msra.mxu0 0.0
    %4571 = vmatprep.subr.mxu0 0.0
    %4572 = vmatpush1.msra.mxu0 0.0
    %4573 = vmatprep.subr.mxu0 0.0
    %4574 = vmatpush1.msra.mxu0 0.0
    %4575 = vmatprep.subr.mxu0 0.0
    %4576 = vmatpush1.msra.mxu0 0.0
    %4577 = vmatprep.subr.mxu0 0.0
    %4578 = vmatpush1.msra.mxu0 0.0
    %4579 = vmatprep.subr.mxu0 0.0
    %4580 = vmatpush1.msra.mxu0 0.0
    %4581 = vmatprep.subr.mxu0 0.0
    %4582 = vmatpush1.msra.mxu0 0.0
    %4583 = vmatprep.subr.mxu0 0.0
    %4584 = vmatpush1.msra.mxu0 0.0
    %4585 = vmatprep.subr.mxu0 0.0
    %4586 = vmatpush1.msra.mxu0 0.0
    %4587 = vmatprep.subr.mxu0 0.0
    %4588 = vmatpush1.msra.mxu0 0.0
    %4589 = vmatprep.subr.mxu0 0.0
    %4590 = vmatpush1.msra.mxu0 0.0
    %4591 = vmatprep.subr.mxu0 0.0
    %4592 = vmatpush1.msra.mxu0 0.0
    %4593 = vmatprep.subr.mxu0 0.0
    %4594 = vmatpush1.msra.mxu0 0.0
    %4595 = vmatprep.mubr.f32.mxu0 0.0
    %4596 = vmatmul.mubr.f32.gmra.mrb[0].mxu0 %v4530
    %v4597 = vpop.f32.mrb[0].mxu0
    %v4598 = vadd.f32 1e-05, %v4597
    %v4599 = vpop.f32.mrb[0].mxu0
    %4600 = vdwg.mxu0
    %v4601 = vrsqrt.pop %v4598
    %v4602 = vmul.f32 %v4529, %v4601
    %v4603 = vld [vmem:[#allocation26] sm:$0x1]
    %v4605 = vlaneseq
    %v4606 = vshrl.u32 %v4605, 7
    %v4607 = vsub.s32 0, %v4606
    %v4608 = vrot.slane %v4603, %v4607
    %v4610 = vmul.f32 %v4602, %v4608
    %v4611 = vld [vmem:[#allocation28] sm:$0x1]
    %v4613 = vlaneseq
    %v4614 = vshrl.u32 %v4613, 7
    %v4615 = vsub.s32 0, %v4614
    %v4616 = vrot.slane %v4611, %v4615
    %v4618 = vadd.f32 %v4610, %v4616
    %v4619 = vmax.f32 %v4618, 0.0
    %v4620 = vld [vmem:[#allocation29] sm:$0xff]
    %v4621 = vld [vmem:[#allocation29 + $0x8] sm:$0xff]
    %v4622 = vld [vmem:[#allocation29 + $0x10] sm:$0xff]
    %v4623 = vld [vmem:[#allocation29 + $0x18] sm:$0xff]
    %v4624 = vld [vmem:[#allocation29 + $0x20] sm:$0xff]
    %v4625 = vld [vmem:[#allocation29 + $0x28] sm:$0xff]
    %v4626 = vld [vmem:[#allocation29 + $0x30] sm:$0xff]
    %v4627 = vld [vmem:[#allocation29 + $0x38] sm:$0xff]
    %v4628 = vld [vmem:[#allocation29 + $0x40] sm:$0xff]
    %v4629 = vld [vmem:[#allocation29 + $0x48] sm:$0xff]
    %v4630 = vld [vmem:[#allocation29 + $0x50] sm:$0xff]
    %v4631 = vld [vmem:[#allocation29 + $0x58] sm:$0xff]
    %v4632 = vld [vmem:[#allocation29 + $0x60] sm:$0xff]
    %v4633 = vld [vmem:[#allocation29 + $0x68] sm:$0xff]
    %v4634 = vld [vmem:[#allocation29 + $0x70] sm:$0xff]
    %v4635 = vld [vmem:[#allocation29 + $0x78] sm:$0xff]
    %v4636 = vld [vmem:[#allocation2] sm:$0x1]
    %v4638 = vlaneseq
    %v4639 = vshrl.u32 %v4638, 7
    %v4640 = vsub.s32 0, %v4639
    %v4641 = vrot.slane %v4636, %v4640
    %4643 = vmatprep.subr.mxu0 0.0
    %4644 = vmatpush1.msra.mxu0 %v4620
    %4645 = vmatprep.subr.mxu0 0.0
    %4646 = vmatpush1.msra.mxu0 %v4621
    %4647 = vmatprep.subr.mxu0 0.0
    %4648 = vmatpush1.msra.mxu0 %v4622
    %4649 = vmatprep.subr.mxu0 0.0
    %4650 = vmatpush1.msra.mxu0 %v4623
    %4651 = vmatprep.subr.mxu0 0.0
    %4652 = vmatpush1.msra.mxu0 %v4624
    %4653 = vmatprep.subr.mxu0 0.0
    %4654 = vmatpush1.msra.mxu0 %v4625
    %4655 = vmatprep.subr.mxu0 0.0
    %4656 = vmatpush1.msra.mxu0 %v4626
    %4657 = vmatprep.subr.mxu0 0.0
    %4658 = vmatpush1.msra.mxu0 %v4627
    %4659 = vmatprep.subr.mxu0 0.0
    %4660 = vmatpush1.msra.mxu0 %v4628
    %4661 = vmatprep.subr.mxu0 0.0
    %4662 = vmatpush1.msra.mxu0 %v4629
    %4663 = vmatprep.subr.mxu0 0.0
    %4664 = vmatpush1.msra.mxu0 %v4630
    %4665 = vmatprep.subr.mxu0 0.0
    %4666 = vmatpush1.msra.mxu0 %v4631
    %4667 = vmatprep.subr.mxu0 0.0
    %4668 = vmatpush1.msra.mxu0 %v4632
    %4669 = vmatprep.subr.mxu0 0.0
    %4670 = vmatpush1.msra.mxu0 %v4633
    %4671 = vmatprep.subr.mxu0 0.0
    %4672 = vmatpush1.msra.mxu0 %v4634
    %4673 = vmatprep.subr.mxu0 0.0
    %4674 = vmatpush1.msra.mxu0 %v4635
    %4675 = vmatprep.subr.mxu0 0.0
    %4676 = vmatpush1.msra.mxu0 0.0
    %4677 = vmatprep.subr.mxu0 0.0
    %4678 = vmatpush1.msra.mxu0 0.0
    %4679 = vmatprep.subr.mxu0 0.0
    %4680 = vmatpush1.msra.mxu0 0.0
    %4681 = vmatprep.subr.mxu0 0.0
    %4682 = vmatpush1.msra.mxu0 0.0
    %4683 = vmatprep.subr.mxu0 0.0
    %4684 = vmatpush1.msra.mxu0 0.0
    %4685 = vmatprep.subr.mxu0 0.0
    %4686 = vmatpush1.msra.mxu0 0.0
    %4687 = vmatprep.subr.mxu0 0.0
    %4688 = vmatpush1.msra.mxu0 0.0
    %4689 = vmatprep.subr.mxu0 0.0
    %4690 = vmatpush1.msra.mxu0 0.0
    %4691 = vmatprep.subr.mxu0 0.0
    %4692 = vmatpush1.msra.mxu0 0.0
    %4693 = vmatprep.subr.mxu0 0.0
    %4694 = vmatpush1.msra.mxu0 0.0
    %4695 = vmatprep.subr.mxu0 0.0
    %4696 = vmatpush1.msra.mxu0 0.0
    %4697 = vmatprep.subr.mxu0 0.0
    %4698 = vmatpush1.msra.mxu0 0.0
    %4699 = vmatprep.subr.mxu0 0.0
    %4700 = vmatpush1.msra.mxu0 0.0
    %4701 = vmatprep.subr.mxu0 0.0
    %4702 = vmatpush1.msra.mxu0 0.0
    %4703 = vmatprep.subr.mxu0 0.0
    %4704 = vmatpush1.msra.mxu0 0.0
    %4705 = vmatprep.subr.mxu0 0.0
    %4706 = vmatpush1.msra.mxu0 0.0
    %4707 = vmatprep.mubr.f32.mxu0 0.0
    %4708 = vmatmul.mubr.f32.gmra.mrb[0].mxu0 %v4619
    %v4709 = vpop.f32.mrb[0].mxu0
    %v4710 = vadd.f32 %v4641, %v4709
    %v4711 = vpop.f32.mrb[0].mxu0
    %4712 = vdwg.mxu0
    %vm4713 = vcmask 1024
    %4714 = vst.msk [vmem:[%s61] sm:$0x3] %vm4713, %v4710
    // Predicated region
    $region194: #{discriminator_forward.1} parent=1 // pred_check
      _
    $region195: #{discriminator_forward.1} parent=1 // pred_check_branch
      %4716 = sbr.rel (0) target = $region197
    $region196: #{discriminator_forward.1} parent=1 // pred_region
      _
    $region197: #{discriminator_forward.1} parent=1 // pred_fallthru
      _
    // Predicated region
    $region198: #{discriminator_forward.1} parent=1 // pred_check
      _
    $region199: #{discriminator_forward.1} parent=1 // pred_check_branch
      %4718 = sbr.rel (0) target = $region201
    $region200: #{discriminator_forward.1} parent=1 // pred_region
      _
    $region201: #{discriminator_forward.1} parent=1 // pred_fallthru
      _
    %4719 = vsyncpa [#allocation4], 1
    %4720 = vsyncpa [#allocation6], 1
    %4721 = vsyncpa [#allocation9], 1
    %4722 = vsyncpa [#allocation12], 1
    %4723 = vsyncpa [#allocation15], 1
    %4724 = vsyncpa [#allocation18], 1
    %4725 = vsyncpa [#allocation21], 1
    %4726 = vsyncpa [#allocation24], 1
    %4727 = vsyncpa [#allocation27], 1
    %4728 = vsyncpa [#allocation30], 1

</llo_original>
